<compile_context>
chip_gen: v5e
topology: v5e:2x2
jax: 0.10.0
libtpu: 0.0.40
codegen_flags: <defaults>
</compile_context>

<pallas_src>
import functools

import numpy as np
import jax
import jax.numpy as jnp
from jax import lax
from jax.experimental import pallas as pl
from jax.experimental.pallas import tpu as pltpu

HIDDEN = 32
HEADS = 4
HD = HIDDEN * HEADS            # 128
EGAT_LAYERS = 2
NUM_NODE_FEATS = 16            # 17 - 1 (cfg.molecular)
NUM_EDGE_FEATS = 15
NEG_SLOPE = 0.01               # F.leaky_relu default (inside DGL EGATConv)

# 0/1 map from head index to that head's 32 feature lanes.  Passed to the kernel as an input
# (materializing it inside the kernel was the previous "captures constants" trace error).
_HEAD_COLS = np.repeat(np.eye(HEADS, dtype=np.float32), HIDDEN, axis=1)     # (H, HD)


# ----------------------------- in-kernel math helpers -----------------------------
def _gelu(x):
    # tanh-approximate GELU (single EUP tanh instead of an erf polynomial on the VPU).
    # TODO(synk): torch.nn.GELU() default is the exact erf form; tanh approx differs by ~1e-3.
    c = 0.7978845608028654  # sqrt(2/pi)
    return 0.5 * x * (1.0 + jnp.tanh(c * (x + 0.044715 * x * x * x)))


def _egat_block(h, e, mask3, head_cols, w_all, w_fij, attn_bd, b_node, b_edge,
                *, n, heads, d):
    """One dense EGATConv layer (DGL semantics) on VMEM-resident values.

    h: (N, in_n) f32, e: (N*N, in_e) bf16, mask3: (N, N, 1) f32, head_cols: (H, HD) f32.
    Returns (h_new (N, HD) f32, e_new (N*N, HD) bf16).
    """
    hd = heads * d

    # fused [f_ni | f_nj | W_node] projection: one wide MXU matmul, 128-aligned lane slices.
    proj = jnp.dot(h, w_all, preferred_element_type=jnp.float32)            # (N, 3*HD)
    f_ni = proj[:, :hd]
    f_nj = proj[:, hd:2 * hd]
    hproj = proj[:, 2 * hd:] + b_node                                       # (N, HD)

    f_fij = jnp.dot(e, w_fij, preferred_element_type=jnp.float32)           # (N*N, HD)
    f = f_ni[:, None, :] + f_nj[None, :, :] + f_fij.reshape(n, n, hd)       # (src, dst, HD)
    if b_edge is not None:               # layer-1 bias rides the matmul (constant 1.0 column)
        f = f + b_edge[None, :, :]
    f_out = jnp.maximum(f, NEG_SLOPE * f)                                   # leaky_relu

    # new edge features (bf16 for the downstream MXU matmuls).  Non-edge rows are NOT masked
    # here -- they never reach the output (logits re-masked, pooling masked) and skipping the
    # multiply saves one full (N^2, HD) VPU pass per layer.
    e_new = f_out.reshape(n * n, hd).astype(jnp.bfloat16)

    # attention logits for ALL heads with one MXU matmul against a block-diagonal (HD, H)
    # attention matrix, then a single vectorized masked softmax over the src axis.
    logits = jnp.dot(e_new, attn_bd,
                     preferred_element_type=jnp.float32).reshape(n, n, heads)
    logits = jnp.where(mask3 > 0, logits, -1e30)
    m = jnp.max(logits, axis=0, keepdims=True)                              # (1, N, H)
    # * mask keeps isolated-destination nodes exactly zero (DGL edge_softmax semantics);
    # this runs on the small (N, N, H) tensor, 32x narrower than the HD-wide tensors.
    ex = jnp.exp(logits - m) * mask3
    denom = jnp.maximum(jnp.sum(ex, axis=0, keepdims=True), 1e-30)          # (1, N, H)
    # one divide on the tiny denominator, applied as a broadcast multiply.
    # TODO(synk): pl.reciprocal(denom, approx=True) would push this onto the EUP on hardware.
    a = ex * (1.0 / denom)                                                  # (src, dst, H)

    # aggregation: widen attention to all HD lanes with one tiny (N^2,H)x(H,HD) matmul against
    # the 0/1 head->column map, then broadcast-multiply + src reduction -> node update.
    a_wide = jnp.dot(a.reshape(n * n, heads), head_cols,
                     preferred_element_type=jnp.float32).reshape(n, n, hd)  # (src, dst, HD)
    h_new = jnp.sum(a_wide * hproj[:, None, :], axis=0)                     # (dst, HD)
    return h_new, e_new


# ----------------------------- fused forward kernel -----------------------------
def _fused_kernel(node_x_ref, ef_ref, mask3_ref, node_oh_ref, head_cols_ref,
                  w_all1_ref, w_fij1_ref, attn_bd1_ref, b_node1_ref,
                  w_all2_ref, w_fij2_ref, b_edge2_ref, attn_bd2_ref, b_node2_ref,
                  w_an_ref, b_an_ref, w_ae_ref, b_ae_ref,
                  w1n_ref, w1e_ref, b1_ref, w2_ref, b2_ref, w3_ref, b3_ref,
                  out_ref, *, n, heads, d, layers):
    hd = heads * d
    mask3 = mask3_ref[...]
    head_cols = head_cols_ref[...]
    h = node_x_ref[...]
    e = ef_ref[...]

    # layer 1 (edge bias folded into w_fij1 via the 1.0 input column -> b_edge=None)
    h, e = _egat_block(h, e, mask3, head_cols,
                       w_all1_ref[...], w_fij1_ref[...], attn_bd1_ref[...],
                       b_node1_ref[...], None, n=n, heads=heads, d=d)
    # layers 2..L share egat2 parameters
    for _ in range(layers - 1):
        h, e = _egat_block(h, e, mask3, head_cols,
                           w_all2_ref[...], w_fij2_ref[...], attn_bd2_ref[...],
                           b_node2_ref[...], b_edge2_ref[...], n=n, heads=heads, d=d)

    # readout: agg_N_feats / agg_E_feats (Linear + GELU), per-graph sum pooling, mlp1/2/3.
    n_agg = _gelu(jnp.dot(h, w_an_ref[...], preferred_element_type=jnp.float32)
                  + b_an_ref[...])                                           # (N, HD)
    e_agg = _gelu(jnp.dot(e, w_ae_ref[...], preferred_element_type=jnp.float32)
                  + b_ae_ref[...])                                           # (N*N, HD)

    # edge pooling without a (B, N^2) one-hot matrix: masked sum over dst -> per-src totals,
    # then pool with the (B, N) node membership matrix (edges belong to their src's graph).
    e_sum = jnp.sum(e_agg.reshape(n, n, hd) * mask3, axis=1)                 # (N, HD)

    node_oh = node_oh_ref[...]
    g_node = jnp.dot(node_oh, n_agg, preferred_element_type=jnp.float32)     # (B, HD)
    g_edge = jnp.dot(node_oh, e_sum, preferred_element_type=jnp.float32)     # (B, HD)

    # mlp1 on concat([g_node, g_edge]) == g_node @ W1[:HD] + g_edge @ W1[HD:]
    # TODO(synk): mlp1's in-dim is exactly 2*hidden*heads, so torch.cat((G, Radd)) only
    #             type-checks when Radd has width 0; Radd is modeled as a no-op concat.
    x = _gelu(jnp.dot(g_node, w1n_ref[...], preferred_element_type=jnp.float32)
              + jnp.dot(g_edge, w1e_ref[...], preferred_element_type=jnp.float32)
              + b1_ref[...])
    x = _gelu(jnp.dot(x, w2_ref[...], preferred_element_type=jnp.float32) + b2_ref[...])
    out_ref[...] = jnp.dot(x, w3_ref[...], preferred_element_type=jnp.float32) + b3_ref[...]


# ----------------------------- host-side wrapper -----------------------------
def _prep_egat(p, *, fold_bias):
    """Host-side (runs once) repacking of one EGATConv layer's parameters."""
    w_all = jnp.concatenate([p['w_ni'], p['w_nj'], p['w_node']], axis=1)     # (in, 3*HD)
    w_fij = p['w_fij']
    if fold_bias:
        # edge in-dim padded by one constant-1.0 input column that carries b_edge.
        w_fij = jnp.concatenate([w_fij, p['b_edge'].reshape(1, HD)], axis=0)
    eye = jnp.eye(HEADS, dtype=jnp.float32)
    # block-diagonal attention matrix: column h holds attn[h] in rows h*d:(h+1)*d.
    attn_bd = (p['attn'][:, :, None] * eye[:, None, :]).reshape(HD, HEADS)
    return w_all, w_fij, attn_bd, p['b_node']


def egat_rxn_forward(node_x, edge_flat, mask, node_oh, params, Radd):
    del Radd   # width 0 for this config (see TODO in _fused_kernel)
    n = node_x.shape[0]
    b = node_oh.shape[0]

    # layer-1 edge input: pad 15 -> 16 with a constant 1.0 column (bias carrier), bf16 edge path.
    ones = jnp.ones((n * n, 1), jnp.float32)
    ef = jnp.concatenate([edge_flat, ones], axis=1).astype(jnp.bfloat16)

    w_all1, w_fij1, attn_bd1, b_node1 = _prep_egat(params['egat1'], fold_bias=True)
    w_all2, w_fij2, attn_bd2, b_node2 = _prep_egat(params['egat2'], fold_bias=False)
    b_edge2 = params['egat2']['b_edge']
    ph = params['head']

    mask3 = mask.reshape(n, n, 1)
    head_cols = jnp.asarray(_HEAD_COLS)

    args = (node_x, ef, mask3, node_oh, head_cols,
            w_all1, w_fij1.astype(jnp.bfloat16), attn_bd1.astype(jnp.bfloat16), b_node1,
            w_all2, w_fij2.astype(jnp.bfloat16), b_edge2, attn_bd2.astype(jnp.bfloat16), b_node2,
            ph['w_an'], ph['b_an'], ph['w_ae'].astype(jnp.bfloat16), ph['b_ae'],
            ph['w1n'], ph['w1e'], ph['b1'], ph['w2'], ph['b2'], ph['w3'], ph['b3'])

    vmem = pl.BlockSpec(memory_space=pltpu.MemorySpace.VMEM)
    kernel = functools.partial(_fused_kernel, n=n, heads=HEADS, d=HIDDEN,
                               layers=EGAT_LAYERS)
    return pl.pallas_call(
        kernel,
        out_shape=jax.ShapeDtypeStruct((b, 1), jnp.float32),
        in_specs=[vmem] * len(args),
        out_specs=vmem,
        # fine for this size; raise toward ~100 MiB on v5e/v6e (128 MiB physical) for larger N,
        # keep <= ~60 MiB on v7x (64 MiB physical).
        compiler_params=pltpu.CompilerParams(vmem_limit_bytes=32 * 1024 * 1024),
    )(*args)


# ----------------------------- pure-JAX reference (same dense math, f32, erf GELU) -----------------------------
def _gelu_ref(x):
    return 0.5 * x * (1.0 + lax.erf(x * 0.7071067811865476))


def _egat_layer_ref(h, e_flat, mask, p):
    n = h.shape[0]
    f_ni = h @ p['w_ni']
    f_nj = h @ p['w_nj']
    f_fij = (e_flat @ p['w_fij']).reshape(n, n, HD)
    f = f_ni[:, None, :] + f_nj[None, :, :] + f_fij + p['b_edge'][0]
    f_out = jnp.where(f >= 0, f, NEG_SLOPE * f)
    hproj = h @ p['w_node'] + p['b_node'][0]
    outs = []
    for hh in range(HEADS):
        f_h = f_out[:, :, hh * HIDDEN:(hh + 1) * HIDDEN]
        logit = jnp.sum(f_h * p['attn'][hh], axis=-1)
        logit = jnp.where(mask > 0, logit, -1e30)
        m = jnp.max(logit, axis=0, keepdims=True)
        ex = jnp.exp(logit - m) * mask
        a = ex / jnp.maximum(ex.sum(axis=0, keepdims=True), 1e-30)
        outs.append(a.T @ hproj[:, hh * HIDDEN:(hh + 1) * HIDDEN])
    return jnp.concatenate(outs, axis=-1), f_out.reshape(n * n, HD)


def _forward_ref(node_x, e_flat, mask, node_oh, edge_oh, params):
    h, e = _egat_layer_ref(node_x, e_flat, mask, params['egat1'])
    for _ in range(EGAT_LAYERS - 1):
        h, e = _egat_layer_ref(h, e, mask, params['egat2'])
    p = params['head']
    n_agg = _gelu_ref(h @ p['w_an'] + p['b_an'][0])
    e_agg = _gelu_ref(e @ p['w_ae'] + p['b_ae'][0])
    edge_oh_m = edge_oh * mask.reshape(1, -1)       # pool only real edges
    g = jnp.concatenate([node_oh @ n_agg, edge_oh_m @ e_agg], axis=-1)
    w1 = jnp.concatenate([p['w1n'], p['w1e']], axis=0)
    x = _gelu_ref(g @ w1 + p['b1'][0])
    x = _gelu_ref(x @ p['w2'] + p['b2'][0])
    return x @ p['w3'] + p['b3'][0]


# ----------------------------- deterministic parameter init -----------------------------
def _rand(key, shape, fan_in):
    return (jax.random.normal(key, shape, jnp.float32) / np.sqrt(float(fan_in))).astype(jnp.float32)


def _egat_params(key, in_n, in_e):
    k = jax.random.split(key, 7)
    return dict(
        w_ni=_rand(k[0], (in_n, HD), in_n),
        w_nj=_rand(k[1], (in_n, HD), in_n),
        w_fij=_rand(k[2], (in_e, HD), in_e),
        b_edge=0.1 * _rand(k[3], (1, HD), 1),
        attn=_rand(k[4], (HEADS, HIDDEN), HIDDEN),
        w_node=_rand(k[5], (in_n, HD), in_n),
        b_node=0.1 * _rand(k[6], (1, HD), 1),
    )


def _head_params(key):
    k = jax.random.split(key, 10)
    return dict(
        w_an=_rand(k[0], (HD, HD), HD), b_an=0.1 * _rand(k[1], (1, HD), 1),
        w_ae=_rand(k[2], (HD, HD), HD), b_ae=0.1 * _rand(k[3], (1, HD), 1),
        w1n=_rand(k[4], (HD, 256), 2 * HD),
        w1e=_rand(k[5], (HD, 256), 2 * HD),
        b1=0.1 * _rand(k[6], (1, 256), 1),
        w2=_rand(k[7], (256, 128), 256), b2=0.1 * _rand(k[8], (1, 128), 1),
        w3=_rand(k[9], (128, 1), 128), b3=jnp.zeros((1, 1), jnp.float32),
    )


# ----------------------------- main -----------------------------
if __name__ == "__main__":
    key = jax.random.PRNGKey(0)
    k_node, k_edge, k_p1, k_p2, k_ph = jax.random.split(key, 5)

    B, n_per = 2, 8
    N = B * n_per                      # 16 nodes total (batched graph)

    # two disjoint bidirectional ring graphs
    mask_np = np.zeros((N, N), np.float32)
    gid = np.zeros((N,), np.int32)
    for g in range(B):
        off = g * n_per
        for i in range(n_per):
            gid[off + i] = g
            j = off + (i + 1) % n_per
            mask_np[off + i, j] = 1.0
            mask_np[j, off + i] = 1.0
    mask = jnp.asarray(mask_np)

    node_oh = jnp.asarray((gid[None, :] == np.arange(B)[:, None]).astype(np.float32))      # (B, N)
    edge_gid = np.repeat(gid, N)                                                             # graph of src
    edge_oh = jnp.asarray((edge_gid[None, :] == np.arange(B)[:, None]).astype(np.float32))  # (B, N*N), ref only

    node_x = jax.random.normal(k_node, (N, NUM_NODE_FEATS), jnp.float32)
    edge_dense = jax.random.normal(k_edge, (N, N, NUM_EDGE_FEATS), jnp.float32) * mask[:, :, None]
    edge_flat = edge_dense.reshape(N * N, NUM_EDGE_FEATS)

    Radd = jnp.zeros((B, 0), jnp.float32)    # no-op concat (see TODO in _fused_kernel)

    params = dict(
        egat1=_egat_params(k_p1, NUM_NODE_FEATS, NUM_EDGE_FEATS),
        egat2=_egat_params(k_p2, HD, HD),
        head=_head_params(k_ph),
    )

    out = egat_rxn_forward(node_x, edge_flat, mask, node_oh, params, Radd)
    out = jax.block_until_ready(out)

    ref = _forward_ref(node_x, edge_flat, mask, node_oh, edge_oh, params)
    # residual gap vs. the f32/erf reference comes from the tanh-GELU and the bf16 edge path.
    if not jnp.allclose(out, ref, rtol=5e-2, atol=5e-2):
        raise AssertionError(f"mismatch: kernel={out} ref={ref}")

    print("KERNEL_OK")
</pallas_src>

<mosaic_0001>
module attributes {stable_mosaic.version = 11 : i64} {
  func.func @_fused_kernel(%arg0: memref<16x16xf32, #tpu.memory_space<vmem>>, %arg1: memref<256x16xbf16, #tpu.memory_space<vmem>>, %arg2: memref<16x16x1xf32, #tpu.memory_space<vmem>>, %arg3: memref<2x16xf32, #tpu.memory_space<vmem>>, %arg4: memref<4x128xf32, #tpu.memory_space<vmem>>, %arg5: memref<16x384xf32, #tpu.memory_space<vmem>>, %arg6: memref<16x128xbf16, #tpu.memory_space<vmem>>, %arg7: memref<128x4xbf16, #tpu.memory_space<vmem>>, %arg8: memref<1x128xf32, #tpu.memory_space<vmem>>, %arg9: memref<128x384xf32, #tpu.memory_space<vmem>>, %arg10: memref<128x128xbf16, #tpu.memory_space<vmem>>, %arg11: memref<1x128xf32, #tpu.memory_space<vmem>>, %arg12: memref<128x4xbf16, #tpu.memory_space<vmem>>, %arg13: memref<1x128xf32, #tpu.memory_space<vmem>>, %arg14: memref<128x128xf32, #tpu.memory_space<vmem>>, %arg15: memref<1x128xf32, #tpu.memory_space<vmem>>, %arg16: memref<128x128xbf16, #tpu.memory_space<vmem>>, %arg17: memref<1x128xf32, #tpu.memory_space<vmem>>, %arg18: memref<128x256xf32, #tpu.memory_space<vmem>>, %arg19: memref<128x256xf32, #tpu.memory_space<vmem>>, %arg20: memref<1x256xf32, #tpu.memory_space<vmem>>, %arg21: memref<256x128xf32, #tpu.memory_space<vmem>>, %arg22: memref<1x128xf32, #tpu.memory_space<vmem>>, %arg23: memref<128x1xf32, #tpu.memory_space<vmem>>, %arg24: memref<1x1xf32, #tpu.memory_space<vmem>>, %arg25: memref<2x1xf32, #tpu.memory_space<vmem>>) attributes {dimension_semantics = [], scalar_prefetch = 0 : i64, scratch_operands = 0 : i64, tpu.core_type = #tpu.core_type<tc>} {
    %c0 = arith.constant 0 : index
    %c0_0 = arith.constant 0 : index
    %c0_1 = arith.constant 0 : index
    %0 = vector.load %arg2[%c0, %c0_0, %c0_1] : memref<16x16x1xf32, #tpu.memory_space<vmem>>, vector<16x16x1xf32>
    %c0_2 = arith.constant 0 : index
    %c0_3 = arith.constant 0 : index
    %1 = vector.load %arg4[%c0_2, %c0_3] : memref<4x128xf32, #tpu.memory_space<vmem>>, vector<4x128xf32>
    %c0_4 = arith.constant 0 : index
    %c0_5 = arith.constant 0 : index
    %2 = vector.load %arg0[%c0_4, %c0_5] : memref<16x16xf32, #tpu.memory_space<vmem>>, vector<16x16xf32>
    %c0_6 = arith.constant 0 : index
    %c0_7 = arith.constant 0 : index
    %3 = vector.load %arg1[%c0_6, %c0_7] : memref<256x16xbf16, #tpu.memory_space<vmem>>, vector<256x16xbf16>
    %c0_8 = arith.constant 0 : index
    %c0_9 = arith.constant 0 : index
    %4 = vector.load %arg5[%c0_8, %c0_9] : memref<16x384xf32, #tpu.memory_space<vmem>>, vector<16x384xf32>
    %c0_10 = arith.constant 0 : index
    %c0_11 = arith.constant 0 : index
    %5 = vector.load %arg6[%c0_10, %c0_11] : memref<16x128xbf16, #tpu.memory_space<vmem>>, vector<16x128xbf16>
    %c0_12 = arith.constant 0 : index
    %c0_13 = arith.constant 0 : index
    %6 = vector.load %arg7[%c0_12, %c0_13] : memref<128x4xbf16, #tpu.memory_space<vmem>>, vector<128x4xbf16>
    %c0_14 = arith.constant 0 : index
    %c0_15 = arith.constant 0 : index
    %7 = vector.load %arg8[%c0_14, %c0_15] : memref<1x128xf32, #tpu.memory_space<vmem>>, vector<1x128xf32>
    %cst = arith.constant dense<0.000000e+00> : vector<16x384xf32>
    %8 = tpu.matmul %2, %4, %cst {dimension_numbers = #tpu.dot_dimension_numbers<[1], [0], [0], [1], [0, 0, 1, 1], [], []>} : vector<16x16xf32>, vector<16x384xf32>, vector<16x384xf32> -> vector<16x384xf32>
    %9 = vector.extract_strided_slice %8 {offsets = [0, 0], sizes = [16, 128], strides = [1, 1]} : vector<16x384xf32> to vector<16x128xf32>
    %10 = vector.extract_strided_slice %8 {offsets = [0, 128], sizes = [16, 128], strides = [1, 1]} : vector<16x384xf32> to vector<16x128xf32>
    %11 = vector.extract_strided_slice %8 {offsets = [0, 256], sizes = [16, 128], strides = [1, 1]} : vector<16x384xf32> to vector<16x128xf32>
    %12 = vector.broadcast %7 : vector<1x128xf32> to vector<16x128xf32>
    %13 = arith.addf %11, %12 : vector<16x128xf32>
    %cst_16 = arith.constant dense<0.000000e+00> : vector<256x128xf32>
    %14 = tpu.matmul %3, %5, %cst_16 {dimension_numbers = #tpu.dot_dimension_numbers<[1], [0], [0], [1], [0, 0, 1, 1], [], []>} : vector<256x16xbf16>, vector<16x128xbf16>, vector<256x128xf32> -> vector<256x128xf32>
    %15 = vector.shape_cast %9 : vector<16x128xf32> to vector<16x1x128xf32>
    %16 = vector.shape_cast %10 : vector<16x128xf32> to vector<1x16x128xf32>
    %17 = vector.broadcast %15 : vector<16x1x128xf32> to vector<16x16x128xf32>
    %18 = vector.broadcast %16 : vector<1x16x128xf32> to vector<16x16x128xf32>
    %19 = arith.addf %17, %18 : vector<16x16x128xf32>
    %20 = vector.shape_cast %14 : vector<256x128xf32> to vector<16x16x128xf32>
    %21 = arith.addf %19, %20 : vector<16x16x128xf32>
    %cst_17 = arith.constant 0.00999999977 : f32
    %22 = vector.broadcast %cst_17 : f32 to vector<16x16x128xf32>
    %23 = arith.mulf %22, %21 : vector<16x16x128xf32>
    %24 = arith.maximumf %21, %23 : vector<16x16x128xf32>
    %25 = vector.shape_cast %24 : vector<16x16x128xf32> to vector<256x128xf32>
    %26 = arith.truncf %25 : vector<256x128xf32> to vector<256x128xbf16>
    %cst_18 = arith.constant dense<0.000000e+00> : vector<256x4xf32>
    %27 = tpu.matmul %26, %6, %cst_18 {dimension_numbers = #tpu.dot_dimension_numbers<[1], [0], [0], [1], [0, 0, 1, 1], [], []>} : vector<256x128xbf16>, vector<128x4xbf16>, vector<256x4xf32> -> vector<256x4xf32>
    %28 = vector.shape_cast %27 : vector<256x4xf32> to vector<16x16x4xf32>
    %cst_19 = arith.constant 0.000000e+00 : f32
    %29 = vector.broadcast %cst_19 : f32 to vector<16x16x1xf32>
    %30 = arith.cmpf ogt, %0, %29 : vector<16x16x1xf32>
    %cst_20 = arith.constant -1.000000e+30 : f32
    %31 = vector.shape_cast %30 : vector<16x16x1xi1> to vector<16x16x1xi1>
    %32 = vector.broadcast %31 : vector<16x16x1xi1> to vector<16x16x4xi1>
    %33 = vector.broadcast %cst_20 : f32 to vector<16x16x4xf32>
    %34 = arith.select %32, %28, %33 : vector<16x16x4xi1>, vector<16x16x4xf32>
    %cst_21 = arith.constant dense<0xFF800000> : vector<16x4xf32>
    %35 = vector.multi_reduction <maximumf>, %34, %cst_21 [0] : vector<16x16x4xf32> to vector<16x4xf32>
    %36 = vector.shape_cast %35 : vector<16x4xf32> to vector<1x16x4xf32>
    %37 = vector.broadcast %36 : vector<1x16x4xf32> to vector<16x16x4xf32>
    %38 = arith.subf %34, %37 : vector<16x16x4xf32>
    %39 = math.exp %38 : vector<16x16x4xf32>
    %40 = vector.broadcast %0 : vector<16x16x1xf32> to vector<16x16x4xf32>
    %41 = arith.mulf %39, %40 : vector<16x16x4xf32>
    %cst_22 = arith.constant dense<0.000000e+00> : vector<16x4xf32>
    %42 = vector.multi_reduction <add>, %41, %cst_22 [0] : vector<16x16x4xf32> to vector<16x4xf32>
    %43 = vector.shape_cast %42 : vector<16x4xf32> to vector<1x16x4xf32>
    %cst_23 = arith.constant 1.000000e-30 : f32
    %44 = vector.broadcast %cst_23 : f32 to vector<1x16x4xf32>
    %45 = arith.maximumf %43, %44 : vector<1x16x4xf32>
    %cst_24 = arith.constant 1.000000e+00 : f32
    %46 = vector.broadcast %cst_24 : f32 to vector<1x16x4xf32>
    %47 = arith.divf %46, %45 : vector<1x16x4xf32>
    %48 = vector.broadcast %47 : vector<1x16x4xf32> to vector<16x16x4xf32>
    %49 = arith.mulf %41, %48 : vector<16x16x4xf32>
    %50 = vector.shape_cast %49 : vector<16x16x4xf32> to vector<256x4xf32>
    %cst_25 = arith.constant dense<0.000000e+00> : vector<256x128xf32>
    %51 = tpu.matmul %50, %1, %cst_25 {dimension_numbers = #tpu.dot_dimension_numbers<[1], [0], [0], [1], [0, 0, 1, 1], [], []>} : vector<256x4xf32>, vector<4x128xf32>, vector<256x128xf32> -> vector<256x128xf32>
    %52 = vector.shape_cast %51 : vector<256x128xf32> to vector<16x16x128xf32>
    %53 = vector.shape_cast %13 : vector<16x128xf32> to vector<16x1x128xf32>
    %54 = vector.broadcast %53 : vector<16x1x128xf32> to vector<16x16x128xf32>
    %55 = arith.mulf %52, %54 : vector<16x16x128xf32>
    %cst_26 = arith.constant dense<0.000000e+00> : vector<16x128xf32>
    %56 = vector.multi_reduction <add>, %55, %cst_26 [0] : vector<16x16x128xf32> to vector<16x128xf32>
    %c0_27 = arith.constant 0 : index
    %c0_28 = arith.constant 0 : index
    %57 = vector.load %arg9[%c0_27, %c0_28] : memref<128x384xf32, #tpu.memory_space<vmem>>, vector<128x384xf32>
    %c0_29 = arith.constant 0 : index
    %c0_30 = arith.constant 0 : index
    %58 = vector.load %arg10[%c0_29, %c0_30] : memref<128x128xbf16, #tpu.memory_space<vmem>>, vector<128x128xbf16>
    %c0_31 = arith.constant 0 : index
    %c0_32 = arith.constant 0 : index
    %59 = vector.load %arg12[%c0_31, %c0_32] : memref<128x4xbf16, #tpu.memory_space<vmem>>, vector<128x4xbf16>
    %c0_33 = arith.constant 0 : index
    %c0_34 = arith.constant 0 : index
    %60 = vector.load %arg13[%c0_33, %c0_34] : memref<1x128xf32, #tpu.memory_space<vmem>>, vector<1x128xf32>
    %c0_35 = arith.constant 0 : index
    %c0_36 = arith.constant 0 : index
    %61 = vector.load %arg11[%c0_35, %c0_36] : memref<1x128xf32, #tpu.memory_space<vmem>>, vector<1x128xf32>
    %cst_37 = arith.constant dense<0.000000e+00> : vector<16x384xf32>
    %62 = tpu.matmul %56, %57, %cst_37 {dimension_numbers = #tpu.dot_dimension_numbers<[1], [0], [0], [1], [0, 0, 1, 1], [], []>} : vector<16x128xf32>, vector<128x384xf32>, vector<16x384xf32> -> vector<16x384xf32>
    %63 = vector.extract_strided_slice %62 {offsets = [0, 0], sizes = [16, 128], strides = [1, 1]} : vector<16x384xf32> to vector<16x128xf32>
    %64 = vector.extract_strided_slice %62 {offsets = [0, 128], sizes = [16, 128], strides = [1, 1]} : vector<16x384xf32> to vector<16x128xf32>
    %65 = vector.extract_strided_slice %62 {offsets = [0, 256], sizes = [16, 128], strides = [1, 1]} : vector<16x384xf32> to vector<16x128xf32>
    %66 = vector.broadcast %60 : vector<1x128xf32> to vector<16x128xf32>
    %67 = arith.addf %65, %66 : vector<16x128xf32>
    %cst_38 = arith.constant dense<0.000000e+00> : vector<256x128xf32>
    %68 = tpu.matmul %26, %58, %cst_38 {dimension_numbers = #tpu.dot_dimension_numbers<[1], [0], [0], [1], [0, 0, 1, 1], [], []>} : vector<256x128xbf16>, vector<128x128xbf16>, vector<256x128xf32> -> vector<256x128xf32>
    %69 = vector.shape_cast %63 : vector<16x128xf32> to vector<16x1x128xf32>
    %70 = vector.shape_cast %64 : vector<16x128xf32> to vector<1x16x128xf32>
    %71 = vector.broadcast %69 : vector<16x1x128xf32> to vector<16x16x128xf32>
    %72 = vector.broadcast %70 : vector<1x16x128xf32> to vector<16x16x128xf32>
    %73 = arith.addf %71, %72 : vector<16x16x128xf32>
    %74 = vector.shape_cast %68 : vector<256x128xf32> to vector<16x16x128xf32>
    %75 = arith.addf %73, %74 : vector<16x16x128xf32>
    %76 = vector.shape_cast %61 : vector<1x128xf32> to vector<1x1x128xf32>
    %77 = vector.broadcast %76 : vector<1x1x128xf32> to vector<16x16x128xf32>
    %78 = arith.addf %75, %77 : vector<16x16x128xf32>
    %cst_39 = arith.constant 0.00999999977 : f32
    %79 = vector.broadcast %cst_39 : f32 to vector<16x16x128xf32>
    %80 = arith.mulf %79, %78 : vector<16x16x128xf32>
    %81 = arith.maximumf %78, %80 : vector<16x16x128xf32>
    %82 = vector.shape_cast %81 : vector<16x16x128xf32> to vector<256x128xf32>
    %83 = arith.truncf %82 : vector<256x128xf32> to vector<256x128xbf16>
    %cst_40 = arith.constant dense<0.000000e+00> : vector<256x4xf32>
    %84 = tpu.matmul %83, %59, %cst_40 {dimension_numbers = #tpu.dot_dimension_numbers<[1], [0], [0], [1], [0, 0, 1, 1], [], []>} : vector<256x128xbf16>, vector<128x4xbf16>, vector<256x4xf32> -> vector<256x4xf32>
    %85 = vector.shape_cast %84 : vector<256x4xf32> to vector<16x16x4xf32>
    %cst_41 = arith.constant 0.000000e+00 : f32
    %86 = vector.broadcast %cst_41 : f32 to vector<16x16x1xf32>
    %87 = arith.cmpf ogt, %0, %86 : vector<16x16x1xf32>
    %cst_42 = arith.constant -1.000000e+30 : f32
    %88 = vector.shape_cast %87 : vector<16x16x1xi1> to vector<16x16x1xi1>
    %89 = vector.broadcast %88 : vector<16x16x1xi1> to vector<16x16x4xi1>
    %90 = vector.broadcast %cst_42 : f32 to vector<16x16x4xf32>
    %91 = arith.select %89, %85, %90 : vector<16x16x4xi1>, vector<16x16x4xf32>
    %cst_43 = arith.constant dense<0xFF800000> : vector<16x4xf32>
    %92 = vector.multi_reduction <maximumf>, %91, %cst_43 [0] : vector<16x16x4xf32> to vector<16x4xf32>
    %93 = vector.shape_cast %92 : vector<16x4xf32> to vector<1x16x4xf32>
    %94 = vector.broadcast %93 : vector<1x16x4xf32> to vector<16x16x4xf32>
    %95 = arith.subf %91, %94 : vector<16x16x4xf32>
    %96 = math.exp %95 : vector<16x16x4xf32>
    %97 = vector.broadcast %0 : vector<16x16x1xf32> to vector<16x16x4xf32>
    %98 = arith.mulf %96, %97 : vector<16x16x4xf32>
    %cst_44 = arith.constant dense<0.000000e+00> : vector<16x4xf32>
    %99 = vector.multi_reduction <add>, %98, %cst_44 [0] : vector<16x16x4xf32> to vector<16x4xf32>
    %100 = vector.shape_cast %99 : vector<16x4xf32> to vector<1x16x4xf32>
    %cst_45 = arith.constant 1.000000e-30 : f32
    %101 = vector.broadcast %cst_45 : f32 to vector<1x16x4xf32>
    %102 = arith.maximumf %100, %101 : vector<1x16x4xf32>
    %cst_46 = arith.constant 1.000000e+00 : f32
    %103 = vector.broadcast %cst_46 : f32 to vector<1x16x4xf32>
    %104 = arith.divf %103, %102 : vector<1x16x4xf32>
    %105 = vector.broadcast %104 : vector<1x16x4xf32> to vector<16x16x4xf32>
    %106 = arith.mulf %98, %105 : vector<16x16x4xf32>
    %107 = vector.shape_cast %106 : vector<16x16x4xf32> to vector<256x4xf32>
    %cst_47 = arith.constant dense<0.000000e+00> : vector<256x128xf32>
    %108 = tpu.matmul %107, %1, %cst_47 {dimension_numbers = #tpu.dot_dimension_numbers<[1], [0], [0], [1], [0, 0, 1, 1], [], []>} : vector<256x4xf32>, vector<4x128xf32>, vector<256x128xf32> -> vector<256x128xf32>
    %109 = vector.shape_cast %108 : vector<256x128xf32> to vector<16x16x128xf32>
    %110 = vector.shape_cast %67 : vector<16x128xf32> to vector<16x1x128xf32>
    %111 = vector.broadcast %110 : vector<16x1x128xf32> to vector<16x16x128xf32>
    %112 = arith.mulf %109, %111 : vector<16x16x128xf32>
    %cst_48 = arith.constant dense<0.000000e+00> : vector<16x128xf32>
    %113 = vector.multi_reduction <add>, %112, %cst_48 [0] : vector<16x16x128xf32> to vector<16x128xf32>
    %c0_49 = arith.constant 0 : index
    %c0_50 = arith.constant 0 : index
    %114 = vector.load %arg14[%c0_49, %c0_50] : memref<128x128xf32, #tpu.memory_space<vmem>>, vector<128x128xf32>
    %cst_51 = arith.constant dense<0.000000e+00> : vector<16x128xf32>
    %115 = tpu.matmul %113, %114, %cst_51 {dimension_numbers = #tpu.dot_dimension_numbers<[1], [0], [0], [1], [0, 0, 1, 1], [], []>} : vector<16x128xf32>, vector<128x128xf32>, vector<16x128xf32> -> vector<16x128xf32>
    %c0_52 = arith.constant 0 : index
    %c0_53 = arith.constant 0 : index
    %116 = vector.load %arg15[%c0_52, %c0_53] : memref<1x128xf32, #tpu.memory_space<vmem>>, vector<1x128xf32>
    %117 = vector.broadcast %116 : vector<1x128xf32> to vector<16x128xf32>
    %118 = arith.addf %115, %117 : vector<16x128xf32>
    %cst_54 = arith.constant 5.000000e-01 : f32
    %119 = vector.broadcast %cst_54 : f32 to vector<16x128xf32>
    %120 = arith.mulf %119, %118 : vector<16x128xf32>
    %cst_55 = arith.constant 4.471500e-02 : f32
    %121 = vector.broadcast %cst_55 : f32 to vector<16x128xf32>
    %122 = arith.mulf %121, %118 : vector<16x128xf32>
    %123 = arith.mulf %122, %118 : vector<16x128xf32>
    %124 = arith.mulf %123, %118 : vector<16x128xf32>
    %125 = arith.addf %118, %124 : vector<16x128xf32>
    %cst_56 = arith.constant 0.797884583 : f32
    %126 = vector.broadcast %cst_56 : f32 to vector<16x128xf32>
    %127 = arith.mulf %126, %125 : vector<16x128xf32>
    %128 = math.tanh %127 : vector<16x128xf32>
    %cst_57 = arith.constant 1.000000e+00 : f32
    %129 = vector.broadcast %cst_57 : f32 to vector<16x128xf32>
    %130 = arith.addf %129, %128 : vector<16x128xf32>
    %131 = arith.mulf %120, %130 : vector<16x128xf32>
    %c0_58 = arith.constant 0 : index
    %c0_59 = arith.constant 0 : index
    %132 = vector.load %arg16[%c0_58, %c0_59] : memref<128x128xbf16, #tpu.memory_space<vmem>>, vector<128x128xbf16>
    %cst_60 = arith.constant dense<0.000000e+00> : vector<256x128xf32>
    %133 = tpu.matmul %83, %132, %cst_60 {dimension_numbers = #tpu.dot_dimension_numbers<[1], [0], [0], [1], [0, 0, 1, 1], [], []>} : vector<256x128xbf16>, vector<128x128xbf16>, vector<256x128xf32> -> vector<256x128xf32>
    %c0_61 = arith.constant 0 : index
    %c0_62 = arith.constant 0 : index
    %134 = vector.load %arg17[%c0_61, %c0_62] : memref<1x128xf32, #tpu.memory_space<vmem>>, vector<1x128xf32>
    %135 = vector.broadcast %134 : vector<1x128xf32> to vector<256x128xf32>
    %136 = arith.addf %133, %135 : vector<256x128xf32>
    %cst_63 = arith.constant 5.000000e-01 : f32
    %137 = vector.broadcast %cst_63 : f32 to vector<256x128xf32>
    %138 = arith.mulf %137, %136 : vector<256x128xf32>
    %cst_64 = arith.constant 4.471500e-02 : f32
    %139 = vector.broadcast %cst_64 : f32 to vector<256x128xf32>
    %140 = arith.mulf %139, %136 : vector<256x128xf32>
    %141 = arith.mulf %140, %136 : vector<256x128xf32>
    %142 = arith.mulf %141, %136 : vector<256x128xf32>
    %143 = arith.addf %136, %142 : vector<256x128xf32>
    %cst_65 = arith.constant 0.797884583 : f32
    %144 = vector.broadcast %cst_65 : f32 to vector<256x128xf32>
    %145 = arith.mulf %144, %143 : vector<256x128xf32>
    %146 = math.tanh %145 : vector<256x128xf32>
    %cst_66 = arith.constant 1.000000e+00 : f32
    %147 = vector.broadcast %cst_66 : f32 to vector<256x128xf32>
    %148 = arith.addf %147, %146 : vector<256x128xf32>
    %149 = arith.mulf %138, %148 : vector<256x128xf32>
    %150 = vector.shape_cast %149 : vector<256x128xf32> to vector<16x16x128xf32>
    %151 = vector.broadcast %0 : vector<16x16x1xf32> to vector<16x16x128xf32>
    %152 = arith.mulf %150, %151 : vector<16x16x128xf32>
    %cst_67 = arith.constant dense<0.000000e+00> : vector<16x128xf32>
    %153 = vector.multi_reduction <add>, %152, %cst_67 [1] : vector<16x16x128xf32> to vector<16x128xf32>
    %c0_68 = arith.constant 0 : index
    %c0_69 = arith.constant 0 : index
    %154 = vector.load %arg3[%c0_68, %c0_69] : memref<2x16xf32, #tpu.memory_space<vmem>>, vector<2x16xf32>
    %cst_70 = arith.constant dense<0.000000e+00> : vector<2x128xf32>
    %155 = tpu.matmul %154, %131, %cst_70 {dimension_numbers = #tpu.dot_dimension_numbers<[1], [0], [0], [1], [0, 0, 1, 1], [], []>} : vector<2x16xf32>, vector<16x128xf32>, vector<2x128xf32> -> vector<2x128xf32>
    %cst_71 = arith.constant dense<0.000000e+00> : vector<2x128xf32>
    %156 = tpu.matmul %154, %153, %cst_71 {dimension_numbers = #tpu.dot_dimension_numbers<[1], [0], [0], [1], [0, 0, 1, 1], [], []>} : vector<2x16xf32>, vector<16x128xf32>, vector<2x128xf32> -> vector<2x128xf32>
    %c0_72 = arith.constant 0 : index
    %c0_73 = arith.constant 0 : index
    %157 = vector.load %arg18[%c0_72, %c0_73] : memref<128x256xf32, #tpu.memory_space<vmem>>, vector<128x256xf32>
    %cst_74 = arith.constant dense<0.000000e+00> : vector<2x256xf32>
    %158 = tpu.matmul %155, %157, %cst_74 {dimension_numbers = #tpu.dot_dimension_numbers<[1], [0], [0], [1], [0, 0, 1, 1], [], []>} : vector<2x128xf32>, vector<128x256xf32>, vector<2x256xf32> -> vector<2x256xf32>
    %c0_75 = arith.constant 0 : index
    %c0_76 = arith.constant 0 : index
    %159 = vector.load %arg19[%c0_75, %c0_76] : memref<128x256xf32, #tpu.memory_space<vmem>>, vector<128x256xf32>
    %cst_77 = arith.constant dense<0.000000e+00> : vector<2x256xf32>
    %160 = tpu.matmul %156, %159, %cst_77 {dimension_numbers = #tpu.dot_dimension_numbers<[1], [0], [0], [1], [0, 0, 1, 1], [], []>} : vector<2x128xf32>, vector<128x256xf32>, vector<2x256xf32> -> vector<2x256xf32>
    %161 = arith.addf %158, %160 : vector<2x256xf32>
    %c0_78 = arith.constant 0 : index
    %c0_79 = arith.constant 0 : index
    %162 = vector.load %arg20[%c0_78, %c0_79] : memref<1x256xf32, #tpu.memory_space<vmem>>, vector<1x256xf32>
    %163 = vector.broadcast %162 : vector<1x256xf32> to vector<2x256xf32>
    %164 = arith.addf %161, %163 : vector<2x256xf32>
    %cst_80 = arith.constant 5.000000e-01 : f32
    %165 = vector.broadcast %cst_80 : f32 to vector<2x256xf32>
    %166 = arith.mulf %165, %164 : vector<2x256xf32>
    %cst_81 = arith.constant 4.471500e-02 : f32
    %167 = vector.broadcast %cst_81 : f32 to vector<2x256xf32>
    %168 = arith.mulf %167, %164 : vector<2x256xf32>
    %169 = arith.mulf %168, %164 : vector<2x256xf32>
    %170 = arith.mulf %169, %164 : vector<2x256xf32>
    %171 = arith.addf %164, %170 : vector<2x256xf32>
    %cst_82 = arith.constant 0.797884583 : f32
    %172 = vector.broadcast %cst_82 : f32 to vector<2x256xf32>
    %173 = arith.mulf %172, %171 : vector<2x256xf32>
    %174 = math.tanh %173 : vector<2x256xf32>
    %cst_83 = arith.constant 1.000000e+00 : f32
    %175 = vector.broadcast %cst_83 : f32 to vector<2x256xf32>
    %176 = arith.addf %175, %174 : vector<2x256xf32>
    %177 = arith.mulf %166, %176 : vector<2x256xf32>
    %c0_84 = arith.constant 0 : index
    %c0_85 = arith.constant 0 : index
    %178 = vector.load %arg21[%c0_84, %c0_85] : memref<256x128xf32, #tpu.memory_space<vmem>>, vector<256x128xf32>
    %cst_86 = arith.constant dense<0.000000e+00> : vector<2x128xf32>
    %179 = tpu.matmul %177, %178, %cst_86 {dimension_numbers = #tpu.dot_dimension_numbers<[1], [0], [0], [1], [0, 0, 1, 1], [], []>} : vector<2x256xf32>, vector<256x128xf32>, vector<2x128xf32> -> vector<2x128xf32>
    %c0_87 = arith.constant 0 : index
    %c0_88 = arith.constant 0 : index
    %180 = vector.load %arg22[%c0_87, %c0_88] : memref<1x128xf32, #tpu.memory_space<vmem>>, vector<1x128xf32>
    %181 = vector.broadcast %180 : vector<1x128xf32> to vector<2x128xf32>
    %182 = arith.addf %179, %181 : vector<2x128xf32>
    %cst_89 = arith.constant 5.000000e-01 : f32
    %183 = vector.broadcast %cst_89 : f32 to vector<2x128xf32>
    %184 = arith.mulf %183, %182 : vector<2x128xf32>
    %cst_90 = arith.constant 4.471500e-02 : f32
    %185 = vector.broadcast %cst_90 : f32 to vector<2x128xf32>
    %186 = arith.mulf %185, %182 : vector<2x128xf32>
    %187 = arith.mulf %186, %182 : vector<2x128xf32>
    %188 = arith.mulf %187, %182 : vector<2x128xf32>
    %189 = arith.addf %182, %188 : vector<2x128xf32>
    %cst_91 = arith.constant 0.797884583 : f32
    %190 = vector.broadcast %cst_91 : f32 to vector<2x128xf32>
    %191 = arith.mulf %190, %189 : vector<2x128xf32>
    %192 = math.tanh %191 : vector<2x128xf32>
    %cst_92 = arith.constant 1.000000e+00 : f32
    %193 = vector.broadcast %cst_92 : f32 to vector<2x128xf32>
    %194 = arith.addf %193, %192 : vector<2x128xf32>
    %195 = arith.mulf %184, %194 : vector<2x128xf32>
    %c0_93 = arith.constant 0 : index
    %c0_94 = arith.constant 0 : index
    %196 = vector.load %arg23[%c0_93, %c0_94] : memref<128x1xf32, #tpu.memory_space<vmem>>, vector<128x1xf32>
    %cst_95 = arith.constant dense<0.000000e+00> : vector<2x1xf32>
    %197 = tpu.matmul %195, %196, %cst_95 {dimension_numbers = #tpu.dot_dimension_numbers<[1], [0], [0], [1], [0, 0, 1, 1], [], []>} : vector<2x128xf32>, vector<128x1xf32>, vector<2x1xf32> -> vector<2x1xf32>
    %c0_96 = arith.constant 0 : index
    %c0_97 = arith.constant 0 : index
    %198 = vector.load %arg24[%c0_96, %c0_97] : memref<1x1xf32, #tpu.memory_space<vmem>>, vector<1x1xf32>
    %199 = vector.broadcast %198 : vector<1x1xf32> to vector<2x1xf32>
    %200 = arith.addf %197, %199 : vector<2x1xf32>
    %c0_98 = arith.constant 0 : index
    %c0_99 = arith.constant 0 : index
    %201 = vector.load %arg25[%c0_98, %c0_99] : memref<2x1xf32, #tpu.memory_space<vmem>>, vector<2x1xf32>
    tpu.vector_store %arg25[%c0_98, %c0_99], %200 {strides = array<i32>} : memref<2x1xf32, #tpu.memory_space<vmem>>, vector<2x1xf32>,
    return
  }
}

</mosaic_0001>

<llo_original>
// kernel: tpu_custom_call.1
$region0: #{tpu_custom_call.1}
  #allocation0 [shape = 'u32[]', space=smem, size = 0x4, offset = 0x4, fixed_abs, tag = 'smem constant byte address 0x4 - core index']
  #allocation1 [shape = 'u32[72,128]{1,0:T(1,128)}', space=vmem, size = 0x9000, scoped, tag = 'internal scratch']
  #allocation2 [shape = 'f32[1,1]{1,0:T(1,128)S(1)}', space=vmem, size = 0x200, scoped, tag = 'scoped memory for tpu_custom_call.1']
  %s0 = inlined_call_operand.hbm [shape: f32[16,16], index: 0, kind: input, shape index: {}]
  %s1 = inlined_call_operand.vmem [shape: bf16[256,16], index: 1, kind: input, shape index: {}]
  %s2 = inlined_call_operand.vmem [shape: f32[16,16,1], index: 2, kind: input, shape index: {}]
  %s3 = inlined_call_operand.vmem [shape: f32[2,16], index: 3, kind: input, shape index: {}]
  %s4 = inlined_call_operand.hbm [shape: f32[4,128], index: 4, kind: input, shape index: {}]
  %s5 = inlined_call_operand.hbm [shape: f32[16,384], index: 5, kind: input, shape index: {}]
  %s6 = inlined_call_operand.hbm [shape: bf16[16,128], index: 6, kind: input, shape index: {}]
  %s7 = inlined_call_operand.vmem [shape: bf16[128,4], index: 7, kind: input, shape index: {}]
  %s8 = inlined_call_operand.vmem [shape: f32[1,128], index: 8, kind: input, shape index: {}]
  %s9 = inlined_call_operand.vmem [shape: f32[128,384], index: 9, kind: input, shape index: {}]
  %s10 = inlined_call_operand.vmem [shape: bf16[128,128], index: 10, kind: input, shape index: {}]
  %s11 = inlined_call_operand.vmem [shape: f32[1,128], index: 11, kind: input, shape index: {}]
  %s12 = inlined_call_operand.vmem [shape: bf16[128,4], index: 12, kind: input, shape index: {}]
  %s13 = inlined_call_operand.vmem [shape: f32[1,128], index: 13, kind: input, shape index: {}]
  %s14 = inlined_call_operand.vmem [shape: f32[128,128], index: 14, kind: input, shape index: {}]
  %s15 = inlined_call_operand.vmem [shape: f32[1,128], index: 15, kind: input, shape index: {}]
  %s16 = inlined_call_operand.vmem [shape: bf16[128,128], index: 16, kind: input, shape index: {}]
  %s17 = inlined_call_operand.vmem [shape: f32[1,128], index: 17, kind: input, shape index: {}]
  %s18 = inlined_call_operand.hbm [shape: f32[128,256], index: 18, kind: input, shape index: {}]
  %s19 = inlined_call_operand.hbm [shape: f32[128,256], index: 19, kind: input, shape index: {}]
  %s20 = inlined_call_operand.vmem [shape: f32[1,256], index: 20, kind: input, shape index: {}]
  %s21 = inlined_call_operand.hbm [shape: f32[256,128], index: 21, kind: input, shape index: {}]
  %s22 = inlined_call_operand.vmem [shape: f32[1,128], index: 22, kind: input, shape index: {}]
  %s23 = inlined_call_operand.vmem [shape: f32[128,1], index: 23, kind: input, shape index: {}]
  %s24 = inlined_call_operand.<no memory space> [shape: f32[1,1], index: 24, kind: input, shape index: {}]
  %s25 = inlined_call_operand.vmem [shape: f32[2,1], index: 25, kind: output, shape index: {}]
  %s26 = sld [smem:[#allocation0]]
  $region138: #{tpu_custom_call.1} parent=0
    _
  %s28 = ssub.s32 1, %s26
  %s29 = scalar_select 0, %s28, %s26
  %v30 = vstv %s24
  %31 = vst [vmem:[#allocation2] sm:$0x1] %v30
  $region1: #{tpu_custom_call.1} parent=0
    #allocation3 [shape = 'u8[8192]{0}', space=vmem, size = 0x2000, scoped, tag = 'input window, operand 0, single buffered']
    #allocation4 [shape = 's32[1]{0}', space=sflag, size = 0x4, scoped, tag = 'scoped memory for tpu_custom_call.1']
    #allocation5 [shape = 'u8[2048]{0}', space=vmem, size = 0x800, scoped, tag = 'input window, operand 4, single buffered']
    #allocation6 [shape = 's32[1]{0}', space=sflag, size = 0x4, scoped, tag = 'scoped memory for tpu_custom_call.1']
    #allocation7 [shape = 'u8[24576]{0}', space=vmem, size = 0x6000, scoped, tag = 'input window, operand 5, single buffered']
    #allocation8 [shape = 'u8[4096]{0}', space=vmem, size = 0x1000, scoped, tag = 'input window, operand 6, single buffered']
    #allocation9 [shape = 's32[1]{0}', space=sflag, size = 0x4, scoped, tag = 'scoped memory for tpu_custom_call.1']
    #allocation10 [shape = 'u8[131072]{0}', space=vmem, size = 0x20000, scoped, tag = 'input window, operand 18, single buffered']
    #allocation11 [shape = 'u8[131072]{0}', space=vmem, size = 0x20000, scoped, tag = 'input window, operand 19, single buffered']
    #allocation12 [shape = 's32[1]{0}', space=sflag, size = 0x4, scoped, tag = 'scoped memory for tpu_custom_call.1']
    #allocation13 [shape = 'u8[131072]{0}', space=vmem, size = 0x20000, scoped, tag = 'input window, operand 21, single buffered']
    %32 = vsyncpa [#allocation4], 0
    %33 = vsyncpa [#allocation6], 0
    %34 = vsyncpa [#allocation9], 0
    %35 = vsyncpa [#allocation12], 0
    // Predicated region
    $region2: #{tpu_custom_call.1} parent=1 // pred_check
      _
    $region3: #{tpu_custom_call.1} parent=1 // pred_check_branch
      %37 = sbr.rel (0) target = $region5
    $region4: #{tpu_custom_call.1} parent=1 // pred_region
      %39 = vsyncadd [#allocation4], 0
      %s40 = sshll.u32 %s0, 4
      %s41 = int_to_ptr.hbm [resolvable:$true] %s40
      %s42 = sshll.u32 [#allocation3], 4
      %s43 = int_to_ptr.vmem [resolvable:$true] %s42
      %48 = dma.hbm_to_vmem [thread:$0]  %s41, 256, %s43, [#allocation4], 128, 128, 8
    $region5: #{tpu_custom_call.1} parent=1 // pred_fallthru
      _
    // Predicated region
    $region6: #{tpu_custom_call.1} parent=1 // pred_check
      _
    $region7: #{tpu_custom_call.1} parent=1 // pred_check_branch
      %50 = sbr.rel (0) target = $region9
    $region8: #{tpu_custom_call.1} parent=1 // pred_region
      _
    $region9: #{tpu_custom_call.1} parent=1 // pred_fallthru
      _
    // Predicated region
    $region10: #{tpu_custom_call.1} parent=1 // pred_check
      _
    $region11: #{tpu_custom_call.1} parent=1 // pred_check_branch
      %52 = sbr.rel (0) target = $region13
    $region12: #{tpu_custom_call.1} parent=1 // pred_region
      _
    $region13: #{tpu_custom_call.1} parent=1 // pred_fallthru
      _
    // Predicated region
    $region14: #{tpu_custom_call.1} parent=1 // pred_check
      _
    $region15: #{tpu_custom_call.1} parent=1 // pred_check_branch
      %54 = sbr.rel (0) target = $region17
    $region16: #{tpu_custom_call.1} parent=1 // pred_region
      _
    $region17: #{tpu_custom_call.1} parent=1 // pred_fallthru
      _
    // Predicated region
    $region18: #{tpu_custom_call.1} parent=1 // pred_check
      _
    $region19: #{tpu_custom_call.1} parent=1 // pred_check_branch
      %56 = sbr.rel (0) target = $region21
    $region20: #{tpu_custom_call.1} parent=1 // pred_region
      %58 = vsyncadd [#allocation6], 0
      %s60 = sshll.u32 %s4, 4
      %s61 = int_to_ptr.hbm [resolvable:$true] %s60
      %s62 = sshll.u32 [#allocation5], 4
      %s63 = int_to_ptr.vmem [resolvable:$true] %s62
      %65 = dma.hbm_to_vmem [thread:$0]  %s61, 64, %s63, [#allocation6]
    $region21: #{tpu_custom_call.1} parent=1 // pred_fallthru
      _
    // Predicated region
    $region22: #{tpu_custom_call.1} parent=1 // pred_check
      _
    $region23: #{tpu_custom_call.1} parent=1 // pred_check_branch
      %67 = sbr.rel (0) target = $region25
    $region24: #{tpu_custom_call.1} parent=1 // pred_region
      %69 = vsyncadd [#allocation6], 0
      %s70 = sshll.u32 %s5, 4
      %s71 = int_to_ptr.hbm [resolvable:$true] %s70
      %s72 = sshll.u32 [#allocation7], 4
      %s73 = int_to_ptr.vmem [resolvable:$true] %s72
      %78 = dma.hbm_to_vmem [thread:$0]  %s71, 768, %s73, [#allocation6], 384, 384, 24
    $region25: #{tpu_custom_call.1} parent=1 // pred_fallthru
      _
    // Predicated region
    $region26: #{tpu_custom_call.1} parent=1 // pred_check
      _
    $region27: #{tpu_custom_call.1} parent=1 // pred_check_branch
      %80 = sbr.rel (0) target = $region29
    $region28: #{tpu_custom_call.1} parent=1 // pred_region
      %82 = vsyncadd [#allocation9], 0
      %s83 = sshll.u32 %s6, 4
      %s84 = int_to_ptr.hbm [resolvable:$true] %s83
      %s85 = sshll.u32 [#allocation8], 4
      %s86 = int_to_ptr.vmem [resolvable:$true] %s85
      %91 = dma.hbm_to_vmem [thread:$0]  %s84, 128, %s86, [#allocation9], 64, 64, 4
    $region29: #{tpu_custom_call.1} parent=1 // pred_fallthru
      _
    // Predicated region
    $region30: #{tpu_custom_call.1} parent=1 // pred_check
      _
    $region31: #{tpu_custom_call.1} parent=1 // pred_check_branch
      %93 = sbr.rel (0) target = $region33
    $region32: #{tpu_custom_call.1} parent=1 // pred_region
      _
    $region33: #{tpu_custom_call.1} parent=1 // pred_fallthru
      _
    // Predicated region
    $region34: #{tpu_custom_call.1} parent=1 // pred_check
      _
    $region35: #{tpu_custom_call.1} parent=1 // pred_check_branch
      %95 = sbr.rel (0) target = $region37
    $region36: #{tpu_custom_call.1} parent=1 // pred_region
      _
    $region37: #{tpu_custom_call.1} parent=1 // pred_fallthru
      _
    // Predicated region
    $region38: #{tpu_custom_call.1} parent=1 // pred_check
      _
    $region39: #{tpu_custom_call.1} parent=1 // pred_check_branch
      %97 = sbr.rel (0) target = $region41
    $region40: #{tpu_custom_call.1} parent=1 // pred_region
      _
    $region41: #{tpu_custom_call.1} parent=1 // pred_fallthru
      _
    // Predicated region
    $region42: #{tpu_custom_call.1} parent=1 // pred_check
      _
    $region43: #{tpu_custom_call.1} parent=1 // pred_check_branch
      %99 = sbr.rel (0) target = $region45
    $region44: #{tpu_custom_call.1} parent=1 // pred_region
      _
    $region45: #{tpu_custom_call.1} parent=1 // pred_fallthru
      _
    // Predicated region
    $region46: #{tpu_custom_call.1} parent=1 // pred_check
      _
    $region47: #{tpu_custom_call.1} parent=1 // pred_check_branch
      %101 = sbr.rel (0) target = $region49
    $region48: #{tpu_custom_call.1} parent=1 // pred_region
      _
    $region49: #{tpu_custom_call.1} parent=1 // pred_fallthru
      _
    // Predicated region
    $region50: #{tpu_custom_call.1} parent=1 // pred_check
      _
    $region51: #{tpu_custom_call.1} parent=1 // pred_check_branch
      %103 = sbr.rel (0) target = $region53
    $region52: #{tpu_custom_call.1} parent=1 // pred_region
      _
    $region53: #{tpu_custom_call.1} parent=1 // pred_fallthru
      _
    // Predicated region
    $region54: #{tpu_custom_call.1} parent=1 // pred_check
      _
    $region55: #{tpu_custom_call.1} parent=1 // pred_check_branch
      %105 = sbr.rel (0) target = $region57
    $region56: #{tpu_custom_call.1} parent=1 // pred_region
      _
    $region57: #{tpu_custom_call.1} parent=1 // pred_fallthru
      _
    // Predicated region
    $region58: #{tpu_custom_call.1} parent=1 // pred_check
      _
    $region59: #{tpu_custom_call.1} parent=1 // pred_check_branch
      %107 = sbr.rel (0) target = $region61
    $region60: #{tpu_custom_call.1} parent=1 // pred_region
      _
    $region61: #{tpu_custom_call.1} parent=1 // pred_fallthru
      _
    // Predicated region
    $region62: #{tpu_custom_call.1} parent=1 // pred_check
      _
    $region63: #{tpu_custom_call.1} parent=1 // pred_check_branch
      %109 = sbr.rel (0) target = $region65
    $region64: #{tpu_custom_call.1} parent=1 // pred_region
      _
    $region65: #{tpu_custom_call.1} parent=1 // pred_fallthru
      _
    // Predicated region
    $region66: #{tpu_custom_call.1} parent=1 // pred_check
      _
    $region67: #{tpu_custom_call.1} parent=1 // pred_check_branch
      %111 = sbr.rel (0) target = $region69
    $region68: #{tpu_custom_call.1} parent=1 // pred_region
      _
    $region69: #{tpu_custom_call.1} parent=1 // pred_fallthru
      _
    // Predicated region
    $region70: #{tpu_custom_call.1} parent=1 // pred_check
      _
    $region71: #{tpu_custom_call.1} parent=1 // pred_check_branch
      %113 = sbr.rel (0) target = $region73
    $region72: #{tpu_custom_call.1} parent=1 // pred_region
      _
    $region73: #{tpu_custom_call.1} parent=1 // pred_fallthru
      _
    // Predicated region
    $region74: #{tpu_custom_call.1} parent=1 // pred_check
      _
    $region75: #{tpu_custom_call.1} parent=1 // pred_check_branch
      %115 = sbr.rel (0) target = $region77
    $region76: #{tpu_custom_call.1} parent=1 // pred_region
      %117 = vsyncadd [#allocation9], 0
      %s118 = sshll.u32 %s18, 4
      %s119 = int_to_ptr.hbm [resolvable:$true] %s118
      %s120 = sshll.u32 [#allocation10], 4
      %s121 = int_to_ptr.vmem [resolvable:$true] %s120
      %126 = dma.hbm_to_vmem [thread:$0]  %s119, 4096, %s121, [#allocation9], 256, 256, 16
    $region77: #{tpu_custom_call.1} parent=1 // pred_fallthru
      _
    // Predicated region
    $region78: #{tpu_custom_call.1} parent=1 // pred_check
      _
    $region79: #{tpu_custom_call.1} parent=1 // pred_check_branch
      %128 = sbr.rel (0) target = $region81
    $region80: #{tpu_custom_call.1} parent=1 // pred_region
      %130 = vsyncadd [#allocation12], 0
      %s131 = sshll.u32 %s19, 4
      %s132 = int_to_ptr.hbm [resolvable:$true] %s131
      %s133 = sshll.u32 [#allocation11], 4
      %s134 = int_to_ptr.vmem [resolvable:$true] %s133
      %139 = dma.hbm_to_vmem [thread:$0]  %s132, 4096, %s134, [#allocation12], 256, 256, 16
    $region81: #{tpu_custom_call.1} parent=1 // pred_fallthru
      _
    // Predicated region
    $region82: #{tpu_custom_call.1} parent=1 // pred_check
      _
    $region83: #{tpu_custom_call.1} parent=1 // pred_check_branch
      %141 = sbr.rel (0) target = $region85
    $region84: #{tpu_custom_call.1} parent=1 // pred_region
      _
    $region85: #{tpu_custom_call.1} parent=1 // pred_fallthru
      _
    // Predicated region
    $region86: #{tpu_custom_call.1} parent=1 // pred_check
      _
    $region87: #{tpu_custom_call.1} parent=1 // pred_check_branch
      %143 = sbr.rel (0) target = $region89
    $region88: #{tpu_custom_call.1} parent=1 // pred_region
      %145 = vsyncadd [#allocation12], 0
      %s146 = sshll.u32 %s21, 4
      %s147 = int_to_ptr.hbm [resolvable:$true] %s146
      %s148 = sshll.u32 [#allocation13], 4
      %s149 = int_to_ptr.vmem [resolvable:$true] %s148
      %154 = dma.hbm_to_vmem [thread:$0]  %s147, 4096, %s149, [#allocation12], 128, 128, 8
    $region89: #{tpu_custom_call.1} parent=1 // pred_fallthru
      _
    // Predicated region
    $region90: #{tpu_custom_call.1} parent=1 // pred_check
      _
    $region91: #{tpu_custom_call.1} parent=1 // pred_check_branch
      %156 = sbr.rel (0) target = $region93
    $region92: #{tpu_custom_call.1} parent=1 // pred_region
      _
    $region93: #{tpu_custom_call.1} parent=1 // pred_fallthru
      _
    // Predicated region
    $region94: #{tpu_custom_call.1} parent=1 // pred_check
      _
    $region95: #{tpu_custom_call.1} parent=1 // pred_check_branch
      %158 = sbr.rel (0) target = $region97
    $region96: #{tpu_custom_call.1} parent=1 // pred_region
      _
    $region97: #{tpu_custom_call.1} parent=1 // pred_fallthru
      _
    // Predicated region
    $region98: #{tpu_custom_call.1} parent=1 // pred_check
      _
    $region99: #{tpu_custom_call.1} parent=1 // pred_check_branch
      %160 = sbr.rel (0) target = $region101
    $region100: #{tpu_custom_call.1} parent=1 // pred_region
      _
    $region101: #{tpu_custom_call.1} parent=1 // pred_fallthru
      _
    // Predicated region
    $region102: #{tpu_custom_call.1} parent=1 // pred_check
      _
    $region103: #{tpu_custom_call.1} parent=1 // pred_check_branch
      %162 = sbr.rel (0) target = $region105
    $region104: #{tpu_custom_call.1} parent=1 // pred_region
      %164 = dma.done [#allocation4], 256
    $region105: #{tpu_custom_call.1} parent=1 // pred_fallthru
      _
    // Predicated region
    $region106: #{tpu_custom_call.1} parent=1 // pred_check
      _
    $region107: #{tpu_custom_call.1} parent=1 // pred_check_branch
      %166 = sbr.rel (0) target = $region109
    $region108: #{tpu_custom_call.1} parent=1 // pred_region
      %168 = dma.done [#allocation6], 64
    $region109: #{tpu_custom_call.1} parent=1 // pred_fallthru
      _
    // Predicated region
    $region110: #{tpu_custom_call.1} parent=1 // pred_check
      _
    $region111: #{tpu_custom_call.1} parent=1 // pred_check_branch
      %170 = sbr.rel (0) target = $region113
    $region112: #{tpu_custom_call.1} parent=1 // pred_region
      %172 = dma.done [#allocation6], 768
    $region113: #{tpu_custom_call.1} parent=1 // pred_fallthru
      _
    // Predicated region
    $region114: #{tpu_custom_call.1} parent=1 // pred_check
      _
    $region115: #{tpu_custom_call.1} parent=1 // pred_check_branch
      %174 = sbr.rel (0) target = $region117
    $region116: #{tpu_custom_call.1} parent=1 // pred_region
      %176 = dma.done [#allocation9], 128
    $region117: #{tpu_custom_call.1} parent=1 // pred_fallthru
      _
    // Predicated region
    $region118: #{tpu_custom_call.1} parent=1 // pred_check
      _
    $region119: #{tpu_custom_call.1} parent=1 // pred_check_branch
      %178 = sbr.rel (0) target = $region121
    $region120: #{tpu_custom_call.1} parent=1 // pred_region
      %180 = dma.done [#allocation9], 4096
    $region121: #{tpu_custom_call.1} parent=1 // pred_fallthru
      _
    // Predicated region
    $region122: #{tpu_custom_call.1} parent=1 // pred_check
      _
    $region123: #{tpu_custom_call.1} parent=1 // pred_check_branch
      %182 = sbr.rel (0) target = $region125
    $region124: #{tpu_custom_call.1} parent=1 // pred_region
      %184 = dma.done [#allocation12], 4096
    $region125: #{tpu_custom_call.1} parent=1 // pred_fallthru
      _
    // Predicated region
    $region126: #{tpu_custom_call.1} parent=1 // pred_check
      _
    $region127: #{tpu_custom_call.1} parent=1 // pred_check_branch
      %186 = sbr.rel (0) target = $region129
    $region128: #{tpu_custom_call.1} parent=1 // pred_region
      %188 = dma.done [#allocation12], 4096
    $region129: #{tpu_custom_call.1} parent=1 // pred_fallthru
      _
    %v190 = vld [vmem:[%s2] sm:$0xff]
    %v191 = vld [vmem:[%s2 + $0x8] sm:$0xff]
    %v192 = vld [vmem:[%s2 + $0x10] sm:$0xff]
    %v193 = vld [vmem:[%s2 + $0x18] sm:$0xff]
    %v194 = vld [vmem:[%s2 + $0x20] sm:$0xff]
    %v195 = vld [vmem:[%s2 + $0x28] sm:$0xff]
    %v196 = vld [vmem:[%s2 + $0x30] sm:$0xff]
    %v197 = vld [vmem:[%s2 + $0x38] sm:$0xff]
    %v198 = vld [vmem:[%s2 + $0x40] sm:$0xff]
    %v199 = vld [vmem:[%s2 + $0x48] sm:$0xff]
    %v200 = vld [vmem:[%s2 + $0x50] sm:$0xff]
    %v201 = vld [vmem:[%s2 + $0x58] sm:$0xff]
    %v202 = vld [vmem:[%s2 + $0x60] sm:$0xff]
    %v203 = vld [vmem:[%s2 + $0x68] sm:$0xff]
    %v204 = vld [vmem:[%s2 + $0x70] sm:$0xff]
    %v205 = vld [vmem:[%s2 + $0x78] sm:$0xff]
    %v206 = vld [vmem:[%s2 + $0x80] sm:$0xff]
    %v207 = vld [vmem:[%s2 + $0x88] sm:$0xff]
    %v208 = vld [vmem:[%s2 + $0x90] sm:$0xff]
    %v209 = vld [vmem:[%s2 + $0x98] sm:$0xff]
    %v210 = vld [vmem:[%s2 + $0xa0] sm:$0xff]
    %v211 = vld [vmem:[%s2 + $0xa8] sm:$0xff]
    %v212 = vld [vmem:[%s2 + $0xb0] sm:$0xff]
    %v213 = vld [vmem:[%s2 + $0xb8] sm:$0xff]
    %v214 = vld [vmem:[%s2 + $0xc0] sm:$0xff]
    %v215 = vld [vmem:[%s2 + $0xc8] sm:$0xff]
    %v216 = vld [vmem:[%s2 + $0xd0] sm:$0xff]
    %v217 = vld [vmem:[%s2 + $0xd8] sm:$0xff]
    %v218 = vld [vmem:[%s2 + $0xe0] sm:$0xff]
    %v219 = vld [vmem:[%s2 + $0xe8] sm:$0xff]
    %v220 = vld [vmem:[%s2 + $0xf0] sm:$0xff]
    %v221 = vld [vmem:[%s2 + $0xf8] sm:$0xff]
    %v222 = vld [vmem:[#allocation5] sm:$0xf]
    %v223 = vld [vmem:[#allocation3] sm:$0xff]
    %v224 = vld [vmem:[#allocation3 + $0x8] sm:$0xff]
    %v225 = vld [vmem:[%s1] sm:$0xf]
    %v226 = vld [vmem:[%s1 + $0x4] sm:$0xf]
    %v227 = vld [vmem:[%s1 + $0x8] sm:$0xf]
    %v228 = vld [vmem:[%s1 + $0xc] sm:$0xf]
    %v229 = vld [vmem:[%s1 + $0x10] sm:$0xf]
    %v230 = vld [vmem:[%s1 + $0x14] sm:$0xf]
    %v231 = vld [vmem:[%s1 + $0x18] sm:$0xf]
    %v232 = vld [vmem:[%s1 + $0x1c] sm:$0xf]
    %v233 = vld [vmem:[%s1 + $0x20] sm:$0xf]
    %v234 = vld [vmem:[%s1 + $0x24] sm:$0xf]
    %v235 = vld [vmem:[%s1 + $0x28] sm:$0xf]
    %v236 = vld [vmem:[%s1 + $0x2c] sm:$0xf]
    %v237 = vld [vmem:[%s1 + $0x30] sm:$0xf]
    %v238 = vld [vmem:[%s1 + $0x34] sm:$0xf]
    %v239 = vld [vmem:[%s1 + $0x38] sm:$0xf]
    %v240 = vld [vmem:[%s1 + $0x3c] sm:$0xf]
    %v241 = vld [vmem:[%s1 + $0x40] sm:$0xf]
    %v242 = vld [vmem:[%s1 + $0x44] sm:$0xf]
    %v243 = vld [vmem:[%s1 + $0x48] sm:$0xf]
    %v244 = vld [vmem:[%s1 + $0x4c] sm:$0xf]
    %v245 = vld [vmem:[%s1 + $0x50] sm:$0xf]
    %v246 = vld [vmem:[%s1 + $0x54] sm:$0xf]
    %v247 = vld [vmem:[%s1 + $0x58] sm:$0xf]
    %v248 = vld [vmem:[%s1 + $0x5c] sm:$0xf]
    %v249 = vld [vmem:[%s1 + $0x60] sm:$0xf]
    %v250 = vld [vmem:[%s1 + $0x64] sm:$0xf]
    %v251 = vld [vmem:[%s1 + $0x68] sm:$0xf]
    %v252 = vld [vmem:[%s1 + $0x6c] sm:$0xf]
    %v253 = vld [vmem:[%s1 + $0x70] sm:$0xf]
    %v254 = vld [vmem:[%s1 + $0x74] sm:$0xf]
    %v255 = vld [vmem:[%s1 + $0x78] sm:$0xf]
    %v256 = vld [vmem:[%s1 + $0x7c] sm:$0xf]
    %v257 = vld [vmem:[#allocation7] sm:$0xff]
    %v258 = vld [vmem:[#allocation7 + $0x8] sm:$0xff]
    %v259 = vld [vmem:[#allocation7 + $0x10] sm:$0xff]
    %v260 = vld [vmem:[#allocation7 + $0x18] sm:$0xff]
    %v261 = vld [vmem:[#allocation7 + $0x20] sm:$0xff]
    %v262 = vld [vmem:[#allocation7 + $0x28] sm:$0xff]
    %v263 = vld [vmem:[#allocation8] sm:$0xf]
    %v264 = vld [vmem:[#allocation8 + $0x4] sm:$0xf]
    %v265 = vld [vmem:[%s7] sm:$0xf]
    %v266 = vld [vmem:[%s7 + $0x4] sm:$0xf]
    %v267 = vld [vmem:[%s7 + $0x8] sm:$0xf]
    %v268 = vld [vmem:[%s7 + $0xc] sm:$0xf]
    %v269 = vld [vmem:[%s7 + $0x10] sm:$0xf]
    %v270 = vld [vmem:[%s7 + $0x14] sm:$0xf]
    %v271 = vld [vmem:[%s7 + $0x18] sm:$0xf]
    %v272 = vld [vmem:[%s7 + $0x1c] sm:$0xf]
    %v273 = vld [vmem:[%s7 + $0x20] sm:$0xf]
    %v274 = vld [vmem:[%s7 + $0x24] sm:$0xf]
    %v275 = vld [vmem:[%s7 + $0x28] sm:$0xf]
    %v276 = vld [vmem:[%s7 + $0x2c] sm:$0xf]
    %v277 = vld [vmem:[%s7 + $0x30] sm:$0xf]
    %v278 = vld [vmem:[%s7 + $0x34] sm:$0xf]
    %v279 = vld [vmem:[%s7 + $0x38] sm:$0xf]
    %v280 = vld [vmem:[%s7 + $0x3c] sm:$0xf]
    %v281 = vld [vmem:[%s8] sm:$0x1]
    %vm282 = vcmask 130048
    %v284 = vsel %vm282, %v223, 0
    %v287 = vsel %vm282, %v224, 0
    %289 = vmatpush.msra.mxu0 0.0
    %290 = vmatpush.msra.mxu0 0.0
    %291 = vmatpush.msra.mxu0 0.0
    %292 = vmatpush.msra.mxu0 0.0
    %293 = vmatpush.msra.mxu0 0.0
    %294 = vmatpush.msra.mxu0 0.0
    %295 = vmatpush.msra.mxu0 0.0
    %296 = vmatpush.msra.mxu0 0.0
    %297 = vmatpush.msra.mxu0 0.0
    %298 = vmatpush.msra.mxu0 0.0
    %299 = vmatpush.msra.mxu0 0.0
    %300 = vmatpush.msra.mxu0 0.0
    %301 = vmatpush.msra.mxu0 0.0
    %302 = vmatpush.msra.mxu0 0.0
    %303 = vmatpush.msra.mxu0 %v260
    %304 = vmatpush.msra.mxu0 %v257
    %305 = vmatmul.f32.gmra.mxu0 %v284
    %v306 = vpop.f32.mrf.mxu0
    %v307 = vadd.f32 0.0, %v306
    %308 = vmatmul.f32.gmra.mxu0 %v287
    %v309 = vpop.f32.mrf.mxu0
    %v310 = vadd.f32 0.0, %v309
    %311 = vdwg.mxu0
    %312 = vmatpush.msra.mxu0 0.0
    %313 = vmatpush.msra.mxu0 0.0
    %314 = vmatpush.msra.mxu0 0.0
    %315 = vmatpush.msra.mxu0 0.0
    %316 = vmatpush.msra.mxu0 0.0
    %317 = vmatpush.msra.mxu0 0.0
    %318 = vmatpush.msra.mxu0 0.0
    %319 = vmatpush.msra.mxu0 0.0
    %320 = vmatpush.msra.mxu0 0.0
    %321 = vmatpush.msra.mxu0 0.0
    %322 = vmatpush.msra.mxu0 0.0
    %323 = vmatpush.msra.mxu0 0.0
    %324 = vmatpush.msra.mxu0 0.0
    %325 = vmatpush.msra.mxu0 0.0
    %326 = vmatpush.msra.mxu0 %v261
    %327 = vmatpush.msra.mxu0 %v258
    %328 = vmatmul.f32.gmra.mxu0 %v284
    %v329 = vpop.f32.mrf.mxu0
    %v330 = vadd.f32 0.0, %v329
    %331 = vmatmul.f32.gmra.mxu0 %v287
    %v332 = vpop.f32.mrf.mxu0
    %v333 = vadd.f32 0.0, %v332
    %334 = vdwg.mxu0
    %335 = vmatpush.msra.mxu0 0.0
    %336 = vmatpush.msra.mxu0 0.0
    %337 = vmatpush.msra.mxu0 0.0
    %338 = vmatpush.msra.mxu0 0.0
    %339 = vmatpush.msra.mxu0 0.0
    %340 = vmatpush.msra.mxu0 0.0
    %341 = vmatpush.msra.mxu0 0.0
    %342 = vmatpush.msra.mxu0 0.0
    %343 = vmatpush.msra.mxu0 0.0
    %344 = vmatpush.msra.mxu0 0.0
    %345 = vmatpush.msra.mxu0 0.0
    %346 = vmatpush.msra.mxu0 0.0
    %347 = vmatpush.msra.mxu0 0.0
    %348 = vmatpush.msra.mxu0 0.0
    %349 = vmatpush.msra.mxu0 %v262
    %350 = vmatpush.msra.mxu0 %v259
    %351 = vmatmul.f32.gmra.mxu0 %v284
    %v352 = vpop.f32.mrf.mxu0
    %v353 = vadd.f32 0.0, %v352
    %354 = vmatmul.f32.gmra.mxu0 %v287
    %v355 = vpop.f32.mrf.mxu0
    %v356 = vadd.f32 0.0, %v355
    %357 = vdwg.mxu0
    %v359 = vperm.slane %v281, 0
    %v361 = vadd.f32 %v353, %v359
    %v362 = vadd.f32 %v356, %v359
    %v395 = vunpack.c.l.b16 %v225
    %v396 = vunpack.c.l.b16 %v226
    %v397 = vunpack.c.l.b16 %v227
    %v398 = vunpack.c.l.b16 %v228
    %v399 = vunpack.c.l.b16 %v229
    %v400 = vunpack.c.l.b16 %v230
    %v401 = vunpack.c.l.b16 %v231
    %v402 = vunpack.c.l.b16 %v232
    %v403 = vunpack.c.l.b16 %v233
    %v404 = vunpack.c.l.b16 %v234
    %v405 = vunpack.c.l.b16 %v235
    %v406 = vunpack.c.l.b16 %v236
    %v407 = vunpack.c.l.b16 %v237
    %v408 = vunpack.c.l.b16 %v238
    %v409 = vunpack.c.l.b16 %v239
    %v410 = vunpack.c.l.b16 %v240
    %v411 = vunpack.c.l.b16 %v241
    %v412 = vunpack.c.l.b16 %v242
    %v413 = vunpack.c.l.b16 %v243
    %v414 = vunpack.c.l.b16 %v244
    %v415 = vunpack.c.l.b16 %v245
    %v416 = vunpack.c.l.b16 %v246
    %v417 = vunpack.c.l.b16 %v247
    %v418 = vunpack.c.l.b16 %v248
    %v419 = vunpack.c.l.b16 %v249
    %v420 = vunpack.c.l.b16 %v250
    %v421 = vunpack.c.l.b16 %v251
    %v422 = vunpack.c.l.b16 %v252
    %v423 = vunpack.c.l.b16 %v253
    %v424 = vunpack.c.l.b16 %v254
    %v425 = vunpack.c.l.b16 %v255
    %v426 = vunpack.c.l.b16 %v256
    %v427 = vpack.c.b16 %v396, %v395
    %v428 = vpack.c.b16 %v398, %v397
    %v429 = vpack.c.b16 %v400, %v399
    %v430 = vpack.c.b16 %v402, %v401
    %v431 = vpack.c.b16 %v404, %v403
    %v432 = vpack.c.b16 %v406, %v405
    %v433 = vpack.c.b16 %v408, %v407
    %v434 = vpack.c.b16 %v410, %v409
    %v435 = vpack.c.b16 %v412, %v411
    %v436 = vpack.c.b16 %v414, %v413
    %v437 = vpack.c.b16 %v416, %v415
    %v438 = vpack.c.b16 %v418, %v417
    %v439 = vpack.c.b16 %v420, %v419
    %v440 = vpack.c.b16 %v422, %v421
    %v441 = vpack.c.b16 %v424, %v423
    %v442 = vpack.c.b16 %v426, %v425
    %v445 = vunpack.c.l.b16 %v263
    %v446 = vunpack.c.l.b16 %v264
    %v447 = vpack.c.b16 %v446, %v445
    %v450 = vsel %vm282, %v427, 0
    %v453 = vsel %vm282, %v428, 0
    %v456 = vsel %vm282, %v429, 0
    %v459 = vsel %vm282, %v430, 0
    %v462 = vsel %vm282, %v431, 0
    %v465 = vsel %vm282, %v432, 0
    %v468 = vsel %vm282, %v433, 0
    %v471 = vsel %vm282, %v434, 0
    %v474 = vsel %vm282, %v435, 0
    %v477 = vsel %vm282, %v436, 0
    %v480 = vsel %vm282, %v437, 0
    %v483 = vsel %vm282, %v438, 0
    %v486 = vsel %vm282, %v439, 0
    %v489 = vsel %vm282, %v440, 0
    %v492 = vsel %vm282, %v441, 0
    %v495 = vsel %vm282, %v442, 0
    %497 = vmatpush.bf16.msra.mxu0 0
    %498 = vmatpush.bf16.msra.mxu0 0
    %499 = vmatpush.bf16.msra.mxu0 0
    %500 = vmatpush.bf16.msra.mxu0 0
    %501 = vmatpush.bf16.msra.mxu0 0
    %502 = vmatpush.bf16.msra.mxu0 0
    %503 = vmatpush.bf16.msra.mxu0 0
    %504 = vmatpush.bf16.msra.mxu0 %v447
    %505 = vmatmul.bf16.gmra.mxu0 %v450
    %v506 = vpop.f32.mrf.mxu0
    %v507 = vadd.f32 0.0, %v506
    %v508 = vpop.f32.mrf.mxu0
    %v509 = vadd.f32 0.0, %v508
    %510 = vmatmul.bf16.gmra.mxu0 %v453
    %v511 = vpop.f32.mrf.mxu0
    %v512 = vadd.f32 0.0, %v511
    %v513 = vpop.f32.mrf.mxu0
    %v514 = vadd.f32 0.0, %v513
    %515 = vmatmul.bf16.gmra.mxu0 %v456
    %v516 = vpop.f32.mrf.mxu0
    %v517 = vadd.f32 0.0, %v516
    %v518 = vpop.f32.mrf.mxu0
    %v519 = vadd.f32 0.0, %v518
    %520 = vmatmul.bf16.gmra.mxu0 %v459
    %v521 = vpop.f32.mrf.mxu0
    %v522 = vadd.f32 0.0, %v521
    %v523 = vpop.f32.mrf.mxu0
    %v524 = vadd.f32 0.0, %v523
    %525 = vmatmul.bf16.gmra.mxu0 %v462
    %v526 = vpop.f32.mrf.mxu0
    %v527 = vadd.f32 0.0, %v526
    %v528 = vpop.f32.mrf.mxu0
    %v529 = vadd.f32 0.0, %v528
    %530 = vmatmul.bf16.gmra.mxu0 %v465
    %v531 = vpop.f32.mrf.mxu0
    %v532 = vadd.f32 0.0, %v531
    %v533 = vpop.f32.mrf.mxu0
    %v534 = vadd.f32 0.0, %v533
    %535 = vmatmul.bf16.gmra.mxu0 %v468
    %v536 = vpop.f32.mrf.mxu0
    %v537 = vadd.f32 0.0, %v536
    %v538 = vpop.f32.mrf.mxu0
    %v539 = vadd.f32 0.0, %v538
    %540 = vmatmul.bf16.gmra.mxu0 %v471
    %v541 = vpop.f32.mrf.mxu0
    %v542 = vadd.f32 0.0, %v541
    %v543 = vpop.f32.mrf.mxu0
    %v544 = vadd.f32 0.0, %v543
    %545 = vmatmul.bf16.gmra.mxu0 %v474
    %v546 = vpop.f32.mrf.mxu0
    %v547 = vadd.f32 0.0, %v546
    %v548 = vpop.f32.mrf.mxu0
    %v549 = vadd.f32 0.0, %v548
    %550 = vmatmul.bf16.gmra.mxu0 %v477
    %v551 = vpop.f32.mrf.mxu0
    %v552 = vadd.f32 0.0, %v551
    %v553 = vpop.f32.mrf.mxu0
    %v554 = vadd.f32 0.0, %v553
    %555 = vmatmul.bf16.gmra.mxu0 %v480
    %v556 = vpop.f32.mrf.mxu0
    %v557 = vadd.f32 0.0, %v556
    %v558 = vpop.f32.mrf.mxu0
    %v559 = vadd.f32 0.0, %v558
    %560 = vmatmul.bf16.gmra.mxu0 %v483
    %v561 = vpop.f32.mrf.mxu0
    %v562 = vadd.f32 0.0, %v561
    %v563 = vpop.f32.mrf.mxu0
    %v564 = vadd.f32 0.0, %v563
    %565 = vmatmul.bf16.gmra.mxu0 %v486
    %v566 = vpop.f32.mrf.mxu0
    %v567 = vadd.f32 0.0, %v566
    %v568 = vpop.f32.mrf.mxu0
    %v569 = vadd.f32 0.0, %v568
    %570 = vmatmul.bf16.gmra.mxu0 %v489
    %v571 = vpop.f32.mrf.mxu0
    %v572 = vadd.f32 0.0, %v571
    %v573 = vpop.f32.mrf.mxu0
    %v574 = vadd.f32 0.0, %v573
    %575 = vmatmul.bf16.gmra.mxu0 %v492
    %v576 = vpop.f32.mrf.mxu0
    %v577 = vadd.f32 0.0, %v576
    %v578 = vpop.f32.mrf.mxu0
    %v579 = vadd.f32 0.0, %v578
    %580 = vmatmul.bf16.gmra.mxu0 %v495
    %v581 = vpop.f32.mrf.mxu0
    %v582 = vadd.f32 0.0, %v581
    %v583 = vpop.f32.mrf.mxu0
    %v584 = vadd.f32 0.0, %v583
    %585 = vdwg.mxu0
    %v588 = vrot.slane %v307, 1
    %v589 = vrot.slane %v307, 2
    %v590 = vrot.slane %v307, 3
    %v591 = vrot.slane %v307, 4
    %v592 = vrot.slane %v307, 5
    %v593 = vrot.slane %v307, 6
    %v594 = vrot.slane %v307, 7
    %v595 = vrot.slane %v310, 1
    %v596 = vrot.slane %v310, 2
    %v597 = vrot.slane %v310, 3
    %v598 = vrot.slane %v310, 4
    %v599 = vrot.slane %v310, 5
    %v600 = vrot.slane %v310, 6
    %v601 = vrot.slane %v310, 7
    %v602 = vperm.slane %v307, 0
    %v603 = vperm.slane %v588, 0
    %v604 = vperm.slane %v589, 0
    %v605 = vperm.slane %v590, 0
    %v606 = vperm.slane %v591, 0
    %v607 = vperm.slane %v592, 0
    %v608 = vperm.slane %v593, 0
    %v609 = vperm.slane %v594, 0
    %v610 = vperm.slane %v310, 0
    %v611 = vperm.slane %v595, 0
    %v612 = vperm.slane %v596, 0
    %v613 = vperm.slane %v597, 0
    %v614 = vperm.slane %v598, 0
    %v615 = vperm.slane %v599, 0
    %v616 = vperm.slane %v600, 0
    %v617 = vperm.slane %v601, 0
    %v634 = vadd.f32 %v602, %v330
    %v635 = vadd.f32 %v602, %v333
    %v636 = vadd.f32 %v603, %v330
    %v637 = vadd.f32 %v603, %v333
    %v638 = vadd.f32 %v604, %v330
    %v639 = vadd.f32 %v604, %v333
    %v640 = vadd.f32 %v605, %v330
    %v641 = vadd.f32 %v605, %v333
    %v642 = vadd.f32 %v606, %v330
    %v643 = vadd.f32 %v606, %v333
    %v644 = vadd.f32 %v607, %v330
    %v645 = vadd.f32 %v607, %v333
    %v646 = vadd.f32 %v608, %v330
    %v647 = vadd.f32 %v608, %v333
    %v648 = vadd.f32 %v609, %v330
    %v649 = vadd.f32 %v609, %v333
    %v650 = vadd.f32 %v610, %v330
    %v651 = vadd.f32 %v610, %v333
    %v652 = vadd.f32 %v611, %v330
    %v653 = vadd.f32 %v611, %v333
    %v654 = vadd.f32 %v612, %v330
    %v655 = vadd.f32 %v612, %v333
    %v656 = vadd.f32 %v613, %v330
    %v657 = vadd.f32 %v613, %v333
    %v658 = vadd.f32 %v614, %v330
    %v659 = vadd.f32 %v614, %v333
    %v660 = vadd.f32 %v615, %v330
    %v661 = vadd.f32 %v615, %v333
    %v662 = vadd.f32 %v616, %v330
    %v663 = vadd.f32 %v616, %v333
    %v664 = vadd.f32 %v617, %v330
    %v665 = vadd.f32 %v617, %v333
    %v666 = vadd.f32 %v634, %v507
    %v667 = vadd.f32 %v635, %v509
    %v668 = vadd.f32 %v636, %v512
    %v669 = vadd.f32 %v637, %v514
    %v670 = vadd.f32 %v638, %v517
    %v671 = vadd.f32 %v639, %v519
    %v672 = vadd.f32 %v640, %v522
    %v673 = vadd.f32 %v641, %v524
    %v674 = vadd.f32 %v642, %v527
    %v675 = vadd.f32 %v643, %v529
    %v676 = vadd.f32 %v644, %v532
    %v677 = vadd.f32 %v645, %v534
    %v678 = vadd.f32 %v646, %v537
    %v679 = vadd.f32 %v647, %v539
    %v680 = vadd.f32 %v648, %v542
    %v681 = vadd.f32 %v649, %v544
    %v682 = vadd.f32 %v650, %v547
    %v683 = vadd.f32 %v651, %v549
    %v684 = vadd.f32 %v652, %v552
    %v685 = vadd.f32 %v653, %v554
    %v686 = vadd.f32 %v654, %v557
    %v687 = vadd.f32 %v655, %v559
    %v688 = vadd.f32 %v656, %v562
    %v689 = vadd.f32 %v657, %v564
    %v690 = vadd.f32 %v658, %v567
    %v691 = vadd.f32 %v659, %v569
    %v692 = vadd.f32 %v660, %v572
    %v693 = vadd.f32 %v661, %v574
    %v694 = vadd.f32 %v662, %v577
    %v695 = vadd.f32 %v663, %v579
    %v696 = vadd.f32 %v664, %v582
    %v697 = vadd.f32 %v665, %v584
    %v698 = vmul.f32 %v666, 0.01
    %v699 = vmul.f32 %v667, 0.01
    %v700 = vmul.f32 %v668, 0.01
    %v701 = vmul.f32 %v669, 0.01
    %v702 = vmul.f32 %v670, 0.01
    %v703 = vmul.f32 %v671, 0.01
    %v704 = vmul.f32 %v672, 0.01
    %v705 = vmul.f32 %v673, 0.01
    %v706 = vmul.f32 %v674, 0.01
    %v707 = vmul.f32 %v675, 0.01
    %v708 = vmul.f32 %v676, 0.01
    %v709 = vmul.f32 %v677, 0.01
    %v710 = vmul.f32 %v678, 0.01
    %v711 = vmul.f32 %v679, 0.01
    %v712 = vmul.f32 %v680, 0.01
    %v713 = vmul.f32 %v681, 0.01
    %v714 = vmul.f32 %v682, 0.01
    %v715 = vmul.f32 %v683, 0.01
    %v716 = vmul.f32 %v684, 0.01
    %v717 = vmul.f32 %v685, 0.01
    %v718 = vmul.f32 %v686, 0.01
    %v719 = vmul.f32 %v687, 0.01
    %v720 = vmul.f32 %v688, 0.01
    %v721 = vmul.f32 %v689, 0.01
    %v722 = vmul.f32 %v690, 0.01
    %v723 = vmul.f32 %v691, 0.01
    %v724 = vmul.f32 %v692, 0.01
    %v725 = vmul.f32 %v693, 0.01
    %v726 = vmul.f32 %v694, 0.01
    %v727 = vmul.f32 %v695, 0.01
    %v728 = vmul.f32 %v696, 0.01
    %v729 = vmul.f32 %v697, 0.01
    %v730 = vmax.f32 %v666, %v698
    %v731 = vmax.f32 %v667, %v699
    %v732 = vmax.f32 %v668, %v700
    %v733 = vmax.f32 %v669, %v701
    %v734 = vmax.f32 %v670, %v702
    %v735 = vmax.f32 %v671, %v703
    %v736 = vmax.f32 %v672, %v704
    %v737 = vmax.f32 %v673, %v705
    %v738 = vmax.f32 %v674, %v706
    %v739 = vmax.f32 %v675, %v707
    %v740 = vmax.f32 %v676, %v708
    %v741 = vmax.f32 %v677, %v709
    %v742 = vmax.f32 %v678, %v710
    %v743 = vmax.f32 %v679, %v711
    %v744 = vmax.f32 %v680, %v712
    %v745 = vmax.f32 %v681, %v713
    %v746 = vmax.f32 %v682, %v714
    %v747 = vmax.f32 %v683, %v715
    %v748 = vmax.f32 %v684, %v716
    %v749 = vmax.f32 %v685, %v717
    %v750 = vmax.f32 %v686, %v718
    %v751 = vmax.f32 %v687, %v719
    %v752 = vmax.f32 %v688, %v720
    %v753 = vmax.f32 %v689, %v721
    %v754 = vmax.f32 %v690, %v722
    %v755 = vmax.f32 %v691, %v723
    %v756 = vmax.f32 %v692, %v724
    %v757 = vmax.f32 %v693, %v725
    %v758 = vmax.f32 %v694, %v726
    %v759 = vmax.f32 %v695, %v727
    %v760 = vmax.f32 %v696, %v728
    %v761 = vmax.f32 %v697, %v729
    %v762 = vpack.c.bf16 %v731, %v730
    %v763 = vpack.c.bf16 %v733, %v732
    %v764 = vpack.c.bf16 %v735, %v734
    %v765 = vpack.c.bf16 %v737, %v736
    %v766 = vpack.c.bf16 %v739, %v738
    %v767 = vpack.c.bf16 %v741, %v740
    %v768 = vpack.c.bf16 %v743, %v742
    %v769 = vpack.c.bf16 %v745, %v744
    %v770 = vpack.c.bf16 %v747, %v746
    %v771 = vpack.c.bf16 %v749, %v748
    %v772 = vpack.c.bf16 %v751, %v750
    %v773 = vpack.c.bf16 %v753, %v752
    %v774 = vpack.c.bf16 %v755, %v754
    %v775 = vpack.c.bf16 %v757, %v756
    %v776 = vpack.c.bf16 %v759, %v758
    %v777 = vpack.c.bf16 %v761, %v760
    %v794 = vunpack.c.l.b16 %v265
    %v795 = vunpack.c.l.b16 %v266
    %v796 = vunpack.c.l.b16 %v267
    %v797 = vunpack.c.l.b16 %v268
    %v798 = vunpack.c.l.b16 %v269
    %v799 = vunpack.c.l.b16 %v270
    %v800 = vunpack.c.l.b16 %v271
    %v801 = vunpack.c.l.b16 %v272
    %v802 = vunpack.c.l.b16 %v273
    %v803 = vunpack.c.l.b16 %v274
    %v804 = vunpack.c.l.b16 %v275
    %v805 = vunpack.c.l.b16 %v276
    %v806 = vunpack.c.l.b16 %v277
    %v807 = vunpack.c.l.b16 %v278
    %v808 = vunpack.c.l.b16 %v279
    %v809 = vunpack.c.l.b16 %v280
    %v810 = vpack.c.b16 %v795, %v794
    %v811 = vpack.c.b16 %v797, %v796
    %v812 = vpack.c.b16 %v799, %v798
    %v813 = vpack.c.b16 %v801, %v800
    %v814 = vpack.c.b16 %v803, %v802
    %v815 = vpack.c.b16 %v805, %v804
    %v816 = vpack.c.b16 %v807, %v806
    %v817 = vpack.c.b16 %v809, %v808
    %826 = vmatpush.bf16.msra.mxu0 %v817
    %827 = vmatpush.bf16.msra.mxu0 %v816
    %828 = vmatpush.bf16.msra.mxu0 %v815
    %829 = vmatpush.bf16.msra.mxu0 %v814
    %830 = vmatpush.bf16.msra.mxu0 %v813
    %831 = vmatpush.bf16.msra.mxu0 %v812
    %832 = vmatpush.bf16.msra.mxu0 %v811
    %833 = vmatpush.bf16.msra.mxu0 %v810
    %834 = vmatmul.bf16.gmra.mxu0 %v762
    %v835 = vpop.f32.mrf.mxu0
    %v836 = vadd.f32 0.0, %v835
    %v837 = vpop.f32.mrf.mxu0
    %v838 = vadd.f32 0.0, %v837
    %839 = vmatmul.bf16.gmra.mxu0 %v763
    %v840 = vpop.f32.mrf.mxu0
    %v841 = vadd.f32 0.0, %v840
    %v842 = vpop.f32.mrf.mxu0
    %v843 = vadd.f32 0.0, %v842
    %844 = vmatmul.bf16.gmra.mxu0 %v764
    %v845 = vpop.f32.mrf.mxu0
    %v846 = vadd.f32 0.0, %v845
    %v847 = vpop.f32.mrf.mxu0
    %v848 = vadd.f32 0.0, %v847
    %849 = vmatmul.bf16.gmra.mxu0 %v765
    %v850 = vpop.f32.mrf.mxu0
    %v851 = vadd.f32 0.0, %v850
    %v852 = vpop.f32.mrf.mxu0
    %v853 = vadd.f32 0.0, %v852
    %854 = vmatmul.bf16.gmra.mxu0 %v766
    %v855 = vpop.f32.mrf.mxu0
    %v856 = vadd.f32 0.0, %v855
    %v857 = vpop.f32.mrf.mxu0
    %v858 = vadd.f32 0.0, %v857
    %859 = vmatmul.bf16.gmra.mxu0 %v767
    %v860 = vpop.f32.mrf.mxu0
    %v861 = vadd.f32 0.0, %v860
    %v862 = vpop.f32.mrf.mxu0
    %v863 = vadd.f32 0.0, %v862
    %864 = vmatmul.bf16.gmra.mxu0 %v768
    %v865 = vpop.f32.mrf.mxu0
    %v866 = vadd.f32 0.0, %v865
    %v867 = vpop.f32.mrf.mxu0
    %v868 = vadd.f32 0.0, %v867
    %869 = vmatmul.bf16.gmra.mxu0 %v769
    %v870 = vpop.f32.mrf.mxu0
    %v871 = vadd.f32 0.0, %v870
    %v872 = vpop.f32.mrf.mxu0
    %v873 = vadd.f32 0.0, %v872
    %874 = vmatmul.bf16.gmra.mxu0 %v770
    %v875 = vpop.f32.mrf.mxu0
    %v876 = vadd.f32 0.0, %v875
    %v877 = vpop.f32.mrf.mxu0
    %v878 = vadd.f32 0.0, %v877
    %879 = vmatmul.bf16.gmra.mxu0 %v771
    %v880 = vpop.f32.mrf.mxu0
    %v881 = vadd.f32 0.0, %v880
    %v882 = vpop.f32.mrf.mxu0
    %v883 = vadd.f32 0.0, %v882
    %884 = vmatmul.bf16.gmra.mxu0 %v772
    %v885 = vpop.f32.mrf.mxu0
    %v886 = vadd.f32 0.0, %v885
    %v887 = vpop.f32.mrf.mxu0
    %v888 = vadd.f32 0.0, %v887
    %889 = vmatmul.bf16.gmra.mxu0 %v773
    %v890 = vpop.f32.mrf.mxu0
    %v891 = vadd.f32 0.0, %v890
    %v892 = vpop.f32.mrf.mxu0
    %v893 = vadd.f32 0.0, %v892
    %894 = vmatmul.bf16.gmra.mxu0 %v774
    %v895 = vpop.f32.mrf.mxu0
    %v896 = vadd.f32 0.0, %v895
    %v897 = vpop.f32.mrf.mxu0
    %v898 = vadd.f32 0.0, %v897
    %899 = vmatmul.bf16.gmra.mxu0 %v775
    %v900 = vpop.f32.mrf.mxu0
    %v901 = vadd.f32 0.0, %v900
    %v902 = vpop.f32.mrf.mxu0
    %v903 = vadd.f32 0.0, %v902
    %904 = vmatmul.bf16.gmra.mxu0 %v776
    %v905 = vpop.f32.mrf.mxu0
    %v906 = vadd.f32 0.0, %v905
    %v907 = vpop.f32.mrf.mxu0
    %v908 = vadd.f32 0.0, %v907
    %909 = vmatmul.bf16.gmra.mxu0 %v777
    %v910 = vpop.f32.mrf.mxu0
    %v911 = vadd.f32 0.0, %v910
    %v912 = vpop.f32.mrf.mxu0
    %v913 = vadd.f32 0.0, %v912
    %914 = vdwg.mxu0
    %vm915 = vcmp.gt.f32.partialorder %v190, 0.0
    %vm916 = vcmp.gt.f32.partialorder %v191, 0.0
    %vm917 = vcmp.gt.f32.partialorder %v192, 0.0
    %vm918 = vcmp.gt.f32.partialorder %v193, 0.0
    %vm919 = vcmp.gt.f32.partialorder %v194, 0.0
    %vm920 = vcmp.gt.f32.partialorder %v195, 0.0
    %vm921 = vcmp.gt.f32.partialorder %v196, 0.0
    %vm922 = vcmp.gt.f32.partialorder %v197, 0.0
    %vm923 = vcmp.gt.f32.partialorder %v198, 0.0
    %vm924 = vcmp.gt.f32.partialorder %v199, 0.0
    %vm925 = vcmp.gt.f32.partialorder %v200, 0.0
    %vm926 = vcmp.gt.f32.partialorder %v201, 0.0
    %vm927 = vcmp.gt.f32.partialorder %v202, 0.0
    %vm928 = vcmp.gt.f32.partialorder %v203, 0.0
    %vm929 = vcmp.gt.f32.partialorder %v204, 0.0
    %vm930 = vcmp.gt.f32.partialorder %v205, 0.0
    %vm931 = vcmp.gt.f32.partialorder %v206, 0.0
    %vm932 = vcmp.gt.f32.partialorder %v207, 0.0
    %vm933 = vcmp.gt.f32.partialorder %v208, 0.0
    %vm934 = vcmp.gt.f32.partialorder %v209, 0.0
    %vm935 = vcmp.gt.f32.partialorder %v210, 0.0
    %vm936 = vcmp.gt.f32.partialorder %v211, 0.0
    %vm937 = vcmp.gt.f32.partialorder %v212, 0.0
    %vm938 = vcmp.gt.f32.partialorder %v213, 0.0
    %vm939 = vcmp.gt.f32.partialorder %v214, 0.0
    %vm940 = vcmp.gt.f32.partialorder %v215, 0.0
    %vm941 = vcmp.gt.f32.partialorder %v216, 0.0
    %vm942 = vcmp.gt.f32.partialorder %v217, 0.0
    %vm943 = vcmp.gt.f32.partialorder %v218, 0.0
    %vm944 = vcmp.gt.f32.partialorder %v219, 0.0
    %vm945 = vcmp.gt.f32.partialorder %v220, 0.0
    %vm946 = vcmp.gt.f32.partialorder %v221, 0.0
    %v947 = vsel %vm915, 1, 0
    %v948 = vsel %vm916, 1, 0
    %v949 = vsel %vm917, 1, 0
    %v950 = vsel %vm918, 1, 0
    %v951 = vsel %vm919, 1, 0
    %v952 = vsel %vm920, 1, 0
    %v953 = vsel %vm921, 1, 0
    %v954 = vsel %vm922, 1, 0
    %v955 = vsel %vm923, 1, 0
    %v956 = vsel %vm924, 1, 0
    %v957 = vsel %vm925, 1, 0
    %v958 = vsel %vm926, 1, 0
    %v959 = vsel %vm927, 1, 0
    %v960 = vsel %vm928, 1, 0
    %v961 = vsel %vm929, 1, 0
    %v962 = vsel %vm930, 1, 0
    %v963 = vsel %vm931, 1, 0
    %v964 = vsel %vm932, 1, 0
    %v965 = vsel %vm933, 1, 0
    %v966 = vsel %vm934, 1, 0
    %v967 = vsel %vm935, 1, 0
    %v968 = vsel %vm936, 1, 0
    %v969 = vsel %vm937, 1, 0
    %v970 = vsel %vm938, 1, 0
    %v971 = vsel %vm939, 1, 0
    %v972 = vsel %vm940, 1, 0
    %v973 = vsel %vm941, 1, 0
    %v974 = vsel %vm942, 1, 0
    %v975 = vsel %vm943, 1, 0
    %v976 = vsel %vm944, 1, 0
    %v977 = vsel %vm945, 1, 0
    %v978 = vsel %vm946, 1, 0
    %979 = vset.pattern.permute.xlu0 0
    %980 = vperm.xlu0 %979, %v947
    %v981 = vpop.permute.xlu0 %980
    %982 = vset.pattern.permute.xlu0 0
    %983 = vperm.xlu0 %982, %v948
    %v984 = vpop.permute.xlu0 %983
    %985 = vset.pattern.permute.xlu0 0
    %986 = vperm.xlu0 %985, %v949
    %v987 = vpop.permute.xlu0 %986
    %988 = vset.pattern.permute.xlu0 0
    %989 = vperm.xlu0 %988, %v950
    %v990 = vpop.permute.xlu0 %989
    %991 = vset.pattern.permute.xlu0 0
    %992 = vperm.xlu0 %991, %v951
    %v993 = vpop.permute.xlu0 %992
    %994 = vset.pattern.permute.xlu0 0
    %995 = vperm.xlu0 %994, %v952
    %v996 = vpop.permute.xlu0 %995
    %997 = vset.pattern.permute.xlu0 0
    %998 = vperm.xlu0 %997, %v953
    %v999 = vpop.permute.xlu0 %998
    %1000 = vset.pattern.permute.xlu0 0
    %1001 = vperm.xlu0 %1000, %v954
    %v1002 = vpop.permute.xlu0 %1001
    %1003 = vset.pattern.permute.xlu0 0
    %1004 = vperm.xlu0 %1003, %v955
    %v1005 = vpop.permute.xlu0 %1004
    %1006 = vset.pattern.permute.xlu0 0
    %1007 = vperm.xlu0 %1006, %v956
    %v1008 = vpop.permute.xlu0 %1007
    %1009 = vset.pattern.permute.xlu0 0
    %1010 = vperm.xlu0 %1009, %v957
    %v1011 = vpop.permute.xlu0 %1010
    %1012 = vset.pattern.permute.xlu0 0
    %1013 = vperm.xlu0 %1012, %v958
    %v1014 = vpop.permute.xlu0 %1013
    %1015 = vset.pattern.permute.xlu0 0
    %1016 = vperm.xlu0 %1015, %v959
    %v1017 = vpop.permute.xlu0 %1016
    %1018 = vset.pattern.permute.xlu0 0
    %1019 = vperm.xlu0 %1018, %v960
    %v1020 = vpop.permute.xlu0 %1019
    %1021 = vset.pattern.permute.xlu0 0
    %1022 = vperm.xlu0 %1021, %v961
    %v1023 = vpop.permute.xlu0 %1022
    %1024 = vset.pattern.permute.xlu0 0
    %1025 = vperm.xlu0 %1024, %v962
    %v1026 = vpop.permute.xlu0 %1025
    %1027 = vset.pattern.permute.xlu0 0
    %1028 = vperm.xlu0 %1027, %v963
    %v1029 = vpop.permute.xlu0 %1028
    %1030 = vset.pattern.permute.xlu0 0
    %1031 = vperm.xlu0 %1030, %v964
    %v1032 = vpop.permute.xlu0 %1031
    %1033 = vset.pattern.permute.xlu0 0
    %1034 = vperm.xlu0 %1033, %v965
    %v1035 = vpop.permute.xlu0 %1034
    %1036 = vset.pattern.permute.xlu0 0
    %1037 = vperm.xlu0 %1036, %v966
    %v1038 = vpop.permute.xlu0 %1037
    %1039 = vset.pattern.permute.xlu0 0
    %1040 = vperm.xlu0 %1039, %v967
    %v1041 = vpop.permute.xlu0 %1040
    %1042 = vset.pattern.permute.xlu0 0
    %1043 = vperm.xlu0 %1042, %v968
    %v1044 = vpop.permute.xlu0 %1043
    %1045 = vset.pattern.permute.xlu0 0
    %1046 = vperm.xlu0 %1045, %v969
    %v1047 = vpop.permute.xlu0 %1046
    %1048 = vset.pattern.permute.xlu0 0
    %1049 = vperm.xlu0 %1048, %v970
    %v1050 = vpop.permute.xlu0 %1049
    %1051 = vset.pattern.permute.xlu0 0
    %1052 = vperm.xlu0 %1051, %v971
    %v1053 = vpop.permute.xlu0 %1052
    %1054 = vset.pattern.permute.xlu0 0
    %1055 = vperm.xlu0 %1054, %v972
    %v1056 = vpop.permute.xlu0 %1055
    %1057 = vset.pattern.permute.xlu0 0
    %1058 = vperm.xlu0 %1057, %v973
    %v1059 = vpop.permute.xlu0 %1058
    %1060 = vset.pattern.permute.xlu0 0
    %1061 = vperm.xlu0 %1060, %v974
    %v1062 = vpop.permute.xlu0 %1061
    %1063 = vset.pattern.permute.xlu0 0
    %1064 = vperm.xlu0 %1063, %v975
    %v1065 = vpop.permute.xlu0 %1064
    %1066 = vset.pattern.permute.xlu0 0
    %1067 = vperm.xlu0 %1066, %v976
    %v1068 = vpop.permute.xlu0 %1067
    %1069 = vset.pattern.permute.xlu0 0
    %1070 = vperm.xlu0 %1069, %v977
    %v1071 = vpop.permute.xlu0 %1070
    %1072 = vset.pattern.permute.xlu0 0
    %1073 = vperm.xlu0 %1072, %v978
    %v1074 = vpop.permute.xlu0 %1073
    %vm1075 = vcmp.eq.s32.totalorder %v981, 1
    %vm1076 = vcmp.eq.s32.totalorder %v984, 1
    %vm1077 = vcmp.eq.s32.totalorder %v987, 1
    %vm1078 = vcmp.eq.s32.totalorder %v990, 1
    %vm1079 = vcmp.eq.s32.totalorder %v993, 1
    %vm1080 = vcmp.eq.s32.totalorder %v996, 1
    %vm1081 = vcmp.eq.s32.totalorder %v999, 1
    %vm1082 = vcmp.eq.s32.totalorder %v1002, 1
    %vm1083 = vcmp.eq.s32.totalorder %v1005, 1
    %vm1084 = vcmp.eq.s32.totalorder %v1008, 1
    %vm1085 = vcmp.eq.s32.totalorder %v1011, 1
    %vm1086 = vcmp.eq.s32.totalorder %v1014, 1
    %vm1087 = vcmp.eq.s32.totalorder %v1017, 1
    %vm1088 = vcmp.eq.s32.totalorder %v1020, 1
    %vm1089 = vcmp.eq.s32.totalorder %v1023, 1
    %vm1090 = vcmp.eq.s32.totalorder %v1026, 1
    %vm1091 = vcmp.eq.s32.totalorder %v1029, 1
    %vm1092 = vcmp.eq.s32.totalorder %v1032, 1
    %vm1093 = vcmp.eq.s32.totalorder %v1035, 1
    %vm1094 = vcmp.eq.s32.totalorder %v1038, 1
    %vm1095 = vcmp.eq.s32.totalorder %v1041, 1
    %vm1096 = vcmp.eq.s32.totalorder %v1044, 1
    %vm1097 = vcmp.eq.s32.totalorder %v1047, 1
    %vm1098 = vcmp.eq.s32.totalorder %v1050, 1
    %vm1099 = vcmp.eq.s32.totalorder %v1053, 1
    %vm1100 = vcmp.eq.s32.totalorder %v1056, 1
    %vm1101 = vcmp.eq.s32.totalorder %v1059, 1
    %vm1102 = vcmp.eq.s32.totalorder %v1062, 1
    %vm1103 = vcmp.eq.s32.totalorder %v1065, 1
    %vm1104 = vcmp.eq.s32.totalorder %v1068, 1
    %vm1105 = vcmp.eq.s32.totalorder %v1071, 1
    %vm1106 = vcmp.eq.s32.totalorder %v1074, 1
    %v1107 = vsel %vm1075, %v836, -1e+30
    %v1108 = vsel %vm1076, %v838, -1e+30
    %v1109 = vsel %vm1077, %v841, -1e+30
    %v1110 = vsel %vm1078, %v843, -1e+30
    %v1111 = vsel %vm1079, %v846, -1e+30
    %v1112 = vsel %vm1080, %v848, -1e+30
    %v1113 = vsel %vm1081, %v851, -1e+30
    %v1114 = vsel %vm1082, %v853, -1e+30
    %v1115 = vsel %vm1083, %v856, -1e+30
    %v1116 = vsel %vm1084, %v858, -1e+30
    %v1117 = vsel %vm1085, %v861, -1e+30
    %v1118 = vsel %vm1086, %v863, -1e+30
    %v1119 = vsel %vm1087, %v866, -1e+30
    %v1120 = vsel %vm1088, %v868, -1e+30
    %v1121 = vsel %vm1089, %v871, -1e+30
    %v1122 = vsel %vm1090, %v873, -1e+30
    %v1123 = vsel %vm1091, %v876, -1e+30
    %v1124 = vsel %vm1092, %v878, -1e+30
    %v1125 = vsel %vm1093, %v881, -1e+30
    %v1126 = vsel %vm1094, %v883, -1e+30
    %v1127 = vsel %vm1095, %v886, -1e+30
    %v1128 = vsel %vm1096, %v888, -1e+30
    %v1129 = vsel %vm1097, %v891, -1e+30
    %v1130 = vsel %vm1098, %v893, -1e+30
    %v1131 = vsel %vm1099, %v896, -1e+30
    %v1132 = vsel %vm1100, %v898, -1e+30
    %v1133 = vsel %vm1101, %v901, -1e+30
    %v1134 = vsel %vm1102, %v903, -1e+30
    %v1135 = vsel %vm1103, %v906, -1e+30
    %v1136 = vsel %vm1104, %v908, -1e+30
    %v1137 = vsel %vm1105, %v911, -1e+30
    %v1138 = vsel %vm1106, %v913, -1e+30
    %vm1139 = vcmask 31744
    %v1140 = vsel %vm1139, %v1107, -inf
    %v1141 = vsel %vm1139, %v1109, -inf
    %v1142 = vsel %vm1139, %v1111, -inf
    %v1143 = vmax.f32 %v1140, %v1142
    %v1144 = vsel %vm1139, %v1113, -inf
    %v1145 = vmax.f32 %v1141, %v1144
    %v1146 = vsel %vm1139, %v1115, -inf
    %v1147 = vmax.f32 %v1143, %v1146
    %v1148 = vsel %vm1139, %v1117, -inf
    %v1149 = vmax.f32 %v1145, %v1148
    %v1150 = vsel %vm1139, %v1119, -inf
    %v1151 = vmax.f32 %v1147, %v1150
    %v1152 = vsel %vm1139, %v1121, -inf
    %v1153 = vmax.f32 %v1149, %v1152
    %v1154 = vsel %vm1139, %v1123, -inf
    %v1155 = vmax.f32 %v1151, %v1154
    %v1156 = vsel %vm1139, %v1125, -inf
    %v1157 = vmax.f32 %v1153, %v1156
    %v1158 = vsel %vm1139, %v1127, -inf
    %v1159 = vmax.f32 %v1155, %v1158
    %v1160 = vsel %vm1139, %v1129, -inf
    %v1161 = vmax.f32 %v1157, %v1160
    %v1162 = vsel %vm1139, %v1131, -inf
    %v1163 = vmax.f32 %v1159, %v1162
    %v1164 = vsel %vm1139, %v1133, -inf
    %v1165 = vmax.f32 %v1161, %v1164
    %v1166 = vsel %vm1139, %v1135, -inf
    %v1167 = vmax.f32 %v1163, %v1166
    %v1168 = vsel %vm1139, %v1137, -inf
    %v1169 = vmax.f32 %v1165, %v1168
    %v1170 = vmax.f32 %v1167, %v1169
    %v1171 = vsel %vm1139, %v1108, -inf
    %v1172 = vsel %vm1139, %v1110, -inf
    %v1173 = vsel %vm1139, %v1112, -inf
    %v1174 = vmax.f32 %v1171, %v1173
    %v1175 = vsel %vm1139, %v1114, -inf
    %v1176 = vmax.f32 %v1172, %v1175
    %v1177 = vsel %vm1139, %v1116, -inf
    %v1178 = vmax.f32 %v1174, %v1177
    %v1179 = vsel %vm1139, %v1118, -inf
    %v1180 = vmax.f32 %v1176, %v1179
    %v1181 = vsel %vm1139, %v1120, -inf
    %v1182 = vmax.f32 %v1178, %v1181
    %v1183 = vsel %vm1139, %v1122, -inf
    %v1184 = vmax.f32 %v1180, %v1183
    %v1185 = vsel %vm1139, %v1124, -inf
    %v1186 = vmax.f32 %v1182, %v1185
    %v1187 = vsel %vm1139, %v1126, -inf
    %v1188 = vmax.f32 %v1184, %v1187
    %v1189 = vsel %vm1139, %v1128, -inf
    %v1190 = vmax.f32 %v1186, %v1189
    %v1191 = vsel %vm1139, %v1130, -inf
    %v1192 = vmax.f32 %v1188, %v1191
    %v1193 = vsel %vm1139, %v1132, -inf
    %v1194 = vmax.f32 %v1190, %v1193
    %v1195 = vsel %vm1139, %v1134, -inf
    %v1196 = vmax.f32 %v1192, %v1195
    %v1197 = vsel %vm1139, %v1136, -inf
    %v1198 = vmax.f32 %v1194, %v1197
    %v1199 = vsel %vm1139, %v1138, -inf
    %v1200 = vmax.f32 %v1196, %v1199
    %v1201 = vmax.f32 %v1198, %v1200
    %v1202 = vsub.f32 %v1107, %v1170
    %v1203 = vsub.f32 %v1108, %v1201
    %v1204 = vsub.f32 %v1109, %v1170
    %v1205 = vsub.f32 %v1110, %v1201
    %v1206 = vsub.f32 %v1111, %v1170
    %v1207 = vsub.f32 %v1112, %v1201
    %v1208 = vsub.f32 %v1113, %v1170
    %v1209 = vsub.f32 %v1114, %v1201
    %v1210 = vsub.f32 %v1115, %v1170
    %v1211 = vsub.f32 %v1116, %v1201
    %v1212 = vsub.f32 %v1117, %v1170
    %v1213 = vsub.f32 %v1118, %v1201
    %v1214 = vsub.f32 %v1119, %v1170
    %v1215 = vsub.f32 %v1120, %v1201
    %v1216 = vsub.f32 %v1121, %v1170
    %v1217 = vsub.f32 %v1122, %v1201
    %v1218 = vsub.f32 %v1123, %v1170
    %v1219 = vsub.f32 %v1124, %v1201
    %v1220 = vsub.f32 %v1125, %v1170
    %v1221 = vsub.f32 %v1126, %v1201
    %v1222 = vsub.f32 %v1127, %v1170
    %v1223 = vsub.f32 %v1128, %v1201
    %v1224 = vsub.f32 %v1129, %v1170
    %v1225 = vsub.f32 %v1130, %v1201
    %v1226 = vsub.f32 %v1131, %v1170
    %v1227 = vsub.f32 %v1132, %v1201
    %v1228 = vsub.f32 %v1133, %v1170
    %v1229 = vsub.f32 %v1134, %v1201
    %v1230 = vsub.f32 %v1135, %v1170
    %v1231 = vsub.f32 %v1136, %v1201
    %v1232 = vsub.f32 %v1137, %v1170
    %v1233 = vsub.f32 %v1138, %v1201
    %v1234 = vmul.f32 %v1202, 1.442695
    %v1235 = vpow.pop %v1234
    %v1236 = vmul.f32 %v1203, 1.442695
    %v1237 = vpow.pop %v1236
    %v1238 = vmul.f32 %v1204, 1.442695
    %v1239 = vpow.pop %v1238
    %v1240 = vmul.f32 %v1205, 1.442695
    %v1241 = vpow.pop %v1240
    %v1242 = vmul.f32 %v1206, 1.442695
    %v1243 = vpow.pop %v1242
    %v1244 = vmul.f32 %v1207, 1.442695
    %v1245 = vpow.pop %v1244
    %v1246 = vmul.f32 %v1208, 1.442695
    %v1247 = vpow.pop %v1246
    %v1248 = vmul.f32 %v1209, 1.442695
    %v1249 = vpow.pop %v1248
    %v1250 = vmul.f32 %v1210, 1.442695
    %v1251 = vpow.pop %v1250
    %v1252 = vmul.f32 %v1211, 1.442695
    %v1253 = vpow.pop %v1252
    %v1254 = vmul.f32 %v1212, 1.442695
    %v1255 = vpow.pop %v1254
    %v1256 = vmul.f32 %v1213, 1.442695
    %v1257 = vpow.pop %v1256
    %v1258 = vmul.f32 %v1214, 1.442695
    %v1259 = vpow.pop %v1258
    %v1260 = vmul.f32 %v1215, 1.442695
    %v1261 = vpow.pop %v1260
    %v1262 = vmul.f32 %v1216, 1.442695
    %v1263 = vpow.pop %v1262
    %v1264 = vmul.f32 %v1217, 1.442695
    %v1265 = vpow.pop %v1264
    %v1266 = vmul.f32 %v1218, 1.442695
    %v1267 = vpow.pop %v1266
    %v1268 = vmul.f32 %v1219, 1.442695
    %v1269 = vpow.pop %v1268
    %v1270 = vmul.f32 %v1220, 1.442695
    %v1271 = vpow.pop %v1270
    %v1272 = vmul.f32 %v1221, 1.442695
    %v1273 = vpow.pop %v1272
    %v1274 = vmul.f32 %v1222, 1.442695
    %v1275 = vpow.pop %v1274
    %v1276 = vmul.f32 %v1223, 1.442695
    %v1277 = vpow.pop %v1276
    %v1278 = vmul.f32 %v1224, 1.442695
    %v1279 = vpow.pop %v1278
    %v1280 = vmul.f32 %v1225, 1.442695
    %v1281 = vpow.pop %v1280
    %v1282 = vmul.f32 %v1226, 1.442695
    %v1283 = vpow.pop %v1282
    %v1284 = vmul.f32 %v1227, 1.442695
    %v1285 = vpow.pop %v1284
    %v1286 = vmul.f32 %v1228, 1.442695
    %v1287 = vpow.pop %v1286
    %v1288 = vmul.f32 %v1229, 1.442695
    %v1289 = vpow.pop %v1288
    %v1290 = vmul.f32 %v1230, 1.442695
    %v1291 = vpow.pop %v1290
    %v1292 = vmul.f32 %v1231, 1.442695
    %v1293 = vpow.pop %v1292
    %v1294 = vmul.f32 %v1232, 1.442695
    %v1295 = vpow.pop %v1294
    %v1296 = vmul.f32 %v1233, 1.442695
    %v1297 = vpow.pop %v1296
    %1299 = vset.pattern.permute.xlu0 0
    %1300 = vperm.xlu0 %1299, %v190
    %v1301 = vpop.permute.xlu0 %1300
    %1304 = vset.pattern.permute.xlu0 0
    %1305 = vperm.xlu0 %1304, %v191
    %v1306 = vpop.permute.xlu0 %1305
    %1309 = vset.pattern.permute.xlu0 0
    %1310 = vperm.xlu0 %1309, %v192
    %v1311 = vpop.permute.xlu0 %1310
    %1314 = vset.pattern.permute.xlu0 0
    %1315 = vperm.xlu0 %1314, %v193
    %v1316 = vpop.permute.xlu0 %1315
    %1319 = vset.pattern.permute.xlu0 0
    %1320 = vperm.xlu0 %1319, %v194
    %v1321 = vpop.permute.xlu0 %1320
    %1324 = vset.pattern.permute.xlu0 0
    %1325 = vperm.xlu0 %1324, %v195
    %v1326 = vpop.permute.xlu0 %1325
    %1329 = vset.pattern.permute.xlu0 0
    %1330 = vperm.xlu0 %1329, %v196
    %v1331 = vpop.permute.xlu0 %1330
    %1334 = vset.pattern.permute.xlu0 0
    %1335 = vperm.xlu0 %1334, %v197
    %v1336 = vpop.permute.xlu0 %1335
    %1339 = vset.pattern.permute.xlu0 0
    %1340 = vperm.xlu0 %1339, %v198
    %v1341 = vpop.permute.xlu0 %1340
    %1344 = vset.pattern.permute.xlu0 0
    %1345 = vperm.xlu0 %1344, %v199
    %v1346 = vpop.permute.xlu0 %1345
    %1349 = vset.pattern.permute.xlu0 0
    %1350 = vperm.xlu0 %1349, %v200
    %v1351 = vpop.permute.xlu0 %1350
    %1354 = vset.pattern.permute.xlu0 0
    %1355 = vperm.xlu0 %1354, %v201
    %v1356 = vpop.permute.xlu0 %1355
    %1359 = vset.pattern.permute.xlu0 0
    %1360 = vperm.xlu0 %1359, %v202
    %v1361 = vpop.permute.xlu0 %1360
    %1364 = vset.pattern.permute.xlu0 0
    %1365 = vperm.xlu0 %1364, %v203
    %v1366 = vpop.permute.xlu0 %1365
    %1369 = vset.pattern.permute.xlu0 0
    %1370 = vperm.xlu0 %1369, %v204
    %v1371 = vpop.permute.xlu0 %1370
    %1374 = vset.pattern.permute.xlu0 0
    %1375 = vperm.xlu0 %1374, %v205
    %v1376 = vpop.permute.xlu0 %1375
    %1379 = vset.pattern.permute.xlu0 0
    %1380 = vperm.xlu0 %1379, %v206
    %v1381 = vpop.permute.xlu0 %1380
    %1384 = vset.pattern.permute.xlu0 0
    %1385 = vperm.xlu0 %1384, %v207
    %v1386 = vpop.permute.xlu0 %1385
    %1389 = vset.pattern.permute.xlu0 0
    %1390 = vperm.xlu0 %1389, %v208
    %v1391 = vpop.permute.xlu0 %1390
    %1394 = vset.pattern.permute.xlu0 0
    %1395 = vperm.xlu0 %1394, %v209
    %v1396 = vpop.permute.xlu0 %1395
    %1399 = vset.pattern.permute.xlu0 0
    %1400 = vperm.xlu0 %1399, %v210
    %v1401 = vpop.permute.xlu0 %1400
    %1404 = vset.pattern.permute.xlu0 0
    %1405 = vperm.xlu0 %1404, %v211
    %v1406 = vpop.permute.xlu0 %1405
    %1409 = vset.pattern.permute.xlu0 0
    %1410 = vperm.xlu0 %1409, %v212
    %v1411 = vpop.permute.xlu0 %1410
    %1414 = vset.pattern.permute.xlu0 0
    %1415 = vperm.xlu0 %1414, %v213
    %v1416 = vpop.permute.xlu0 %1415
    %1419 = vset.pattern.permute.xlu0 0
    %1420 = vperm.xlu0 %1419, %v214
    %v1421 = vpop.permute.xlu0 %1420
    %1424 = vset.pattern.permute.xlu0 0
    %1425 = vperm.xlu0 %1424, %v215
    %v1426 = vpop.permute.xlu0 %1425
    %1429 = vset.pattern.permute.xlu0 0
    %1430 = vperm.xlu0 %1429, %v216
    %v1431 = vpop.permute.xlu0 %1430
    %1434 = vset.pattern.permute.xlu0 0
    %1435 = vperm.xlu0 %1434, %v217
    %v1436 = vpop.permute.xlu0 %1435
    %1439 = vset.pattern.permute.xlu0 0
    %1440 = vperm.xlu0 %1439, %v218
    %v1441 = vpop.permute.xlu0 %1440
    %1444 = vset.pattern.permute.xlu0 0
    %1445 = vperm.xlu0 %1444, %v219
    %v1446 = vpop.permute.xlu0 %1445
    %1449 = vset.pattern.permute.xlu0 0
    %1450 = vperm.xlu0 %1449, %v220
    %v1451 = vpop.permute.xlu0 %1450
    %1454 = vset.pattern.permute.xlu0 0
    %1455 = vperm.xlu0 %1454, %v221
    %v1456 = vpop.permute.xlu0 %1455
    %v1458 = vmul.f32 %v1235, %v1301
    %v1459 = vmul.f32 %v1237, %v1306
    %v1460 = vmul.f32 %v1239, %v1311
    %v1461 = vmul.f32 %v1241, %v1316
    %v1462 = vmul.f32 %v1243, %v1321
    %v1463 = vmul.f32 %v1245, %v1326
    %v1464 = vmul.f32 %v1247, %v1331
    %v1465 = vmul.f32 %v1249, %v1336
    %v1466 = vmul.f32 %v1251, %v1341
    %v1467 = vmul.f32 %v1253, %v1346
    %v1468 = vmul.f32 %v1255, %v1351
    %v1469 = vmul.f32 %v1257, %v1356
    %v1470 = vmul.f32 %v1259, %v1361
    %v1471 = vmul.f32 %v1261, %v1366
    %v1472 = vmul.f32 %v1263, %v1371
    %v1473 = vmul.f32 %v1265, %v1376
    %v1474 = vmul.f32 %v1267, %v1381
    %v1475 = vmul.f32 %v1269, %v1386
    %v1476 = vmul.f32 %v1271, %v1391
    %v1477 = vmul.f32 %v1273, %v1396
    %v1478 = vmul.f32 %v1275, %v1401
    %v1479 = vmul.f32 %v1277, %v1406
    %v1480 = vmul.f32 %v1279, %v1411
    %v1481 = vmul.f32 %v1281, %v1416
    %v1482 = vmul.f32 %v1283, %v1421
    %v1483 = vmul.f32 %v1285, %v1426
    %v1484 = vmul.f32 %v1287, %v1431
    %v1485 = vmul.f32 %v1289, %v1436
    %v1486 = vmul.f32 %v1291, %v1441
    %v1487 = vmul.f32 %v1293, %v1446
    %v1488 = vmul.f32 %v1295, %v1451
    %v1489 = vmul.f32 %v1297, %v1456
    %v1490 = vsel %vm1139, %v1458, 0.0
    %v1491 = vsel %vm1139, %v1460, 0.0
    %v1492 = vadd.f32 %v1490, %v1491
    %v1493 = vsel %vm1139, %v1462, 0.0
    %v1494 = vadd.f32 %v1492, %v1493
    %v1495 = vsel %vm1139, %v1464, 0.0
    %v1496 = vadd.f32 %v1494, %v1495
    %v1497 = vsel %vm1139, %v1466, 0.0
    %v1498 = vadd.f32 %v1496, %v1497
    %v1499 = vsel %vm1139, %v1468, 0.0
    %v1500 = vadd.f32 %v1498, %v1499
    %v1501 = vsel %vm1139, %v1470, 0.0
    %v1502 = vadd.f32 %v1500, %v1501
    %v1503 = vsel %vm1139, %v1472, 0.0
    %v1504 = vadd.f32 %v1502, %v1503
    %v1505 = vsel %vm1139, %v1474, 0.0
    %v1506 = vadd.f32 %v1504, %v1505
    %v1507 = vsel %vm1139, %v1476, 0.0
    %v1508 = vadd.f32 %v1506, %v1507
    %v1509 = vsel %vm1139, %v1478, 0.0
    %v1510 = vadd.f32 %v1508, %v1509
    %v1511 = vsel %vm1139, %v1480, 0.0
    %v1512 = vadd.f32 %v1510, %v1511
    %v1513 = vsel %vm1139, %v1482, 0.0
    %v1514 = vadd.f32 %v1512, %v1513
    %v1515 = vsel %vm1139, %v1484, 0.0
    %v1516 = vadd.f32 %v1514, %v1515
    %v1517 = vsel %vm1139, %v1486, 0.0
    %v1518 = vadd.f32 %v1516, %v1517
    %v1519 = vsel %vm1139, %v1488, 0.0
    %v1520 = vadd.f32 %v1518, %v1519
    %v1521 = vsel %vm1139, %v1459, 0.0
    %v1522 = vsel %vm1139, %v1461, 0.0
    %v1523 = vadd.f32 %v1521, %v1522
    %v1524 = vsel %vm1139, %v1463, 0.0
    %v1525 = vadd.f32 %v1523, %v1524
    %v1526 = vsel %vm1139, %v1465, 0.0
    %v1527 = vadd.f32 %v1525, %v1526
    %v1528 = vsel %vm1139, %v1467, 0.0
    %v1529 = vadd.f32 %v1527, %v1528
    %v1530 = vsel %vm1139, %v1469, 0.0
    %v1531 = vadd.f32 %v1529, %v1530
    %v1532 = vsel %vm1139, %v1471, 0.0
    %v1533 = vadd.f32 %v1531, %v1532
    %v1534 = vsel %vm1139, %v1473, 0.0
    %v1535 = vadd.f32 %v1533, %v1534
    %v1536 = vsel %vm1139, %v1475, 0.0
    %v1537 = vadd.f32 %v1535, %v1536
    %v1538 = vsel %vm1139, %v1477, 0.0
    %v1539 = vadd.f32 %v1537, %v1538
    %v1540 = vsel %vm1139, %v1479, 0.0
    %v1541 = vadd.f32 %v1539, %v1540
    %v1542 = vsel %vm1139, %v1481, 0.0
    %v1543 = vadd.f32 %v1541, %v1542
    %v1544 = vsel %vm1139, %v1483, 0.0
    %v1545 = vadd.f32 %v1543, %v1544
    %v1546 = vsel %vm1139, %v1485, 0.0
    %v1547 = vadd.f32 %v1545, %v1546
    %v1548 = vsel %vm1139, %v1487, 0.0
    %v1549 = vadd.f32 %v1547, %v1548
    %v1550 = vsel %vm1139, %v1489, 0.0
    %v1551 = vadd.f32 %v1549, %v1550
    %v1552 = vmax.f32 %v1520, 1e-30
    %v1553 = vmax.f32 %v1551, 1e-30
    %v1554 = vrcp.pop %v1552
    %v1555 = vmul.f32 %v1552, %v1554
    %v1556 = vsub.f32 1.0, %v1555
    %v1557 = vmul.f32 %v1554, %v1556
    %v1558 = vadd.f32 %v1554, %v1557
    %vm1559 = vweird.f32 %v1552
    %vm1560 = vweird.f32 %v1554
    %vm1561 = vmor %vm1559, %vm1560
    %v1562 = vsel %vm1561, %v1554, %v1558
    %v1563 = vand.u32 2147483647, %v1552
    %vm1564 = vcmp.eq.f32.partialorder %v1563, 8.507059e+37
    %v1565 = vand.u32 %v1552, 2147483648
    %v1566 = vor.u32 1.1754944e-38, %v1565
    %v1567 = vsel %vm1564, %v1566, %v1562
    %v1568 = vmul.f32 1.0, %v1567
    %v1569 = vrcp.pop %v1553
    %v1570 = vmul.f32 %v1553, %v1569
    %v1571 = vsub.f32 1.0, %v1570
    %v1572 = vmul.f32 %v1569, %v1571
    %v1573 = vadd.f32 %v1569, %v1572
    %vm1574 = vweird.f32 %v1553
    %vm1575 = vweird.f32 %v1569
    %vm1576 = vmor %vm1574, %vm1575
    %v1577 = vsel %vm1576, %v1569, %v1573
    %v1578 = vand.u32 2147483647, %v1553
    %vm1579 = vcmp.eq.f32.partialorder %v1578, 8.507059e+37
    %v1580 = vand.u32 %v1553, 2147483648
    %v1581 = vor.u32 1.1754944e-38, %v1580
    %v1582 = vsel %vm1579, %v1581, %v1577
    %v1583 = vmul.f32 1.0, %v1582
    %v1584 = vmul.f32 %v1458, %v1568
    %v1585 = vmul.f32 %v1459, %v1583
    %v1586 = vmul.f32 %v1460, %v1568
    %v1587 = vmul.f32 %v1461, %v1583
    %v1588 = vmul.f32 %v1462, %v1568
    %v1589 = vmul.f32 %v1463, %v1583
    %v1590 = vmul.f32 %v1464, %v1568
    %v1591 = vmul.f32 %v1465, %v1583
    %v1592 = vmul.f32 %v1466, %v1568
    %v1593 = vmul.f32 %v1467, %v1583
    %v1594 = vmul.f32 %v1468, %v1568
    %v1595 = vmul.f32 %v1469, %v1583
    %v1596 = vmul.f32 %v1470, %v1568
    %v1597 = vmul.f32 %v1471, %v1583
    %v1598 = vmul.f32 %v1472, %v1568
    %v1599 = vmul.f32 %v1473, %v1583
    %v1600 = vmul.f32 %v1474, %v1568
    %v1601 = vmul.f32 %v1475, %v1583
    %v1602 = vmul.f32 %v1476, %v1568
    %v1603 = vmul.f32 %v1477, %v1583
    %v1604 = vmul.f32 %v1478, %v1568
    %v1605 = vmul.f32 %v1479, %v1583
    %v1606 = vmul.f32 %v1480, %v1568
    %v1607 = vmul.f32 %v1481, %v1583
    %v1608 = vmul.f32 %v1482, %v1568
    %v1609 = vmul.f32 %v1483, %v1583
    %v1610 = vmul.f32 %v1484, %v1568
    %v1611 = vmul.f32 %v1485, %v1583
    %v1612 = vmul.f32 %v1486, %v1568
    %v1613 = vmul.f32 %v1487, %v1583
    %v1614 = vmul.f32 %v1488, %v1568
    %v1615 = vmul.f32 %v1489, %v1583
    %v1617 = vsel %vm1139, %v1584, 0
    %v1620 = vsel %vm1139, %v1585, 0
    %v1623 = vsel %vm1139, %v1586, 0
    %v1626 = vsel %vm1139, %v1587, 0
    %v1629 = vsel %vm1139, %v1588, 0
    %v1632 = vsel %vm1139, %v1589, 0
    %v1635 = vsel %vm1139, %v1590, 0
    %v1638 = vsel %vm1139, %v1591, 0
    %v1641 = vsel %vm1139, %v1592, 0
    %v1644 = vsel %vm1139, %v1593, 0
    %v1647 = vsel %vm1139, %v1594, 0
    %v1650 = vsel %vm1139, %v1595, 0
    %v1653 = vsel %vm1139, %v1596, 0
    %v1656 = vsel %vm1139, %v1597, 0
    %v1659 = vsel %vm1139, %v1598, 0
    %v1662 = vsel %vm1139, %v1599, 0
    %v1665 = vsel %vm1139, %v1600, 0
    %v1668 = vsel %vm1139, %v1601, 0
    %v1671 = vsel %vm1139, %v1602, 0
    %v1674 = vsel %vm1139, %v1603, 0
    %v1677 = vsel %vm1139, %v1604, 0
    %v1680 = vsel %vm1139, %v1605, 0
    %v1683 = vsel %vm1139, %v1606, 0
    %v1686 = vsel %vm1139, %v1607, 0
    %v1689 = vsel %vm1139, %v1608, 0
    %v1692 = vsel %vm1139, %v1609, 0
    %v1695 = vsel %vm1139, %v1610, 0
    %v1698 = vsel %vm1139, %v1611, 0
    %v1701 = vsel %vm1139, %v1612, 0
    %v1704 = vsel %vm1139, %v1613, 0
    %v1707 = vsel %vm1139, %v1614, 0
    %v1710 = vsel %vm1139, %v1615, 0
    %vm1712 = vcmask 1043456
    %v1714 = vsel %vm1712, %v222, 0
    %1716 = vmatpush.msra.mxu0 0.0
    %1717 = vmatpush.msra.mxu0 0.0
    %1718 = vmatpush.msra.mxu0 0.0
    %1719 = vmatpush.msra.mxu0 0.0
    %1720 = vmatpush.msra.mxu0 0.0
    %1721 = vmatpush.msra.mxu0 0.0
    %1722 = vmatpush.msra.mxu0 0.0
    %1723 = vmatpush.msra.mxu0 0.0
    %1724 = vmatpush.msra.mxu0 0.0
    %1725 = vmatpush.msra.mxu0 0.0
    %1726 = vmatpush.msra.mxu0 0.0
    %1727 = vmatpush.msra.mxu0 0.0
    %1728 = vmatpush.msra.mxu0 0.0
    %1729 = vmatpush.msra.mxu0 0.0
    %1730 = vmatpush.msra.mxu0 0.0
    %1731 = vmatpush.msra.mxu0 %v1714
    %1732 = vmatmul.f32.gmra.mxu0 %v1617
    %v1733 = vpop.f32.mrf.mxu0
    %v1734 = vadd.f32 0.0, %v1733
    %1735 = vmatmul.f32.gmra.mxu0 %v1620
    %v1736 = vpop.f32.mrf.mxu0
    %v1737 = vadd.f32 0.0, %v1736
    %1738 = vmatmul.f32.gmra.mxu0 %v1623
    %v1739 = vpop.f32.mrf.mxu0
    %v1740 = vadd.f32 0.0, %v1739
    %1741 = vmatmul.f32.gmra.mxu0 %v1626
    %v1742 = vpop.f32.mrf.mxu0
    %v1743 = vadd.f32 0.0, %v1742
    %1744 = vmatmul.f32.gmra.mxu0 %v1629
    %v1745 = vpop.f32.mrf.mxu0
    %v1746 = vadd.f32 0.0, %v1745
    %1747 = vmatmul.f32.gmra.mxu0 %v1632
    %v1748 = vpop.f32.mrf.mxu0
    %v1749 = vadd.f32 0.0, %v1748
    %1750 = vmatmul.f32.gmra.mxu0 %v1635
    %v1751 = vpop.f32.mrf.mxu0
    %v1752 = vadd.f32 0.0, %v1751
    %1753 = vmatmul.f32.gmra.mxu0 %v1638
    %v1754 = vpop.f32.mrf.mxu0
    %v1755 = vadd.f32 0.0, %v1754
    %1756 = vmatmul.f32.gmra.mxu0 %v1641
    %v1757 = vpop.f32.mrf.mxu0
    %v1758 = vadd.f32 0.0, %v1757
    %1759 = vmatmul.f32.gmra.mxu0 %v1644
    %v1760 = vpop.f32.mrf.mxu0
    %v1761 = vadd.f32 0.0, %v1760
    %1762 = vmatmul.f32.gmra.mxu0 %v1647
    %v1763 = vpop.f32.mrf.mxu0
    %v1764 = vadd.f32 0.0, %v1763
    %1765 = vmatmul.f32.gmra.mxu0 %v1650
    %v1766 = vpop.f32.mrf.mxu0
    %v1767 = vadd.f32 0.0, %v1766
    %1768 = vmatmul.f32.gmra.mxu0 %v1653
    %v1769 = vpop.f32.mrf.mxu0
    %v1770 = vadd.f32 0.0, %v1769
    %1771 = vmatmul.f32.gmra.mxu0 %v1656
    %v1772 = vpop.f32.mrf.mxu0
    %v1773 = vadd.f32 0.0, %v1772
    %1774 = vmatmul.f32.gmra.mxu0 %v1659
    %v1775 = vpop.f32.mrf.mxu0
    %v1776 = vadd.f32 0.0, %v1775
    %1777 = vmatmul.f32.gmra.mxu0 %v1662
    %v1778 = vpop.f32.mrf.mxu0
    %v1779 = vadd.f32 0.0, %v1778
    %1780 = vmatmul.f32.gmra.mxu0 %v1665
    %v1781 = vpop.f32.mrf.mxu0
    %v1782 = vadd.f32 0.0, %v1781
    %1783 = vmatmul.f32.gmra.mxu0 %v1668
    %v1784 = vpop.f32.mrf.mxu0
    %v1785 = vadd.f32 0.0, %v1784
    %1786 = vmatmul.f32.gmra.mxu0 %v1671
    %v1787 = vpop.f32.mrf.mxu0
    %v1788 = vadd.f32 0.0, %v1787
    %1789 = vmatmul.f32.gmra.mxu0 %v1674
    %v1790 = vpop.f32.mrf.mxu0
    %v1791 = vadd.f32 0.0, %v1790
    %1792 = vmatmul.f32.gmra.mxu0 %v1677
    %v1793 = vpop.f32.mrf.mxu0
    %v1794 = vadd.f32 0.0, %v1793
    %1795 = vmatmul.f32.gmra.mxu0 %v1680
    %v1796 = vpop.f32.mrf.mxu0
    %v1797 = vadd.f32 0.0, %v1796
    %1798 = vmatmul.f32.gmra.mxu0 %v1683
    %v1799 = vpop.f32.mrf.mxu0
    %v1800 = vadd.f32 0.0, %v1799
    %1801 = vmatmul.f32.gmra.mxu0 %v1686
    %v1802 = vpop.f32.mrf.mxu0
    %v1803 = vadd.f32 0.0, %v1802
    %1804 = vmatmul.f32.gmra.mxu0 %v1689
    %v1805 = vpop.f32.mrf.mxu0
    %v1806 = vadd.f32 0.0, %v1805
    %1807 = vmatmul.f32.gmra.mxu0 %v1692
    %v1808 = vpop.f32.mrf.mxu0
    %v1809 = vadd.f32 0.0, %v1808
    %1810 = vmatmul.f32.gmra.mxu0 %v1695
    %v1811 = vpop.f32.mrf.mxu0
    %v1812 = vadd.f32 0.0, %v1811
    %1813 = vmatmul.f32.gmra.mxu0 %v1698
    %v1814 = vpop.f32.mrf.mxu0
    %v1815 = vadd.f32 0.0, %v1814
    %1816 = vmatmul.f32.gmra.mxu0 %v1701
    %v1817 = vpop.f32.mrf.mxu0
    %v1818 = vadd.f32 0.0, %v1817
    %1819 = vmatmul.f32.gmra.mxu0 %v1704
    %v1820 = vpop.f32.mrf.mxu0
    %v1821 = vadd.f32 0.0, %v1820
    %1822 = vmatmul.f32.gmra.mxu0 %v1707
    %v1823 = vpop.f32.mrf.mxu0
    %v1824 = vadd.f32 0.0, %v1823
    %1825 = vmatmul.f32.gmra.mxu0 %v1710
    %v1826 = vpop.f32.mrf.mxu0
    %v1827 = vadd.f32 0.0, %v1826
    %1828 = vdwg.mxu0
    %v1831 = vrot.slane %v361, 1
    %v1832 = vrot.slane %v361, 2
    %v1833 = vrot.slane %v361, 3
    %v1834 = vrot.slane %v361, 4
    %v1835 = vrot.slane %v361, 5
    %v1836 = vrot.slane %v361, 6
    %v1837 = vrot.slane %v361, 7
    %v1838 = vrot.slane %v362, 1
    %v1839 = vrot.slane %v362, 2
    %v1840 = vrot.slane %v362, 3
    %v1841 = vrot.slane %v362, 4
    %v1842 = vrot.slane %v362, 5
    %v1843 = vrot.slane %v362, 6
    %v1844 = vrot.slane %v362, 7
    %v1845 = vperm.slane %v361, 0
    %v1846 = vperm.slane %v1831, 0
    %v1847 = vperm.slane %v1832, 0
    %v1848 = vperm.slane %v1833, 0
    %v1849 = vperm.slane %v1834, 0
    %v1850 = vperm.slane %v1835, 0
    %v1851 = vperm.slane %v1836, 0
    %v1852 = vperm.slane %v1837, 0
    %v1853 = vperm.slane %v362, 0
    %v1854 = vperm.slane %v1838, 0
    %v1855 = vperm.slane %v1839, 0
    %v1856 = vperm.slane %v1840, 0
    %v1857 = vperm.slane %v1841, 0
    %v1858 = vperm.slane %v1842, 0
    %v1859 = vperm.slane %v1843, 0
    %v1860 = vperm.slane %v1844, 0
    %v1877 = vmul.f32 %v1734, %v1845
    %v1878 = vmul.f32 %v1737, %v1845
    %v1879 = vmul.f32 %v1740, %v1846
    %v1880 = vmul.f32 %v1743, %v1846
    %v1881 = vmul.f32 %v1746, %v1847
    %v1882 = vmul.f32 %v1749, %v1847
    %v1883 = vmul.f32 %v1752, %v1848
    %v1884 = vmul.f32 %v1755, %v1848
    %v1885 = vmul.f32 %v1758, %v1849
    %v1886 = vmul.f32 %v1761, %v1849
    %v1887 = vmul.f32 %v1764, %v1850
    %v1888 = vmul.f32 %v1767, %v1850
    %v1889 = vmul.f32 %v1770, %v1851
    %v1890 = vmul.f32 %v1773, %v1851
    %v1891 = vmul.f32 %v1776, %v1852
    %v1892 = vmul.f32 %v1779, %v1852
    %v1893 = vmul.f32 %v1782, %v1853
    %v1894 = vmul.f32 %v1785, %v1853
    %v1895 = vmul.f32 %v1788, %v1854
    %v1896 = vmul.f32 %v1791, %v1854
    %v1897 = vmul.f32 %v1794, %v1855
    %v1898 = vmul.f32 %v1797, %v1855
    %v1899 = vmul.f32 %v1800, %v1856
    %v1900 = vmul.f32 %v1803, %v1856
    %v1901 = vmul.f32 %v1806, %v1857
    %v1902 = vmul.f32 %v1809, %v1857
    %v1903 = vmul.f32 %v1812, %v1858
    %v1904 = vmul.f32 %v1815, %v1858
    %v1905 = vmul.f32 %v1818, %v1859
    %v1906 = vmul.f32 %v1821, %v1859
    %v1907 = vmul.f32 %v1824, %v1860
    %v1908 = vmul.f32 %v1827, %v1860
    %v1909 = vadd.f32 %v1877, %v1879
    %v1910 = vadd.f32 %v1909, %v1881
    %v1911 = vadd.f32 %v1910, %v1883
    %v1912 = vadd.f32 %v1911, %v1885
    %v1913 = vadd.f32 %v1912, %v1887
    %v1914 = vadd.f32 %v1913, %v1889
    %v1915 = vadd.f32 %v1914, %v1891
    %v1916 = vadd.f32 %v1915, %v1893
    %v1917 = vadd.f32 %v1916, %v1895
    %v1918 = vadd.f32 %v1917, %v1897
    %v1919 = vadd.f32 %v1918, %v1899
    %v1920 = vadd.f32 %v1919, %v1901
    %v1921 = vadd.f32 %v1920, %v1903
    %v1922 = vadd.f32 %v1921, %v1905
    %v1923 = vadd.f32 %v1922, %v1907
    %v1924 = vadd.f32 %v1878, %v1880
    %v1925 = vadd.f32 %v1924, %v1882
    %v1926 = vadd.f32 %v1925, %v1884
    %v1927 = vadd.f32 %v1926, %v1886
    %v1928 = vadd.f32 %v1927, %v1888
    %v1929 = vadd.f32 %v1928, %v1890
    %v1930 = vadd.f32 %v1929, %v1892
    %v1931 = vadd.f32 %v1930, %v1894
    %v1932 = vadd.f32 %v1931, %v1896
    %v1933 = vadd.f32 %v1932, %v1898
    %v1934 = vadd.f32 %v1933, %v1900
    %v1935 = vadd.f32 %v1934, %v1902
    %v1936 = vadd.f32 %v1935, %v1904
    %v1937 = vadd.f32 %v1936, %v1906
    %v1938 = vadd.f32 %v1937, %v1908
    %v1939 = vld [vmem:[%s9] sm:$0xff]
    %v1940 = vld [vmem:[%s9 + $0x8] sm:$0xff]
    %v1941 = vld [vmem:[%s9 + $0x10] sm:$0xff]
    %v1942 = vld [vmem:[%s9 + $0x18] sm:$0xff]
    %v1943 = vld [vmem:[%s9 + $0x20] sm:$0xff]
    %v1944 = vld [vmem:[%s9 + $0x28] sm:$0xff]
    %v1945 = vld [vmem:[%s9 + $0x30] sm:$0xff]
    %v1946 = vld [vmem:[%s9 + $0x38] sm:$0xff]
    %v1947 = vld [vmem:[%s9 + $0x40] sm:$0xff]
    %v1948 = vld [vmem:[%s9 + $0x48] sm:$0xff]
    %v1949 = vld [vmem:[%s9 + $0x50] sm:$0xff]
    %v1950 = vld [vmem:[%s9 + $0x58] sm:$0xff]
    %v1951 = vld [vmem:[%s9 + $0x60] sm:$0xff]
    %v1952 = vld [vmem:[%s9 + $0x68] sm:$0xff]
    %v1953 = vld [vmem:[%s9 + $0x70] sm:$0xff]
    %v1954 = vld [vmem:[%s9 + $0x78] sm:$0xff]
    %v1955 = vld [vmem:[%s9 + $0x80] sm:$0xff]
    %v1956 = vld [vmem:[%s9 + $0x88] sm:$0xff]
    %v1957 = vld [vmem:[%s9 + $0x90] sm:$0xff]
    %v1958 = vld [vmem:[%s9 + $0x98] sm:$0xff]
    %v1959 = vld [vmem:[%s9 + $0xa0] sm:$0xff]
    %v1960 = vld [vmem:[%s9 + $0xa8] sm:$0xff]
    %v1961 = vld [vmem:[%s9 + $0xb0] sm:$0xff]
    %v1962 = vld [vmem:[%s9 + $0xb8] sm:$0xff]
    %v1963 = vld [vmem:[%s9 + $0xc0] sm:$0xff]
    %v1964 = vld [vmem:[%s9 + $0xc8] sm:$0xff]
    %v1965 = vld [vmem:[%s9 + $0xd0] sm:$0xff]
    %v1966 = vld [vmem:[%s9 + $0xd8] sm:$0xff]
    %v1967 = vld [vmem:[%s9 + $0xe0] sm:$0xff]
    %v1968 = vld [vmem:[%s9 + $0xe8] sm:$0xff]
    %v1969 = vld [vmem:[%s9 + $0xf0] sm:$0xff]
    %v1970 = vld [vmem:[%s9 + $0xf8] sm:$0xff]
    %v1971 = vld [vmem:[%s9 + $0x100] sm:$0xff]
    %v1972 = vld [vmem:[%s9 + $0x108] sm:$0xff]
    %v1973 = vld [vmem:[%s9 + $0x110] sm:$0xff]
    %v1974 = vld [vmem:[%s9 + $0x118] sm:$0xff]
    %v1975 = vld [vmem:[%s9 + $0x120] sm:$0xff]
    %v1976 = vld [vmem:[%s9 + $0x128] sm:$0xff]
    %v1977 = vld [vmem:[%s9 + $0x130] sm:$0xff]
    %v1978 = vld [vmem:[%s9 + $0x138] sm:$0xff]
    %v1979 = vld [vmem:[%s9 + $0x140] sm:$0xff]
    %v1980 = vld [vmem:[%s9 + $0x148] sm:$0xff]
    %v1981 = vld [vmem:[%s9 + $0x150] sm:$0xff]
    %v1982 = vld [vmem:[%s9 + $0x158] sm:$0xff]
    %v1983 = vld [vmem:[%s9 + $0x160] sm:$0xff]
    %v1984 = vld [vmem:[%s9 + $0x168] sm:$0xff]
    %v1985 = vld [vmem:[%s9 + $0x170] sm:$0xff]
    %v1986 = vld [vmem:[%s9 + $0x178] sm:$0xff]
    %v1987 = vld [vmem:[%s10] sm:$0xf]
    %v1988 = vld [vmem:[%s10 + $0x4] sm:$0xf]
    %v1989 = vld [vmem:[%s10 + $0x8] sm:$0xf]
    %v1990 = vld [vmem:[%s10 + $0xc] sm:$0xf]
    %v1991 = vld [vmem:[%s10 + $0x10] sm:$0xf]
    %v1992 = vld [vmem:[%s10 + $0x14] sm:$0xf]
    %v1993 = vld [vmem:[%s10 + $0x18] sm:$0xf]
    %v1994 = vld [vmem:[%s10 + $0x1c] sm:$0xf]
    %v1995 = vld [vmem:[%s10 + $0x20] sm:$0xf]
    %v1996 = vld [vmem:[%s10 + $0x24] sm:$0xf]
    %v1997 = vld [vmem:[%s10 + $0x28] sm:$0xf]
    %v1998 = vld [vmem:[%s10 + $0x2c] sm:$0xf]
    %v1999 = vld [vmem:[%s10 + $0x30] sm:$0xf]
    %v2000 = vld [vmem:[%s10 + $0x34] sm:$0xf]
    %v2001 = vld [vmem:[%s10 + $0x38] sm:$0xf]
    %v2002 = vld [vmem:[%s10 + $0x3c] sm:$0xf]
    %v2003 = vld [vmem:[%s12] sm:$0xf]
    %v2004 = vld [vmem:[%s12 + $0x4] sm:$0xf]
    %v2005 = vld [vmem:[%s12 + $0x8] sm:$0xf]
    %v2006 = vld [vmem:[%s12 + $0xc] sm:$0xf]
    %v2007 = vld [vmem:[%s12 + $0x10] sm:$0xf]
    %v2008 = vld [vmem:[%s12 + $0x14] sm:$0xf]
    %v2009 = vld [vmem:[%s12 + $0x18] sm:$0xf]
    %v2010 = vld [vmem:[%s12 + $0x1c] sm:$0xf]
    %v2011 = vld [vmem:[%s12 + $0x20] sm:$0xf]
    %v2012 = vld [vmem:[%s12 + $0x24] sm:$0xf]
    %v2013 = vld [vmem:[%s12 + $0x28] sm:$0xf]
    %v2014 = vld [vmem:[%s12 + $0x2c] sm:$0xf]
    %v2015 = vld [vmem:[%s12 + $0x30] sm:$0xf]
    %v2016 = vld [vmem:[%s12 + $0x34] sm:$0xf]
    %v2017 = vld [vmem:[%s12 + $0x38] sm:$0xf]
    %v2018 = vld [vmem:[%s12 + $0x3c] sm:$0xf]
    %v2019 = vld [vmem:[%s13] sm:$0x1]
    %v2020 = vld [vmem:[%s11] sm:$0x1]
    %2021 = vmatpush.msra.mxu0 %v1984
    %2022 = vmatpush.msra.mxu0 %v1981
    %2023 = vmatpush.msra.mxu0 %v1978
    %2024 = vmatpush.msra.mxu0 %v1975
    %2025 = vmatpush.msra.mxu0 %v1972
    %2026 = vmatpush.msra.mxu0 %v1969
    %2027 = vmatpush.msra.mxu0 %v1966
    %2028 = vmatpush.msra.mxu0 %v1963
    %2029 = vmatpush.msra.mxu0 %v1960
    %2030 = vmatpush.msra.mxu0 %v1957
    %2031 = vmatpush.msra.mxu0 %v1954
    %2032 = vmatpush.msra.mxu0 %v1951
    %2033 = vmatpush.msra.mxu0 %v1948
    %2034 = vmatpush.msra.mxu0 %v1945
    %2035 = vmatpush.msra.mxu0 %v1942
    %2036 = vmatpush.msra.mxu0 %v1939
    %2037 = vmatmul.f32.gmra.mxu0 %v1923
    %v2038 = vpop.f32.mrf.mxu0
    %v2039 = vadd.f32 0.0, %v2038
    %2040 = vmatmul.f32.gmra.mxu0 %v1938
    %v2041 = vpop.f32.mrf.mxu0
    %v2042 = vadd.f32 0.0, %v2041
    %2043 = vdwg.mxu0
    %2044 = vmatpush.msra.mxu0 %v1985
    %2045 = vmatpush.msra.mxu0 %v1982
    %2046 = vmatpush.msra.mxu0 %v1979
    %2047 = vmatpush.msra.mxu0 %v1976
    %2048 = vmatpush.msra.mxu0 %v1973
    %2049 = vmatpush.msra.mxu0 %v1970
    %2050 = vmatpush.msra.mxu0 %v1967
    %2051 = vmatpush.msra.mxu0 %v1964
    %2052 = vmatpush.msra.mxu0 %v1961
    %2053 = vmatpush.msra.mxu0 %v1958
    %2054 = vmatpush.msra.mxu0 %v1955
    %2055 = vmatpush.msra.mxu0 %v1952
    %2056 = vmatpush.msra.mxu0 %v1949
    %2057 = vmatpush.msra.mxu0 %v1946
    %2058 = vmatpush.msra.mxu0 %v1943
    %2059 = vmatpush.msra.mxu0 %v1940
    %2060 = vmatmul.f32.gmra.mxu0 %v1923
    %v2061 = vpop.f32.mrf.mxu0
    %v2062 = vadd.f32 0.0, %v2061
    %2063 = vmatmul.f32.gmra.mxu0 %v1938
    %v2064 = vpop.f32.mrf.mxu0
    %v2065 = vadd.f32 0.0, %v2064
    %2066 = vdwg.mxu0
    %2067 = vmatpush.msra.mxu0 %v1986
    %2068 = vmatpush.msra.mxu0 %v1983
    %2069 = vmatpush.msra.mxu0 %v1980
    %2070 = vmatpush.msra.mxu0 %v1977
    %2071 = vmatpush.msra.mxu0 %v1974
    %2072 = vmatpush.msra.mxu0 %v1971
    %2073 = vmatpush.msra.mxu0 %v1968
    %2074 = vmatpush.msra.mxu0 %v1965
    %2075 = vmatpush.msra.mxu0 %v1962
    %2076 = vmatpush.msra.mxu0 %v1959
    %2077 = vmatpush.msra.mxu0 %v1956
    %2078 = vmatpush.msra.mxu0 %v1953
    %2079 = vmatpush.msra.mxu0 %v1950
    %2080 = vmatpush.msra.mxu0 %v1947
    %2081 = vmatpush.msra.mxu0 %v1944
    %2082 = vmatpush.msra.mxu0 %v1941
    %2083 = vmatmul.f32.gmra.mxu0 %v1923
    %v2084 = vpop.f32.mrf.mxu0
    %v2085 = vadd.f32 0.0, %v2084
    %2086 = vmatmul.f32.gmra.mxu0 %v1938
    %v2087 = vpop.f32.mrf.mxu0
    %v2088 = vadd.f32 0.0, %v2087
    %2089 = vdwg.mxu0
    %v2091 = vperm.slane %v2019, 0
    %v2093 = vadd.f32 %v2085, %v2091
    %v2094 = vadd.f32 %v2088, %v2091
    %v2111 = vunpack.c.l.b16 %v1987
    %v2112 = vunpack.c.l.b16 %v1988
    %v2113 = vunpack.c.l.b16 %v1989
    %v2114 = vunpack.c.l.b16 %v1990
    %v2115 = vunpack.c.l.b16 %v1991
    %v2116 = vunpack.c.l.b16 %v1992
    %v2117 = vunpack.c.l.b16 %v1993
    %v2118 = vunpack.c.l.b16 %v1994
    %v2119 = vunpack.c.l.b16 %v1995
    %v2120 = vunpack.c.l.b16 %v1996
    %v2121 = vunpack.c.l.b16 %v1997
    %v2122 = vunpack.c.l.b16 %v1998
    %v2123 = vunpack.c.l.b16 %v1999
    %v2124 = vunpack.c.l.b16 %v2000
    %v2125 = vunpack.c.l.b16 %v2001
    %v2126 = vunpack.c.l.b16 %v2002
    %v2127 = vpack.c.b16 %v2112, %v2111
    %v2128 = vpack.c.b16 %v2114, %v2113
    %v2129 = vpack.c.b16 %v2116, %v2115
    %v2130 = vpack.c.b16 %v2118, %v2117
    %v2131 = vpack.c.b16 %v2120, %v2119
    %v2132 = vpack.c.b16 %v2122, %v2121
    %v2133 = vpack.c.b16 %v2124, %v2123
    %v2134 = vpack.c.b16 %v2126, %v2125
    %2143 = vmatpush.bf16.msra.mxu0 %v2134
    %2144 = vmatpush.bf16.msra.mxu0 %v2133
    %2145 = vmatpush.bf16.msra.mxu0 %v2132
    %2146 = vmatpush.bf16.msra.mxu0 %v2131
    %2147 = vmatpush.bf16.msra.mxu0 %v2130
    %2148 = vmatpush.bf16.msra.mxu0 %v2129
    %2149 = vmatpush.bf16.msra.mxu0 %v2128
    %2150 = vmatpush.bf16.msra.mxu0 %v2127
    %2151 = vmatmul.bf16.gmra.mxu0 %v762
    %v2152 = vpop.f32.mrf.mxu0
    %v2153 = vadd.f32 0.0, %v2152
    %v2154 = vpop.f32.mrf.mxu0
    %v2155 = vadd.f32 0.0, %v2154
    %2156 = vmatmul.bf16.gmra.mxu0 %v763
    %v2157 = vpop.f32.mrf.mxu0
    %v2158 = vadd.f32 0.0, %v2157
    %v2159 = vpop.f32.mrf.mxu0
    %v2160 = vadd.f32 0.0, %v2159
    %2161 = vmatmul.bf16.gmra.mxu0 %v764
    %v2162 = vpop.f32.mrf.mxu0
    %v2163 = vadd.f32 0.0, %v2162
    %v2164 = vpop.f32.mrf.mxu0
    %v2165 = vadd.f32 0.0, %v2164
    %2166 = vmatmul.bf16.gmra.mxu0 %v765
    %v2167 = vpop.f32.mrf.mxu0
    %v2168 = vadd.f32 0.0, %v2167
    %v2169 = vpop.f32.mrf.mxu0
    %v2170 = vadd.f32 0.0, %v2169
    %2171 = vmatmul.bf16.gmra.mxu0 %v766
    %v2172 = vpop.f32.mrf.mxu0
    %v2173 = vadd.f32 0.0, %v2172
    %v2174 = vpop.f32.mrf.mxu0
    %v2175 = vadd.f32 0.0, %v2174
    %2176 = vmatmul.bf16.gmra.mxu0 %v767
    %v2177 = vpop.f32.mrf.mxu0
    %v2178 = vadd.f32 0.0, %v2177
    %v2179 = vpop.f32.mrf.mxu0
    %v2180 = vadd.f32 0.0, %v2179
    %2181 = vmatmul.bf16.gmra.mxu0 %v768
    %v2182 = vpop.f32.mrf.mxu0
    %v2183 = vadd.f32 0.0, %v2182
    %v2184 = vpop.f32.mrf.mxu0
    %v2185 = vadd.f32 0.0, %v2184
    %2186 = vmatmul.bf16.gmra.mxu0 %v769
    %v2187 = vpop.f32.mrf.mxu0
    %v2188 = vadd.f32 0.0, %v2187
    %v2189 = vpop.f32.mrf.mxu0
    %v2190 = vadd.f32 0.0, %v2189
    %2191 = vmatmul.bf16.gmra.mxu0 %v770
    %v2192 = vpop.f32.mrf.mxu0
    %v2193 = vadd.f32 0.0, %v2192
    %v2194 = vpop.f32.mrf.mxu0
    %v2195 = vadd.f32 0.0, %v2194
    %2196 = vmatmul.bf16.gmra.mxu0 %v771
    %v2197 = vpop.f32.mrf.mxu0
    %v2198 = vadd.f32 0.0, %v2197
    %v2199 = vpop.f32.mrf.mxu0
    %v2200 = vadd.f32 0.0, %v2199
    %2201 = vmatmul.bf16.gmra.mxu0 %v772
    %v2202 = vpop.f32.mrf.mxu0
    %v2203 = vadd.f32 0.0, %v2202
    %v2204 = vpop.f32.mrf.mxu0
    %v2205 = vadd.f32 0.0, %v2204
    %2206 = vmatmul.bf16.gmra.mxu0 %v773
    %v2207 = vpop.f32.mrf.mxu0
    %v2208 = vadd.f32 0.0, %v2207
    %v2209 = vpop.f32.mrf.mxu0
    %v2210 = vadd.f32 0.0, %v2209
    %2211 = vmatmul.bf16.gmra.mxu0 %v774
    %v2212 = vpop.f32.mrf.mxu0
    %v2213 = vadd.f32 0.0, %v2212
    %v2214 = vpop.f32.mrf.mxu0
    %v2215 = vadd.f32 0.0, %v2214
    %2216 = vmatmul.bf16.gmra.mxu0 %v775
    %v2217 = vpop.f32.mrf.mxu0
    %v2218 = vadd.f32 0.0, %v2217
    %v2219 = vpop.f32.mrf.mxu0
    %v2220 = vadd.f32 0.0, %v2219
    %2221 = vmatmul.bf16.gmra.mxu0 %v776
    %v2222 = vpop.f32.mrf.mxu0
    %v2223 = vadd.f32 0.0, %v2222
    %v2224 = vpop.f32.mrf.mxu0
    %v2225 = vadd.f32 0.0, %v2224
    %2226 = vmatmul.bf16.gmra.mxu0 %v777
    %v2227 = vpop.f32.mrf.mxu0
    %v2228 = vadd.f32 0.0, %v2227
    %v2229 = vpop.f32.mrf.mxu0
    %v2230 = vadd.f32 0.0, %v2229
    %2231 = vdwg.mxu0
    %v2234 = vrot.slane %v2039, 1
    %v2235 = vrot.slane %v2039, 2
    %v2236 = vrot.slane %v2039, 3
    %v2237 = vrot.slane %v2039, 4
    %v2238 = vrot.slane %v2039, 5
    %v2239 = vrot.slane %v2039, 6
    %v2240 = vrot.slane %v2039, 7
    %v2241 = vrot.slane %v2042, 1
    %v2242 = vrot.slane %v2042, 2
    %v2243 = vrot.slane %v2042, 3
    %v2244 = vrot.slane %v2042, 4
    %v2245 = vrot.slane %v2042, 5
    %v2246 = vrot.slane %v2042, 6
    %v2247 = vrot.slane %v2042, 7
    %v2248 = vperm.slane %v2039, 0
    %v2249 = vperm.slane %v2234, 0
    %v2250 = vperm.slane %v2235, 0
    %v2251 = vperm.slane %v2236, 0
    %v2252 = vperm.slane %v2237, 0
    %v2253 = vperm.slane %v2238, 0
    %v2254 = vperm.slane %v2239, 0
    %v2255 = vperm.slane %v2240, 0
    %v2256 = vperm.slane %v2042, 0
    %v2257 = vperm.slane %v2241, 0
    %v2258 = vperm.slane %v2242, 0
    %v2259 = vperm.slane %v2243, 0
    %v2260 = vperm.slane %v2244, 0
    %v2261 = vperm.slane %v2245, 0
    %v2262 = vperm.slane %v2246, 0
    %v2263 = vperm.slane %v2247, 0
    %v2280 = vadd.f32 %v2248, %v2062
    %v2281 = vadd.f32 %v2248, %v2065
    %v2282 = vadd.f32 %v2249, %v2062
    %v2283 = vadd.f32 %v2249, %v2065
    %v2284 = vadd.f32 %v2250, %v2062
    %v2285 = vadd.f32 %v2250, %v2065
    %v2286 = vadd.f32 %v2251, %v2062
    %v2287 = vadd.f32 %v2251, %v2065
    %v2288 = vadd.f32 %v2252, %v2062
    %v2289 = vadd.f32 %v2252, %v2065
    %v2290 = vadd.f32 %v2253, %v2062
    %v2291 = vadd.f32 %v2253, %v2065
    %v2292 = vadd.f32 %v2254, %v2062
    %v2293 = vadd.f32 %v2254, %v2065
    %v2294 = vadd.f32 %v2255, %v2062
    %v2295 = vadd.f32 %v2255, %v2065
    %v2296 = vadd.f32 %v2256, %v2062
    %v2297 = vadd.f32 %v2256, %v2065
    %v2298 = vadd.f32 %v2257, %v2062
    %v2299 = vadd.f32 %v2257, %v2065
    %v2300 = vadd.f32 %v2258, %v2062
    %v2301 = vadd.f32 %v2258, %v2065
    %v2302 = vadd.f32 %v2259, %v2062
    %v2303 = vadd.f32 %v2259, %v2065
    %v2304 = vadd.f32 %v2260, %v2062
    %v2305 = vadd.f32 %v2260, %v2065
    %v2306 = vadd.f32 %v2261, %v2062
    %v2307 = vadd.f32 %v2261, %v2065
    %v2308 = vadd.f32 %v2262, %v2062
    %v2309 = vadd.f32 %v2262, %v2065
    %v2310 = vadd.f32 %v2263, %v2062
    %v2311 = vadd.f32 %v2263, %v2065
    %v2312 = vadd.f32 %v2280, %v2153
    %v2313 = vadd.f32 %v2281, %v2155
    %v2314 = vadd.f32 %v2282, %v2158
    %v2315 = vadd.f32 %v2283, %v2160
    %v2316 = vadd.f32 %v2284, %v2163
    %v2317 = vadd.f32 %v2285, %v2165
    %v2318 = vadd.f32 %v2286, %v2168
    %v2319 = vadd.f32 %v2287, %v2170
    %v2320 = vadd.f32 %v2288, %v2173
    %v2321 = vadd.f32 %v2289, %v2175
    %v2322 = vadd.f32 %v2290, %v2178
    %v2323 = vadd.f32 %v2291, %v2180
    %v2324 = vadd.f32 %v2292, %v2183
    %v2325 = vadd.f32 %v2293, %v2185
    %v2326 = vadd.f32 %v2294, %v2188
    %v2327 = vadd.f32 %v2295, %v2190
    %v2328 = vadd.f32 %v2296, %v2193
    %v2329 = vadd.f32 %v2297, %v2195
    %v2330 = vadd.f32 %v2298, %v2198
    %v2331 = vadd.f32 %v2299, %v2200
    %v2332 = vadd.f32 %v2300, %v2203
    %v2333 = vadd.f32 %v2301, %v2205
    %v2334 = vadd.f32 %v2302, %v2208
    %v2335 = vadd.f32 %v2303, %v2210
    %v2336 = vadd.f32 %v2304, %v2213
    %v2337 = vadd.f32 %v2305, %v2215
    %v2338 = vadd.f32 %v2306, %v2218
    %v2339 = vadd.f32 %v2307, %v2220
    %v2340 = vadd.f32 %v2308, %v2223
    %v2341 = vadd.f32 %v2309, %v2225
    %v2342 = vadd.f32 %v2310, %v2228
    %v2343 = vadd.f32 %v2311, %v2230
    %v2345 = vperm.slane %v2020, 0
    %v2347 = vadd.f32 %v2312, %v2345
    %v2348 = vadd.f32 %v2313, %v2345
    %v2349 = vadd.f32 %v2314, %v2345
    %v2350 = vadd.f32 %v2315, %v2345
    %v2351 = vadd.f32 %v2316, %v2345
    %v2352 = vadd.f32 %v2317, %v2345
    %v2353 = vadd.f32 %v2318, %v2345
    %v2354 = vadd.f32 %v2319, %v2345
    %v2355 = vadd.f32 %v2320, %v2345
    %v2356 = vadd.f32 %v2321, %v2345
    %v2357 = vadd.f32 %v2322, %v2345
    %v2358 = vadd.f32 %v2323, %v2345
    %v2359 = vadd.f32 %v2324, %v2345
    %v2360 = vadd.f32 %v2325, %v2345
    %v2361 = vadd.f32 %v2326, %v2345
    %v2362 = vadd.f32 %v2327, %v2345
    %v2363 = vadd.f32 %v2328, %v2345
    %v2364 = vadd.f32 %v2329, %v2345
    %v2365 = vadd.f32 %v2330, %v2345
    %v2366 = vadd.f32 %v2331, %v2345
    %v2367 = vadd.f32 %v2332, %v2345
    %v2368 = vadd.f32 %v2333, %v2345
    %v2369 = vadd.f32 %v2334, %v2345
    %v2370 = vadd.f32 %v2335, %v2345
    %v2371 = vadd.f32 %v2336, %v2345
    %v2372 = vadd.f32 %v2337, %v2345
    %v2373 = vadd.f32 %v2338, %v2345
    %v2374 = vadd.f32 %v2339, %v2345
    %v2375 = vadd.f32 %v2340, %v2345
    %v2376 = vadd.f32 %v2341, %v2345
    %v2377 = vadd.f32 %v2342, %v2345
    %v2378 = vadd.f32 %v2343, %v2345
    %v2379 = vmul.f32 %v2347, 0.01
    %v2380 = vmul.f32 %v2348, 0.01
    %v2381 = vmul.f32 %v2349, 0.01
    %v2382 = vmul.f32 %v2350, 0.01
    %v2383 = vmul.f32 %v2351, 0.01
    %v2384 = vmul.f32 %v2352, 0.01
    %v2385 = vmul.f32 %v2353, 0.01
    %v2386 = vmul.f32 %v2354, 0.01
    %v2387 = vmul.f32 %v2355, 0.01
    %v2388 = vmul.f32 %v2356, 0.01
    %v2389 = vmul.f32 %v2357, 0.01
    %v2390 = vmul.f32 %v2358, 0.01
    %v2391 = vmul.f32 %v2359, 0.01
    %v2392 = vmul.f32 %v2360, 0.01
    %v2393 = vmul.f32 %v2361, 0.01
    %v2394 = vmul.f32 %v2362, 0.01
    %v2395 = vmul.f32 %v2363, 0.01
    %v2396 = vmul.f32 %v2364, 0.01
    %v2397 = vmul.f32 %v2365, 0.01
    %v2398 = vmul.f32 %v2366, 0.01
    %v2399 = vmul.f32 %v2367, 0.01
    %v2400 = vmul.f32 %v2368, 0.01
    %v2401 = vmul.f32 %v2369, 0.01
    %v2402 = vmul.f32 %v2370, 0.01
    %v2403 = vmul.f32 %v2371, 0.01
    %v2404 = vmul.f32 %v2372, 0.01
    %v2405 = vmul.f32 %v2373, 0.01
    %v2406 = vmul.f32 %v2374, 0.01
    %v2407 = vmul.f32 %v2375, 0.01
    %v2408 = vmul.f32 %v2376, 0.01
    %v2409 = vmul.f32 %v2377, 0.01
    %v2410 = vmul.f32 %v2378, 0.01
    %v2411 = vmax.f32 %v2347, %v2379
    %v2412 = vmax.f32 %v2348, %v2380
    %v2413 = vmax.f32 %v2349, %v2381
    %v2414 = vmax.f32 %v2350, %v2382
    %v2415 = vmax.f32 %v2351, %v2383
    %v2416 = vmax.f32 %v2352, %v2384
    %v2417 = vmax.f32 %v2353, %v2385
    %v2418 = vmax.f32 %v2354, %v2386
    %v2419 = vmax.f32 %v2355, %v2387
    %v2420 = vmax.f32 %v2356, %v2388
    %v2421 = vmax.f32 %v2357, %v2389
    %v2422 = vmax.f32 %v2358, %v2390
    %v2423 = vmax.f32 %v2359, %v2391
    %v2424 = vmax.f32 %v2360, %v2392
    %v2425 = vmax.f32 %v2361, %v2393
    %v2426 = vmax.f32 %v2362, %v2394
    %v2427 = vmax.f32 %v2363, %v2395
    %v2428 = vmax.f32 %v2364, %v2396
    %v2429 = vmax.f32 %v2365, %v2397
    %v2430 = vmax.f32 %v2366, %v2398
    %v2431 = vmax.f32 %v2367, %v2399
    %v2432 = vmax.f32 %v2368, %v2400
    %v2433 = vmax.f32 %v2369, %v2401
    %v2434 = vmax.f32 %v2370, %v2402
    %v2435 = vmax.f32 %v2371, %v2403
    %v2436 = vmax.f32 %v2372, %v2404
    %v2437 = vmax.f32 %v2373, %v2405
    %v2438 = vmax.f32 %v2374, %v2406
    %v2439 = vmax.f32 %v2375, %v2407
    %v2440 = vmax.f32 %v2376, %v2408
    %v2441 = vmax.f32 %v2377, %v2409
    %v2442 = vmax.f32 %v2378, %v2410
    %v2443 = vpack.c.bf16 %v2412, %v2411
    %v2444 = vpack.c.bf16 %v2414, %v2413
    %v2445 = vpack.c.bf16 %v2416, %v2415
    %v2446 = vpack.c.bf16 %v2418, %v2417
    %v2447 = vpack.c.bf16 %v2420, %v2419
    %v2448 = vpack.c.bf16 %v2422, %v2421
    %v2449 = vpack.c.bf16 %v2424, %v2423
    %v2450 = vpack.c.bf16 %v2426, %v2425
    %v2451 = vpack.c.bf16 %v2428, %v2427
    %v2452 = vpack.c.bf16 %v2430, %v2429
    %v2453 = vpack.c.bf16 %v2432, %v2431
    %v2454 = vpack.c.bf16 %v2434, %v2433
    %v2455 = vpack.c.bf16 %v2436, %v2435
    %v2456 = vpack.c.bf16 %v2438, %v2437
    %v2457 = vpack.c.bf16 %v2440, %v2439
    %v2458 = vpack.c.bf16 %v2442, %v2441
    %v2475 = vunpack.c.l.b16 %v2003
    %v2476 = vunpack.c.l.b16 %v2004
    %v2477 = vunpack.c.l.b16 %v2005
    %v2478 = vunpack.c.l.b16 %v2006
    %v2479 = vunpack.c.l.b16 %v2007
    %v2480 = vunpack.c.l.b16 %v2008
    %v2481 = vunpack.c.l.b16 %v2009
    %v2482 = vunpack.c.l.b16 %v2010
    %v2483 = vunpack.c.l.b16 %v2011
    %v2484 = vunpack.c.l.b16 %v2012
    %v2485 = vunpack.c.l.b16 %v2013
    %v2486 = vunpack.c.l.b16 %v2014
    %v2487 = vunpack.c.l.b16 %v2015
    %v2488 = vunpack.c.l.b16 %v2016
    %v2489 = vunpack.c.l.b16 %v2017
    %v2490 = vunpack.c.l.b16 %v2018
    %v2491 = vpack.c.b16 %v2476, %v2475
    %v2492 = vpack.c.b16 %v2478, %v2477
    %v2493 = vpack.c.b16 %v2480, %v2479
    %v2494 = vpack.c.b16 %v2482, %v2481
    %v2495 = vpack.c.b16 %v2484, %v2483
    %v2496 = vpack.c.b16 %v2486, %v2485
    %v2497 = vpack.c.b16 %v2488, %v2487
    %v2498 = vpack.c.b16 %v2490, %v2489
    %2507 = vmatpush.bf16.msra.mxu0 %v2498
    %2508 = vmatpush.bf16.msra.mxu0 %v2497
    %2509 = vmatpush.bf16.msra.mxu0 %v2496
    %2510 = vmatpush.bf16.msra.mxu0 %v2495
    %2511 = vmatpush.bf16.msra.mxu0 %v2494
    %2512 = vmatpush.bf16.msra.mxu0 %v2493
    %2513 = vmatpush.bf16.msra.mxu0 %v2492
    %2514 = vmatpush.bf16.msra.mxu0 %v2491
    %2515 = vmatmul.bf16.gmra.mxu0 %v2443
    %v2516 = vpop.f32.mrf.mxu0
    %v2517 = vadd.f32 0.0, %v2516
    %v2518 = vpop.f32.mrf.mxu0
    %v2519 = vadd.f32 0.0, %v2518
    %2520 = vmatmul.bf16.gmra.mxu0 %v2444
    %v2521 = vpop.f32.mrf.mxu0
    %v2522 = vadd.f32 0.0, %v2521
    %v2523 = vpop.f32.mrf.mxu0
    %v2524 = vadd.f32 0.0, %v2523
    %2525 = vmatmul.bf16.gmra.mxu0 %v2445
    %v2526 = vpop.f32.mrf.mxu0
    %v2527 = vadd.f32 0.0, %v2526
    %v2528 = vpop.f32.mrf.mxu0
    %v2529 = vadd.f32 0.0, %v2528
    %2530 = vmatmul.bf16.gmra.mxu0 %v2446
    %v2531 = vpop.f32.mrf.mxu0
    %v2532 = vadd.f32 0.0, %v2531
    %v2533 = vpop.f32.mrf.mxu0
    %v2534 = vadd.f32 0.0, %v2533
    %2535 = vmatmul.bf16.gmra.mxu0 %v2447
    %v2536 = vpop.f32.mrf.mxu0
    %v2537 = vadd.f32 0.0, %v2536
    %v2538 = vpop.f32.mrf.mxu0
    %v2539 = vadd.f32 0.0, %v2538
    %2540 = vmatmul.bf16.gmra.mxu0 %v2448
    %v2541 = vpop.f32.mrf.mxu0
    %v2542 = vadd.f32 0.0, %v2541
    %v2543 = vpop.f32.mrf.mxu0
    %v2544 = vadd.f32 0.0, %v2543
    %2545 = vmatmul.bf16.gmra.mxu0 %v2449
    %v2546 = vpop.f32.mrf.mxu0
    %v2547 = vadd.f32 0.0, %v2546
    %v2548 = vpop.f32.mrf.mxu0
    %v2549 = vadd.f32 0.0, %v2548
    %2550 = vmatmul.bf16.gmra.mxu0 %v2450
    %v2551 = vpop.f32.mrf.mxu0
    %v2552 = vadd.f32 0.0, %v2551
    %v2553 = vpop.f32.mrf.mxu0
    %v2554 = vadd.f32 0.0, %v2553
    %2555 = vmatmul.bf16.gmra.mxu0 %v2451
    %v2556 = vpop.f32.mrf.mxu0
    %v2557 = vadd.f32 0.0, %v2556
    %v2558 = vpop.f32.mrf.mxu0
    %v2559 = vadd.f32 0.0, %v2558
    %2560 = vmatmul.bf16.gmra.mxu0 %v2452
    %v2561 = vpop.f32.mrf.mxu0
    %v2562 = vadd.f32 0.0, %v2561
    %v2563 = vpop.f32.mrf.mxu0
    %v2564 = vadd.f32 0.0, %v2563
    %2565 = vmatmul.bf16.gmra.mxu0 %v2453
    %v2566 = vpop.f32.mrf.mxu0
    %v2567 = vadd.f32 0.0, %v2566
    %v2568 = vpop.f32.mrf.mxu0
    %v2569 = vadd.f32 0.0, %v2568
    %2570 = vmatmul.bf16.gmra.mxu0 %v2454
    %v2571 = vpop.f32.mrf.mxu0
    %v2572 = vadd.f32 0.0, %v2571
    %v2573 = vpop.f32.mrf.mxu0
    %v2574 = vadd.f32 0.0, %v2573
    %2575 = vmatmul.bf16.gmra.mxu0 %v2455
    %v2576 = vpop.f32.mrf.mxu0
    %v2577 = vadd.f32 0.0, %v2576
    %v2578 = vpop.f32.mrf.mxu0
    %v2579 = vadd.f32 0.0, %v2578
    %2580 = vmatmul.bf16.gmra.mxu0 %v2456
    %v2581 = vpop.f32.mrf.mxu0
    %v2582 = vadd.f32 0.0, %v2581
    %v2583 = vpop.f32.mrf.mxu0
    %v2584 = vadd.f32 0.0, %v2583
    %2585 = vmatmul.bf16.gmra.mxu0 %v2457
    %v2586 = vpop.f32.mrf.mxu0
    %v2587 = vadd.f32 0.0, %v2586
    %v2588 = vpop.f32.mrf.mxu0
    %v2589 = vadd.f32 0.0, %v2588
    %2590 = vmatmul.bf16.gmra.mxu0 %v2458
    %v2591 = vpop.f32.mrf.mxu0
    %v2592 = vadd.f32 0.0, %v2591
    %v2593 = vpop.f32.mrf.mxu0
    %v2594 = vadd.f32 0.0, %v2593
    %2595 = vdwg.mxu0
    %v2596 = vsel %vm1075, %v2517, -1e+30
    %v2597 = vsel %vm1076, %v2519, -1e+30
    %v2598 = vsel %vm1077, %v2522, -1e+30
    %v2599 = vsel %vm1078, %v2524, -1e+30
    %v2600 = vsel %vm1079, %v2527, -1e+30
    %v2601 = vsel %vm1080, %v2529, -1e+30
    %v2602 = vsel %vm1081, %v2532, -1e+30
    %v2603 = vsel %vm1082, %v2534, -1e+30
    %v2604 = vsel %vm1083, %v2537, -1e+30
    %v2605 = vsel %vm1084, %v2539, -1e+30
    %v2606 = vsel %vm1085, %v2542, -1e+30
    %v2607 = vsel %vm1086, %v2544, -1e+30
    %v2608 = vsel %vm1087, %v2547, -1e+30
    %v2609 = vsel %vm1088, %v2549, -1e+30
    %v2610 = vsel %vm1089, %v2552, -1e+30
    %v2611 = vsel %vm1090, %v2554, -1e+30
    %v2612 = vsel %vm1091, %v2557, -1e+30
    %v2613 = vsel %vm1092, %v2559, -1e+30
    %v2614 = vsel %vm1093, %v2562, -1e+30
    %v2615 = vsel %vm1094, %v2564, -1e+30
    %v2616 = vsel %vm1095, %v2567, -1e+30
    %v2617 = vsel %vm1096, %v2569, -1e+30
    %v2618 = vsel %vm1097, %v2572, -1e+30
    %v2619 = vsel %vm1098, %v2574, -1e+30
    %v2620 = vsel %vm1099, %v2577, -1e+30
    %v2621 = vsel %vm1100, %v2579, -1e+30
    %v2622 = vsel %vm1101, %v2582, -1e+30
    %v2623 = vsel %vm1102, %v2584, -1e+30
    %v2624 = vsel %vm1103, %v2587, -1e+30
    %v2625 = vsel %vm1104, %v2589, -1e+30
    %v2626 = vsel %vm1105, %v2592, -1e+30
    %v2627 = vsel %vm1106, %v2594, -1e+30
    %v2628 = vsel %vm1139, %v2596, -inf
    %v2629 = vsel %vm1139, %v2598, -inf
    %v2630 = vsel %vm1139, %v2600, -inf
    %v2631 = vmax.f32 %v2628, %v2630
    %v2632 = vsel %vm1139, %v2602, -inf
    %v2633 = vmax.f32 %v2629, %v2632
    %v2634 = vsel %vm1139, %v2604, -inf
    %v2635 = vmax.f32 %v2631, %v2634
    %v2636 = vsel %vm1139, %v2606, -inf
    %v2637 = vmax.f32 %v2633, %v2636
    %v2638 = vsel %vm1139, %v2608, -inf
    %v2639 = vmax.f32 %v2635, %v2638
    %v2640 = vsel %vm1139, %v2610, -inf
    %v2641 = vmax.f32 %v2637, %v2640
    %v2642 = vsel %vm1139, %v2612, -inf
    %v2643 = vmax.f32 %v2639, %v2642
    %v2644 = vsel %vm1139, %v2614, -inf
    %v2645 = vmax.f32 %v2641, %v2644
    %v2646 = vsel %vm1139, %v2616, -inf
    %v2647 = vmax.f32 %v2643, %v2646
    %v2648 = vsel %vm1139, %v2618, -inf
    %v2649 = vmax.f32 %v2645, %v2648
    %v2650 = vsel %vm1139, %v2620, -inf
    %v2651 = vmax.f32 %v2647, %v2650
    %v2652 = vsel %vm1139, %v2622, -inf
    %v2653 = vmax.f32 %v2649, %v2652
    %v2654 = vsel %vm1139, %v2624, -inf
    %v2655 = vmax.f32 %v2651, %v2654
    %v2656 = vsel %vm1139, %v2626, -inf
    %v2657 = vmax.f32 %v2653, %v2656
    %v2658 = vmax.f32 %v2655, %v2657
    %v2659 = vsel %vm1139, %v2597, -inf
    %v2660 = vsel %vm1139, %v2599, -inf
    %v2661 = vsel %vm1139, %v2601, -inf
    %v2662 = vmax.f32 %v2659, %v2661
    %v2663 = vsel %vm1139, %v2603, -inf
    %v2664 = vmax.f32 %v2660, %v2663
    %v2665 = vsel %vm1139, %v2605, -inf
    %v2666 = vmax.f32 %v2662, %v2665
    %v2667 = vsel %vm1139, %v2607, -inf
    %v2668 = vmax.f32 %v2664, %v2667
    %v2669 = vsel %vm1139, %v2609, -inf
    %v2670 = vmax.f32 %v2666, %v2669
    %v2671 = vsel %vm1139, %v2611, -inf
    %v2672 = vmax.f32 %v2668, %v2671
    %v2673 = vsel %vm1139, %v2613, -inf
    %v2674 = vmax.f32 %v2670, %v2673
    %v2675 = vsel %vm1139, %v2615, -inf
    %v2676 = vmax.f32 %v2672, %v2675
    %v2677 = vsel %vm1139, %v2617, -inf
    %v2678 = vmax.f32 %v2674, %v2677
    %v2679 = vsel %vm1139, %v2619, -inf
    %v2680 = vmax.f32 %v2676, %v2679
    %v2681 = vsel %vm1139, %v2621, -inf
    %v2682 = vmax.f32 %v2678, %v2681
    %v2683 = vsel %vm1139, %v2623, -inf
    %v2684 = vmax.f32 %v2680, %v2683
    %v2685 = vsel %vm1139, %v2625, -inf
    %v2686 = vmax.f32 %v2682, %v2685
    %v2687 = vsel %vm1139, %v2627, -inf
    %v2688 = vmax.f32 %v2684, %v2687
    %v2689 = vmax.f32 %v2686, %v2688
    %v2690 = vsub.f32 %v2596, %v2658
    %v2691 = vsub.f32 %v2597, %v2689
    %v2692 = vsub.f32 %v2598, %v2658
    %v2693 = vsub.f32 %v2599, %v2689
    %v2694 = vsub.f32 %v2600, %v2658
    %v2695 = vsub.f32 %v2601, %v2689
    %v2696 = vsub.f32 %v2602, %v2658
    %v2697 = vsub.f32 %v2603, %v2689
    %v2698 = vsub.f32 %v2604, %v2658
    %v2699 = vsub.f32 %v2605, %v2689
    %v2700 = vsub.f32 %v2606, %v2658
    %v2701 = vsub.f32 %v2607, %v2689
    %v2702 = vsub.f32 %v2608, %v2658
    %v2703 = vsub.f32 %v2609, %v2689
    %v2704 = vsub.f32 %v2610, %v2658
    %v2705 = vsub.f32 %v2611, %v2689
    %v2706 = vsub.f32 %v2612, %v2658
    %v2707 = vsub.f32 %v2613, %v2689
    %v2708 = vsub.f32 %v2614, %v2658
    %v2709 = vsub.f32 %v2615, %v2689
    %v2710 = vsub.f32 %v2616, %v2658
    %v2711 = vsub.f32 %v2617, %v2689
    %v2712 = vsub.f32 %v2618, %v2658
    %v2713 = vsub.f32 %v2619, %v2689
    %v2714 = vsub.f32 %v2620, %v2658
    %v2715 = vsub.f32 %v2621, %v2689
    %v2716 = vsub.f32 %v2622, %v2658
    %v2717 = vsub.f32 %v2623, %v2689
    %v2718 = vsub.f32 %v2624, %v2658
    %v2719 = vsub.f32 %v2625, %v2689
    %v2720 = vsub.f32 %v2626, %v2658
    %v2721 = vsub.f32 %v2627, %v2689
    %v2722 = vmul.f32 %v2690, 1.442695
    %v2723 = vpow.pop %v2722
    %v2724 = vmul.f32 %v2691, 1.442695
    %v2725 = vpow.pop %v2724
    %v2726 = vmul.f32 %v2692, 1.442695
    %v2727 = vpow.pop %v2726
    %v2728 = vmul.f32 %v2693, 1.442695
    %v2729 = vpow.pop %v2728
    %v2730 = vmul.f32 %v2694, 1.442695
    %v2731 = vpow.pop %v2730
    %v2732 = vmul.f32 %v2695, 1.442695
    %v2733 = vpow.pop %v2732
    %v2734 = vmul.f32 %v2696, 1.442695
    %v2735 = vpow.pop %v2734
    %v2736 = vmul.f32 %v2697, 1.442695
    %v2737 = vpow.pop %v2736
    %v2738 = vmul.f32 %v2698, 1.442695
    %v2739 = vpow.pop %v2738
    %v2740 = vmul.f32 %v2699, 1.442695
    %v2741 = vpow.pop %v2740
    %v2742 = vmul.f32 %v2700, 1.442695
    %v2743 = vpow.pop %v2742
    %v2744 = vmul.f32 %v2701, 1.442695
    %v2745 = vpow.pop %v2744
    %v2746 = vmul.f32 %v2702, 1.442695
    %v2747 = vpow.pop %v2746
    %v2748 = vmul.f32 %v2703, 1.442695
    %v2749 = vpow.pop %v2748
    %v2750 = vmul.f32 %v2704, 1.442695
    %v2751 = vpow.pop %v2750
    %v2752 = vmul.f32 %v2705, 1.442695
    %v2753 = vpow.pop %v2752
    %v2754 = vmul.f32 %v2706, 1.442695
    %v2755 = vpow.pop %v2754
    %v2756 = vmul.f32 %v2707, 1.442695
    %v2757 = vpow.pop %v2756
    %v2758 = vmul.f32 %v2708, 1.442695
    %v2759 = vpow.pop %v2758
    %v2760 = vmul.f32 %v2709, 1.442695
    %v2761 = vpow.pop %v2760
    %v2762 = vmul.f32 %v2710, 1.442695
    %v2763 = vpow.pop %v2762
    %v2764 = vmul.f32 %v2711, 1.442695
    %v2765 = vpow.pop %v2764
    %v2766 = vmul.f32 %v2712, 1.442695
    %v2767 = vpow.pop %v2766
    %v2768 = vmul.f32 %v2713, 1.442695
    %v2769 = vpow.pop %v2768
    %v2770 = vmul.f32 %v2714, 1.442695
    %v2771 = vpow.pop %v2770
    %v2772 = vmul.f32 %v2715, 1.442695
    %v2773 = vpow.pop %v2772
    %v2774 = vmul.f32 %v2716, 1.442695
    %v2775 = vpow.pop %v2774
    %v2776 = vmul.f32 %v2717, 1.442695
    %v2777 = vpow.pop %v2776
    %v2778 = vmul.f32 %v2718, 1.442695
    %v2779 = vpow.pop %v2778
    %v2780 = vmul.f32 %v2719, 1.442695
    %v2781 = vpow.pop %v2780
    %v2782 = vmul.f32 %v2720, 1.442695
    %v2783 = vpow.pop %v2782
    %v2784 = vmul.f32 %v2721, 1.442695
    %v2785 = vpow.pop %v2784
    %v2786 = vmul.f32 %v2723, %v1301
    %v2787 = vmul.f32 %v2725, %v1306
    %v2788 = vmul.f32 %v2727, %v1311
    %v2789 = vmul.f32 %v2729, %v1316
    %v2790 = vmul.f32 %v2731, %v1321
    %v2791 = vmul.f32 %v2733, %v1326
    %v2792 = vmul.f32 %v2735, %v1331
    %v2793 = vmul.f32 %v2737, %v1336
    %v2794 = vmul.f32 %v2739, %v1341
    %v2795 = vmul.f32 %v2741, %v1346
    %v2796 = vmul.f32 %v2743, %v1351
    %v2797 = vmul.f32 %v2745, %v1356
    %v2798 = vmul.f32 %v2747, %v1361
    %v2799 = vmul.f32 %v2749, %v1366
    %v2800 = vmul.f32 %v2751, %v1371
    %v2801 = vmul.f32 %v2753, %v1376
    %v2802 = vmul.f32 %v2755, %v1381
    %v2803 = vmul.f32 %v2757, %v1386
    %v2804 = vmul.f32 %v2759, %v1391
    %v2805 = vmul.f32 %v2761, %v1396
    %v2806 = vmul.f32 %v2763, %v1401
    %v2807 = vmul.f32 %v2765, %v1406
    %v2808 = vmul.f32 %v2767, %v1411
    %v2809 = vmul.f32 %v2769, %v1416
    %v2810 = vmul.f32 %v2771, %v1421
    %v2811 = vmul.f32 %v2773, %v1426
    %v2812 = vmul.f32 %v2775, %v1431
    %v2813 = vmul.f32 %v2777, %v1436
    %v2814 = vmul.f32 %v2779, %v1441
    %v2815 = vmul.f32 %v2781, %v1446
    %v2816 = vmul.f32 %v2783, %v1451
    %v2817 = vmul.f32 %v2785, %v1456
    %v2818 = vsel %vm1139, %v2786, 0.0
    %v2819 = vsel %vm1139, %v2788, 0.0
    %v2820 = vadd.f32 %v2818, %v2819
    %v2821 = vsel %vm1139, %v2790, 0.0
    %v2822 = vadd.f32 %v2820, %v2821
    %v2823 = vsel %vm1139, %v2792, 0.0
    %v2824 = vadd.f32 %v2822, %v2823
    %v2825 = vsel %vm1139, %v2794, 0.0
    %v2826 = vadd.f32 %v2824, %v2825
    %v2827 = vsel %vm1139, %v2796, 0.0
    %v2828 = vadd.f32 %v2826, %v2827
    %v2829 = vsel %vm1139, %v2798, 0.0
    %v2830 = vadd.f32 %v2828, %v2829
    %v2831 = vsel %vm1139, %v2800, 0.0
    %v2832 = vadd.f32 %v2830, %v2831
    %v2833 = vsel %vm1139, %v2802, 0.0
    %v2834 = vadd.f32 %v2832, %v2833
    %v2835 = vsel %vm1139, %v2804, 0.0
    %v2836 = vadd.f32 %v2834, %v2835
    %v2837 = vsel %vm1139, %v2806, 0.0
    %v2838 = vadd.f32 %v2836, %v2837
    %v2839 = vsel %vm1139, %v2808, 0.0
    %v2840 = vadd.f32 %v2838, %v2839
    %v2841 = vsel %vm1139, %v2810, 0.0
    %v2842 = vadd.f32 %v2840, %v2841
    %v2843 = vsel %vm1139, %v2812, 0.0
    %v2844 = vadd.f32 %v2842, %v2843
    %v2845 = vsel %vm1139, %v2814, 0.0
    %v2846 = vadd.f32 %v2844, %v2845
    %v2847 = vsel %vm1139, %v2816, 0.0
    %v2848 = vadd.f32 %v2846, %v2847
    %v2849 = vsel %vm1139, %v2787, 0.0
    %v2850 = vsel %vm1139, %v2789, 0.0
    %v2851 = vadd.f32 %v2849, %v2850
    %v2852 = vsel %vm1139, %v2791, 0.0
    %v2853 = vadd.f32 %v2851, %v2852
    %v2854 = vsel %vm1139, %v2793, 0.0
    %v2855 = vadd.f32 %v2853, %v2854
    %v2856 = vsel %vm1139, %v2795, 0.0
    %v2857 = vadd.f32 %v2855, %v2856
    %v2858 = vsel %vm1139, %v2797, 0.0
    %v2859 = vadd.f32 %v2857, %v2858
    %v2860 = vsel %vm1139, %v2799, 0.0
    %v2861 = vadd.f32 %v2859, %v2860
    %v2862 = vsel %vm1139, %v2801, 0.0
    %v2863 = vadd.f32 %v2861, %v2862
    %v2864 = vsel %vm1139, %v2803, 0.0
    %v2865 = vadd.f32 %v2863, %v2864
    %v2866 = vsel %vm1139, %v2805, 0.0
    %v2867 = vadd.f32 %v2865, %v2866
    %v2868 = vsel %vm1139, %v2807, 0.0
    %v2869 = vadd.f32 %v2867, %v2868
    %v2870 = vsel %vm1139, %v2809, 0.0
    %v2871 = vadd.f32 %v2869, %v2870
    %v2872 = vsel %vm1139, %v2811, 0.0
    %v2873 = vadd.f32 %v2871, %v2872
    %v2874 = vsel %vm1139, %v2813, 0.0
    %v2875 = vadd.f32 %v2873, %v2874
    %v2876 = vsel %vm1139, %v2815, 0.0
    %v2877 = vadd.f32 %v2875, %v2876
    %v2878 = vsel %vm1139, %v2817, 0.0
    %v2879 = vadd.f32 %v2877, %v2878
    %v2880 = vmax.f32 %v2848, 1e-30
    %v2881 = vmax.f32 %v2879, 1e-30
    %v2882 = vrcp.pop %v2880
    %v2883 = vmul.f32 %v2880, %v2882
    %v2884 = vsub.f32 1.0, %v2883
    %v2885 = vmul.f32 %v2882, %v2884
    %v2886 = vadd.f32 %v2882, %v2885
    %vm2887 = vweird.f32 %v2880
    %vm2888 = vweird.f32 %v2882
    %vm2889 = vmor %vm2887, %vm2888
    %v2890 = vsel %vm2889, %v2882, %v2886
    %v2891 = vand.u32 2147483647, %v2880
    %vm2892 = vcmp.eq.f32.partialorder %v2891, 8.507059e+37
    %v2893 = vand.u32 %v2880, 2147483648
    %v2894 = vor.u32 1.1754944e-38, %v2893
    %v2895 = vsel %vm2892, %v2894, %v2890
    %v2896 = vmul.f32 1.0, %v2895
    %v2897 = vrcp.pop %v2881
    %v2898 = vmul.f32 %v2881, %v2897
    %v2899 = vsub.f32 1.0, %v2898
    %v2900 = vmul.f32 %v2897, %v2899
    %v2901 = vadd.f32 %v2897, %v2900
    %vm2902 = vweird.f32 %v2881
    %vm2903 = vweird.f32 %v2897
    %vm2904 = vmor %vm2902, %vm2903
    %v2905 = vsel %vm2904, %v2897, %v2901
    %v2906 = vand.u32 2147483647, %v2881
    %vm2907 = vcmp.eq.f32.partialorder %v2906, 8.507059e+37
    %v2908 = vand.u32 %v2881, 2147483648
    %v2909 = vor.u32 1.1754944e-38, %v2908
    %v2910 = vsel %vm2907, %v2909, %v2905
    %v2911 = vmul.f32 1.0, %v2910
    %v2912 = vmul.f32 %v2786, %v2896
    %v2913 = vmul.f32 %v2787, %v2911
    %v2914 = vmul.f32 %v2788, %v2896
    %v2915 = vmul.f32 %v2789, %v2911
    %v2916 = vmul.f32 %v2790, %v2896
    %v2917 = vmul.f32 %v2791, %v2911
    %v2918 = vmul.f32 %v2792, %v2896
    %v2919 = vmul.f32 %v2793, %v2911
    %v2920 = vmul.f32 %v2794, %v2896
    %v2921 = vmul.f32 %v2795, %v2911
    %v2922 = vmul.f32 %v2796, %v2896
    %v2923 = vmul.f32 %v2797, %v2911
    %v2924 = vmul.f32 %v2798, %v2896
    %v2925 = vmul.f32 %v2799, %v2911
    %v2926 = vmul.f32 %v2800, %v2896
    %v2927 = vmul.f32 %v2801, %v2911
    %v2928 = vmul.f32 %v2802, %v2896
    %v2929 = vmul.f32 %v2803, %v2911
    %v2930 = vmul.f32 %v2804, %v2896
    %v2931 = vmul.f32 %v2805, %v2911
    %v2932 = vmul.f32 %v2806, %v2896
    %v2933 = vmul.f32 %v2807, %v2911
    %v2934 = vmul.f32 %v2808, %v2896
    %v2935 = vmul.f32 %v2809, %v2911
    %v2936 = vmul.f32 %v2810, %v2896
    %v2937 = vmul.f32 %v2811, %v2911
    %v2938 = vmul.f32 %v2812, %v2896
    %v2939 = vmul.f32 %v2813, %v2911
    %v2940 = vmul.f32 %v2814, %v2896
    %v2941 = vmul.f32 %v2815, %v2911
    %v2942 = vmul.f32 %v2816, %v2896
    %v2943 = vmul.f32 %v2817, %v2911
    %v2945 = vsel %vm1139, %v2912, 0
    %v2948 = vsel %vm1139, %v2913, 0
    %v2951 = vsel %vm1139, %v2914, 0
    %v2954 = vsel %vm1139, %v2915, 0
    %v2957 = vsel %vm1139, %v2916, 0
    %v2960 = vsel %vm1139, %v2917, 0
    %v2963 = vsel %vm1139, %v2918, 0
    %v2966 = vsel %vm1139, %v2919, 0
    %v2969 = vsel %vm1139, %v2920, 0
    %v2972 = vsel %vm1139, %v2921, 0
    %v2975 = vsel %vm1139, %v2922, 0
    %v2978 = vsel %vm1139, %v2923, 0
    %v2981 = vsel %vm1139, %v2924, 0
    %v2984 = vsel %vm1139, %v2925, 0
    %v2987 = vsel %vm1139, %v2926, 0
    %v2990 = vsel %vm1139, %v2927, 0
    %v2993 = vsel %vm1139, %v2928, 0
    %v2996 = vsel %vm1139, %v2929, 0
    %v2999 = vsel %vm1139, %v2930, 0
    %v3002 = vsel %vm1139, %v2931, 0
    %v3005 = vsel %vm1139, %v2932, 0
    %v3008 = vsel %vm1139, %v2933, 0
    %v3011 = vsel %vm1139, %v2934, 0
    %v3014 = vsel %vm1139, %v2935, 0
    %v3017 = vsel %vm1139, %v2936, 0
    %v3020 = vsel %vm1139, %v2937, 0
    %v3023 = vsel %vm1139, %v2938, 0
    %v3026 = vsel %vm1139, %v2939, 0
    %v3029 = vsel %vm1139, %v2940, 0
    %v3032 = vsel %vm1139, %v2941, 0
    %v3035 = vsel %vm1139, %v2942, 0
    %v3038 = vsel %vm1139, %v2943, 0
    %3040 = vmatpush.msra.mxu0 0.0
    %3041 = vmatpush.msra.mxu0 0.0
    %3042 = vmatpush.msra.mxu0 0.0
    %3043 = vmatpush.msra.mxu0 0.0
    %3044 = vmatpush.msra.mxu0 0.0
    %3045 = vmatpush.msra.mxu0 0.0
    %3046 = vmatpush.msra.mxu0 0.0
    %3047 = vmatpush.msra.mxu0 0.0
    %3048 = vmatpush.msra.mxu0 0.0
    %3049 = vmatpush.msra.mxu0 0.0
    %3050 = vmatpush.msra.mxu0 0.0
    %3051 = vmatpush.msra.mxu0 0.0
    %3052 = vmatpush.msra.mxu0 0.0
    %3053 = vmatpush.msra.mxu0 0.0
    %3054 = vmatpush.msra.mxu0 0.0
    %3055 = vmatpush.msra.mxu0 %v1714
    %3056 = vmatmul.f32.gmra.mxu0 %v2945
    %v3057 = vpop.f32.mrf.mxu0
    %v3058 = vadd.f32 0.0, %v3057
    %3059 = vmatmul.f32.gmra.mxu0 %v2948
    %v3060 = vpop.f32.mrf.mxu0
    %v3061 = vadd.f32 0.0, %v3060
    %3062 = vmatmul.f32.gmra.mxu0 %v2951
    %v3063 = vpop.f32.mrf.mxu0
    %v3064 = vadd.f32 0.0, %v3063
    %3065 = vmatmul.f32.gmra.mxu0 %v2954
    %v3066 = vpop.f32.mrf.mxu0
    %v3067 = vadd.f32 0.0, %v3066
    %3068 = vmatmul.f32.gmra.mxu0 %v2957
    %v3069 = vpop.f32.mrf.mxu0
    %v3070 = vadd.f32 0.0, %v3069
    %3071 = vmatmul.f32.gmra.mxu0 %v2960
    %v3072 = vpop.f32.mrf.mxu0
    %v3073 = vadd.f32 0.0, %v3072
    %3074 = vmatmul.f32.gmra.mxu0 %v2963
    %v3075 = vpop.f32.mrf.mxu0
    %v3076 = vadd.f32 0.0, %v3075
    %3077 = vmatmul.f32.gmra.mxu0 %v2966
    %v3078 = vpop.f32.mrf.mxu0
    %v3079 = vadd.f32 0.0, %v3078
    %3080 = vmatmul.f32.gmra.mxu0 %v2969
    %v3081 = vpop.f32.mrf.mxu0
    %v3082 = vadd.f32 0.0, %v3081
    %3083 = vmatmul.f32.gmra.mxu0 %v2972
    %v3084 = vpop.f32.mrf.mxu0
    %v3085 = vadd.f32 0.0, %v3084
    %3086 = vmatmul.f32.gmra.mxu0 %v2975
    %v3087 = vpop.f32.mrf.mxu0
    %v3088 = vadd.f32 0.0, %v3087
    %3089 = vmatmul.f32.gmra.mxu0 %v2978
    %v3090 = vpop.f32.mrf.mxu0
    %v3091 = vadd.f32 0.0, %v3090
    %3092 = vmatmul.f32.gmra.mxu0 %v2981
    %v3093 = vpop.f32.mrf.mxu0
    %v3094 = vadd.f32 0.0, %v3093
    %3095 = vmatmul.f32.gmra.mxu0 %v2984
    %v3096 = vpop.f32.mrf.mxu0
    %v3097 = vadd.f32 0.0, %v3096
    %3098 = vmatmul.f32.gmra.mxu0 %v2987
    %v3099 = vpop.f32.mrf.mxu0
    %v3100 = vadd.f32 0.0, %v3099
    %3101 = vmatmul.f32.gmra.mxu0 %v2990
    %v3102 = vpop.f32.mrf.mxu0
    %v3103 = vadd.f32 0.0, %v3102
    %3104 = vmatmul.f32.gmra.mxu0 %v2993
    %v3105 = vpop.f32.mrf.mxu0
    %v3106 = vadd.f32 0.0, %v3105
    %3107 = vmatmul.f32.gmra.mxu0 %v2996
    %v3108 = vpop.f32.mrf.mxu0
    %v3109 = vadd.f32 0.0, %v3108
    %3110 = vmatmul.f32.gmra.mxu0 %v2999
    %v3111 = vpop.f32.mrf.mxu0
    %v3112 = vadd.f32 0.0, %v3111
    %3113 = vmatmul.f32.gmra.mxu0 %v3002
    %v3114 = vpop.f32.mrf.mxu0
    %v3115 = vadd.f32 0.0, %v3114
    %3116 = vmatmul.f32.gmra.mxu0 %v3005
    %v3117 = vpop.f32.mrf.mxu0
    %v3118 = vadd.f32 0.0, %v3117
    %3119 = vmatmul.f32.gmra.mxu0 %v3008
    %v3120 = vpop.f32.mrf.mxu0
    %v3121 = vadd.f32 0.0, %v3120
    %3122 = vmatmul.f32.gmra.mxu0 %v3011
    %v3123 = vpop.f32.mrf.mxu0
    %v3124 = vadd.f32 0.0, %v3123
    %3125 = vmatmul.f32.gmra.mxu0 %v3014
    %v3126 = vpop.f32.mrf.mxu0
    %v3127 = vadd.f32 0.0, %v3126
    %3128 = vmatmul.f32.gmra.mxu0 %v3017
    %v3129 = vpop.f32.mrf.mxu0
    %v3130 = vadd.f32 0.0, %v3129
    %3131 = vmatmul.f32.gmra.mxu0 %v3020
    %v3132 = vpop.f32.mrf.mxu0
    %v3133 = vadd.f32 0.0, %v3132
    %3134 = vmatmul.f32.gmra.mxu0 %v3023
    %v3135 = vpop.f32.mrf.mxu0
    %v3136 = vadd.f32 0.0, %v3135
    %3137 = vmatmul.f32.gmra.mxu0 %v3026
    %v3138 = vpop.f32.mrf.mxu0
    %v3139 = vadd.f32 0.0, %v3138
    %3140 = vmatmul.f32.gmra.mxu0 %v3029
    %v3141 = vpop.f32.mrf.mxu0
    %v3142 = vadd.f32 0.0, %v3141
    %3143 = vmatmul.f32.gmra.mxu0 %v3032
    %v3144 = vpop.f32.mrf.mxu0
    %v3145 = vadd.f32 0.0, %v3144
    %3146 = vmatmul.f32.gmra.mxu0 %v3035
    %v3147 = vpop.f32.mrf.mxu0
    %v3148 = vadd.f32 0.0, %v3147
    %3149 = vmatmul.f32.gmra.mxu0 %v3038
    %v3150 = vpop.f32.mrf.mxu0
    %v3151 = vadd.f32 0.0, %v3150
    %3152 = vdwg.mxu0
    %v3155 = vrot.slane %v2093, 1
    %v3156 = vrot.slane %v2093, 2
    %v3157 = vrot.slane %v2093, 3
    %v3158 = vrot.slane %v2093, 4
    %v3159 = vrot.slane %v2093, 5
    %v3160 = vrot.slane %v2093, 6
    %v3161 = vrot.slane %v2093, 7
    %v3162 = vrot.slane %v2094, 1
    %v3163 = vrot.slane %v2094, 2
    %v3164 = vrot.slane %v2094, 3
    %v3165 = vrot.slane %v2094, 4
    %v3166 = vrot.slane %v2094, 5
    %v3167 = vrot.slane %v2094, 6
    %v3168 = vrot.slane %v2094, 7
    %v3169 = vperm.slane %v2093, 0
    %v3170 = vperm.slane %v3155, 0
    %v3171 = vperm.slane %v3156, 0
    %v3172 = vperm.slane %v3157, 0
    %v3173 = vperm.slane %v3158, 0
    %v3174 = vperm.slane %v3159, 0
    %v3175 = vperm.slane %v3160, 0
    %v3176 = vperm.slane %v3161, 0
    %v3177 = vperm.slane %v2094, 0
    %v3178 = vperm.slane %v3162, 0
    %v3179 = vperm.slane %v3163, 0
    %v3180 = vperm.slane %v3164, 0
    %v3181 = vperm.slane %v3165, 0
    %v3182 = vperm.slane %v3166, 0
    %v3183 = vperm.slane %v3167, 0
    %v3184 = vperm.slane %v3168, 0
    %v3201 = vmul.f32 %v3058, %v3169
    %v3202 = vmul.f32 %v3061, %v3169
    %v3203 = vmul.f32 %v3064, %v3170
    %v3204 = vmul.f32 %v3067, %v3170
    %v3205 = vmul.f32 %v3070, %v3171
    %v3206 = vmul.f32 %v3073, %v3171
    %v3207 = vmul.f32 %v3076, %v3172
    %v3208 = vmul.f32 %v3079, %v3172
    %v3209 = vmul.f32 %v3082, %v3173
    %v3210 = vmul.f32 %v3085, %v3173
    %v3211 = vmul.f32 %v3088, %v3174
    %v3212 = vmul.f32 %v3091, %v3174
    %v3213 = vmul.f32 %v3094, %v3175
    %v3214 = vmul.f32 %v3097, %v3175
    %v3215 = vmul.f32 %v3100, %v3176
    %v3216 = vmul.f32 %v3103, %v3176
    %v3217 = vmul.f32 %v3106, %v3177
    %v3218 = vmul.f32 %v3109, %v3177
    %v3219 = vmul.f32 %v3112, %v3178
    %v3220 = vmul.f32 %v3115, %v3178
    %v3221 = vmul.f32 %v3118, %v3179
    %v3222 = vmul.f32 %v3121, %v3179
    %v3223 = vmul.f32 %v3124, %v3180
    %v3224 = vmul.f32 %v3127, %v3180
    %v3225 = vmul.f32 %v3130, %v3181
    %v3226 = vmul.f32 %v3133, %v3181
    %v3227 = vmul.f32 %v3136, %v3182
    %v3228 = vmul.f32 %v3139, %v3182
    %v3229 = vmul.f32 %v3142, %v3183
    %v3230 = vmul.f32 %v3145, %v3183
    %v3231 = vmul.f32 %v3148, %v3184
    %v3232 = vmul.f32 %v3151, %v3184
    %v3233 = vadd.f32 %v3201, %v3203
    %v3234 = vadd.f32 %v3233, %v3205
    %v3235 = vadd.f32 %v3234, %v3207
    %v3236 = vadd.f32 %v3235, %v3209
    %v3237 = vadd.f32 %v3236, %v3211
    %v3238 = vadd.f32 %v3237, %v3213
    %v3239 = vadd.f32 %v3238, %v3215
    %v3240 = vadd.f32 %v3239, %v3217
    %v3241 = vadd.f32 %v3240, %v3219
    %v3242 = vadd.f32 %v3241, %v3221
    %v3243 = vadd.f32 %v3242, %v3223
    %v3244 = vadd.f32 %v3243, %v3225
    %v3245 = vadd.f32 %v3244, %v3227
    %v3246 = vadd.f32 %v3245, %v3229
    %v3247 = vadd.f32 %v3246, %v3231
    %v3248 = vadd.f32 %v3202, %v3204
    %v3249 = vadd.f32 %v3248, %v3206
    %v3250 = vadd.f32 %v3249, %v3208
    %v3251 = vadd.f32 %v3250, %v3210
    %v3252 = vadd.f32 %v3251, %v3212
    %v3253 = vadd.f32 %v3252, %v3214
    %v3254 = vadd.f32 %v3253, %v3216
    %v3255 = vadd.f32 %v3254, %v3218
    %v3256 = vadd.f32 %v3255, %v3220
    %v3257 = vadd.f32 %v3256, %v3222
    %v3258 = vadd.f32 %v3257, %v3224
    %v3259 = vadd.f32 %v3258, %v3226
    %v3260 = vadd.f32 %v3259, %v3228
    %v3261 = vadd.f32 %v3260, %v3230
    %v3262 = vadd.f32 %v3261, %v3232
    %v3263 = vld [vmem:[%s14] sm:$0xff]
    %v3264 = vld [vmem:[%s14 + $0x8] sm:$0xff]
    %v3265 = vld [vmem:[%s14 + $0x10] sm:$0xff]
    %v3266 = vld [vmem:[%s14 + $0x18] sm:$0xff]
    %v3267 = vld [vmem:[%s14 + $0x20] sm:$0xff]
    %v3268 = vld [vmem:[%s14 + $0x28] sm:$0xff]
    %v3269 = vld [vmem:[%s14 + $0x30] sm:$0xff]
    %v3270 = vld [vmem:[%s14 + $0x38] sm:$0xff]
    %v3271 = vld [vmem:[%s14 + $0x40] sm:$0xff]
    %v3272 = vld [vmem:[%s14 + $0x48] sm:$0xff]
    %v3273 = vld [vmem:[%s14 + $0x50] sm:$0xff]
    %v3274 = vld [vmem:[%s14 + $0x58] sm:$0xff]
    %v3275 = vld [vmem:[%s14 + $0x60] sm:$0xff]
    %v3276 = vld [vmem:[%s14 + $0x68] sm:$0xff]
    %v3277 = vld [vmem:[%s14 + $0x70] sm:$0xff]
    %v3278 = vld [vmem:[%s14 + $0x78] sm:$0xff]
    %v3279 = vld [vmem:[%s15] sm:$0x1]
    %v3281 = vperm.slane %v3279, 0
    %3283 = vmatpush.msra.mxu0 %v3278
    %3284 = vmatpush.msra.mxu0 %v3277
    %3285 = vmatpush.msra.mxu0 %v3276
    %3286 = vmatpush.msra.mxu0 %v3275
    %3287 = vmatpush.msra.mxu0 %v3274
    %3288 = vmatpush.msra.mxu0 %v3273
    %3289 = vmatpush.msra.mxu0 %v3272
    %3290 = vmatpush.msra.mxu0 %v3271
    %3291 = vmatpush.msra.mxu0 %v3270
    %3292 = vmatpush.msra.mxu0 %v3269
    %3293 = vmatpush.msra.mxu0 %v3268
    %3294 = vmatpush.msra.mxu0 %v3267
    %3295 = vmatpush.msra.mxu0 %v3266
    %3296 = vmatpush.msra.mxu0 %v3265
    %3297 = vmatpush.msra.mxu0 %v3264
    %3298 = vmatpush.msra.mxu0 %v3263
    %3299 = vmatmul.f32.gmra.mxu0 %v3247
    %v3300 = vpop.f32.mrf.mxu0
    %v3301 = vadd.f32 %v3281, %v3300
    %3302 = vmatmul.f32.gmra.mxu0 %v3262
    %v3303 = vpop.f32.mrf.mxu0
    %v3304 = vadd.f32 %v3281, %v3303
    %3305 = vdwg.mxu0
    %v3306 = vmul.f32 %v3301, 0.5
    %v3307 = vmul.f32 %v3304, 0.5
    %v3308 = vmul.f32 %v3301, 0.044715
    %v3309 = vmul.f32 %v3304, 0.044715
    %v3310 = vmul.f32 %v3308, %v3301
    %v3311 = vmul.f32 %v3309, %v3304
    %v3312 = vmul.f32 %v3310, %v3301
    %v3313 = vmul.f32 %v3311, %v3304
    %v3314 = vadd.f32 %v3301, %v3312
    %v3315 = vadd.f32 %v3304, %v3313
    %v3316 = vmul.f32 %v3314, 0.7978846
    %v3317 = vmul.f32 %v3315, 0.7978846
    %v3318 = vtanh.pop %v3316
    %v3319 = vtanh.pop %v3317
    %v3320 = vadd.f32 %v3318, 1.0
    %v3321 = vadd.f32 %v3319, 1.0
    %v3322 = vmul.f32 %v3306, %v3320
    %v3323 = vmul.f32 %v3307, %v3321
    %v3324 = vld [vmem:[%s16] sm:$0xf]
    %v3325 = vld [vmem:[%s16 + $0x4] sm:$0xf]
    %v3326 = vld [vmem:[%s16 + $0x8] sm:$0xf]
    %v3327 = vld [vmem:[%s16 + $0xc] sm:$0xf]
    %v3328 = vld [vmem:[%s16 + $0x10] sm:$0xf]
    %v3329 = vld [vmem:[%s16 + $0x14] sm:$0xf]
    %v3330 = vld [vmem:[%s16 + $0x18] sm:$0xf]
    %v3331 = vld [vmem:[%s16 + $0x1c] sm:$0xf]
    %v3332 = vld [vmem:[%s16 + $0x20] sm:$0xf]
    %v3333 = vld [vmem:[%s16 + $0x24] sm:$0xf]
    %v3334 = vld [vmem:[%s16 + $0x28] sm:$0xf]
    %v3335 = vld [vmem:[%s16 + $0x2c] sm:$0xf]
    %v3336 = vld [vmem:[%s16 + $0x30] sm:$0xf]
    %v3337 = vld [vmem:[%s16 + $0x34] sm:$0xf]
    %v3338 = vld [vmem:[%s16 + $0x38] sm:$0xf]
    %v3339 = vld [vmem:[%s16 + $0x3c] sm:$0xf]
    %v3340 = vld [vmem:[%s17] sm:$0x1]
    %v3342 = vperm.slane %v3340, 0
    %v3360 = vunpack.c.l.b16 %v3324
    %v3361 = vunpack.c.l.b16 %v3325
    %v3362 = vunpack.c.l.b16 %v3326
    %v3363 = vunpack.c.l.b16 %v3327
    %v3364 = vunpack.c.l.b16 %v3328
    %v3365 = vunpack.c.l.b16 %v3329
    %v3366 = vunpack.c.l.b16 %v3330
    %v3367 = vunpack.c.l.b16 %v3331
    %v3368 = vunpack.c.l.b16 %v3332
    %v3369 = vunpack.c.l.b16 %v3333
    %v3370 = vunpack.c.l.b16 %v3334
    %v3371 = vunpack.c.l.b16 %v3335
    %v3372 = vunpack.c.l.b16 %v3336
    %v3373 = vunpack.c.l.b16 %v3337
    %v3374 = vunpack.c.l.b16 %v3338
    %v3375 = vunpack.c.l.b16 %v3339
    %v3376 = vpack.c.b16 %v3361, %v3360
    %v3377 = vpack.c.b16 %v3363, %v3362
    %v3378 = vpack.c.b16 %v3365, %v3364
    %v3379 = vpack.c.b16 %v3367, %v3366
    %v3380 = vpack.c.b16 %v3369, %v3368
    %v3381 = vpack.c.b16 %v3371, %v3370
    %v3382 = vpack.c.b16 %v3373, %v3372
    %v3383 = vpack.c.b16 %v3375, %v3374
    %3392 = vmatpush.bf16.msra.mxu0 %v3383
    %3393 = vmatpush.bf16.msra.mxu0 %v3382
    %3394 = vmatpush.bf16.msra.mxu0 %v3381
    %3395 = vmatpush.bf16.msra.mxu0 %v3380
    %3396 = vmatpush.bf16.msra.mxu0 %v3379
    %3397 = vmatpush.bf16.msra.mxu0 %v3378
    %3398 = vmatpush.bf16.msra.mxu0 %v3377
    %3399 = vmatpush.bf16.msra.mxu0 %v3376
    %3400 = vmatmul.bf16.gmra.mxu0 %v2443
    %v3401 = vpop.f32.mrf.mxu0
    %v3402 = vadd.f32 %v3342, %v3401
    %v3403 = vpop.f32.mrf.mxu0
    %v3404 = vadd.f32 %v3342, %v3403
    %3405 = vmatmul.bf16.gmra.mxu0 %v2444
    %v3406 = vpop.f32.mrf.mxu0
    %v3407 = vadd.f32 %v3342, %v3406
    %v3408 = vpop.f32.mrf.mxu0
    %v3409 = vadd.f32 %v3342, %v3408
    %3410 = vmatmul.bf16.gmra.mxu0 %v2445
    %v3411 = vpop.f32.mrf.mxu0
    %v3412 = vadd.f32 %v3342, %v3411
    %v3413 = vpop.f32.mrf.mxu0
    %v3414 = vadd.f32 %v3342, %v3413
    %3415 = vmatmul.bf16.gmra.mxu0 %v2446
    %v3416 = vpop.f32.mrf.mxu0
    %v3417 = vadd.f32 %v3342, %v3416
    %v3418 = vpop.f32.mrf.mxu0
    %v3419 = vadd.f32 %v3342, %v3418
    %3420 = vmatmul.bf16.gmra.mxu0 %v2447
    %v3421 = vpop.f32.mrf.mxu0
    %v3422 = vadd.f32 %v3342, %v3421
    %v3423 = vpop.f32.mrf.mxu0
    %v3424 = vadd.f32 %v3342, %v3423
    %3425 = vmatmul.bf16.gmra.mxu0 %v2448
    %v3426 = vpop.f32.mrf.mxu0
    %v3427 = vadd.f32 %v3342, %v3426
    %v3428 = vpop.f32.mrf.mxu0
    %v3429 = vadd.f32 %v3342, %v3428
    %3430 = vmatmul.bf16.gmra.mxu0 %v2449
    %v3431 = vpop.f32.mrf.mxu0
    %v3432 = vadd.f32 %v3342, %v3431
    %v3433 = vpop.f32.mrf.mxu0
    %v3434 = vadd.f32 %v3342, %v3433
    %3435 = vmatmul.bf16.gmra.mxu0 %v2450
    %v3436 = vpop.f32.mrf.mxu0
    %v3437 = vadd.f32 %v3342, %v3436
    %v3438 = vpop.f32.mrf.mxu0
    %v3439 = vadd.f32 %v3342, %v3438
    %3440 = vmatmul.bf16.gmra.mxu0 %v2451
    %v3441 = vpop.f32.mrf.mxu0
    %v3442 = vadd.f32 %v3342, %v3441
    %v3443 = vpop.f32.mrf.mxu0
    %v3444 = vadd.f32 %v3342, %v3443
    %3445 = vmatmul.bf16.gmra.mxu0 %v2452
    %v3446 = vpop.f32.mrf.mxu0
    %v3447 = vadd.f32 %v3342, %v3446
    %v3448 = vpop.f32.mrf.mxu0
    %v3449 = vadd.f32 %v3342, %v3448
    %3450 = vmatmul.bf16.gmra.mxu0 %v2453
    %v3451 = vpop.f32.mrf.mxu0
    %v3452 = vadd.f32 %v3342, %v3451
    %v3453 = vpop.f32.mrf.mxu0
    %v3454 = vadd.f32 %v3342, %v3453
    %3455 = vmatmul.bf16.gmra.mxu0 %v2454
    %v3456 = vpop.f32.mrf.mxu0
    %v3457 = vadd.f32 %v3342, %v3456
    %v3458 = vpop.f32.mrf.mxu0
    %v3459 = vadd.f32 %v3342, %v3458
    %3460 = vmatmul.bf16.gmra.mxu0 %v2455
    %v3461 = vpop.f32.mrf.mxu0
    %v3462 = vadd.f32 %v3342, %v3461
    %v3463 = vpop.f32.mrf.mxu0
    %v3464 = vadd.f32 %v3342, %v3463
    %3465 = vmatmul.bf16.gmra.mxu0 %v2456
    %v3466 = vpop.f32.mrf.mxu0
    %v3467 = vadd.f32 %v3342, %v3466
    %v3468 = vpop.f32.mrf.mxu0
    %v3469 = vadd.f32 %v3342, %v3468
    %3470 = vmatmul.bf16.gmra.mxu0 %v2457
    %v3471 = vpop.f32.mrf.mxu0
    %v3472 = vadd.f32 %v3342, %v3471
    %v3473 = vpop.f32.mrf.mxu0
    %v3474 = vadd.f32 %v3342, %v3473
    %3475 = vmatmul.bf16.gmra.mxu0 %v2458
    %v3476 = vpop.f32.mrf.mxu0
    %v3477 = vadd.f32 %v3342, %v3476
    %v3478 = vpop.f32.mrf.mxu0
    %v3479 = vadd.f32 %v3342, %v3478
    %3480 = vdwg.mxu0
    %v3481 = vmul.f32 %v3402, 0.5
    %v3482 = vmul.f32 %v3404, 0.5
    %v3483 = vmul.f32 %v3407, 0.5
    %v3484 = vmul.f32 %v3409, 0.5
    %v3485 = vmul.f32 %v3412, 0.5
    %v3486 = vmul.f32 %v3414, 0.5
    %v3487 = vmul.f32 %v3417, 0.5
    %v3488 = vmul.f32 %v3419, 0.5
    %v3489 = vmul.f32 %v3422, 0.5
    %v3490 = vmul.f32 %v3424, 0.5
    %v3491 = vmul.f32 %v3427, 0.5
    %v3492 = vmul.f32 %v3429, 0.5
    %v3493 = vmul.f32 %v3432, 0.5
    %v3494 = vmul.f32 %v3434, 0.5
    %v3495 = vmul.f32 %v3437, 0.5
    %v3496 = vmul.f32 %v3439, 0.5
    %v3497 = vmul.f32 %v3442, 0.5
    %v3498 = vmul.f32 %v3444, 0.5
    %v3499 = vmul.f32 %v3447, 0.5
    %v3500 = vmul.f32 %v3449, 0.5
    %v3501 = vmul.f32 %v3452, 0.5
    %v3502 = vmul.f32 %v3454, 0.5
    %v3503 = vmul.f32 %v3457, 0.5
    %v3504 = vmul.f32 %v3459, 0.5
    %v3505 = vmul.f32 %v3462, 0.5
    %v3506 = vmul.f32 %v3464, 0.5
    %v3507 = vmul.f32 %v3467, 0.5
    %v3508 = vmul.f32 %v3469, 0.5
    %v3509 = vmul.f32 %v3472, 0.5
    %v3510 = vmul.f32 %v3474, 0.5
    %v3511 = vmul.f32 %v3477, 0.5
    %v3512 = vmul.f32 %v3479, 0.5
    %v3513 = vmul.f32 %v3402, 0.044715
    %v3514 = vmul.f32 %v3404, 0.044715
    %v3515 = vmul.f32 %v3407, 0.044715
    %v3516 = vmul.f32 %v3409, 0.044715
    %v3517 = vmul.f32 %v3412, 0.044715
    %v3518 = vmul.f32 %v3414, 0.044715
    %v3519 = vmul.f32 %v3417, 0.044715
    %v3520 = vmul.f32 %v3419, 0.044715
    %v3521 = vmul.f32 %v3422, 0.044715
    %v3522 = vmul.f32 %v3424, 0.044715
    %v3523 = vmul.f32 %v3427, 0.044715
    %v3524 = vmul.f32 %v3429, 0.044715
    %v3525 = vmul.f32 %v3432, 0.044715
    %v3526 = vmul.f32 %v3434, 0.044715
    %v3527 = vmul.f32 %v3437, 0.044715
    %v3528 = vmul.f32 %v3439, 0.044715
    %v3529 = vmul.f32 %v3442, 0.044715
    %v3530 = vmul.f32 %v3444, 0.044715
    %v3531 = vmul.f32 %v3447, 0.044715
    %v3532 = vmul.f32 %v3449, 0.044715
    %v3533 = vmul.f32 %v3452, 0.044715
    %v3534 = vmul.f32 %v3454, 0.044715
    %v3535 = vmul.f32 %v3457, 0.044715
    %v3536 = vmul.f32 %v3459, 0.044715
    %v3537 = vmul.f32 %v3462, 0.044715
    %v3538 = vmul.f32 %v3464, 0.044715
    %v3539 = vmul.f32 %v3467, 0.044715
    %v3540 = vmul.f32 %v3469, 0.044715
    %v3541 = vmul.f32 %v3472, 0.044715
    %v3542 = vmul.f32 %v3474, 0.044715
    %v3543 = vmul.f32 %v3477, 0.044715
    %v3544 = vmul.f32 %v3479, 0.044715
    %v3545 = vmul.f32 %v3513, %v3402
    %v3546 = vmul.f32 %v3514, %v3404
    %v3547 = vmul.f32 %v3515, %v3407
    %v3548 = vmul.f32 %v3516, %v3409
    %v3549 = vmul.f32 %v3517, %v3412
    %v3550 = vmul.f32 %v3518, %v3414
    %v3551 = vmul.f32 %v3519, %v3417
    %v3552 = vmul.f32 %v3520, %v3419
    %v3553 = vmul.f32 %v3521, %v3422
    %v3554 = vmul.f32 %v3522, %v3424
    %v3555 = vmul.f32 %v3523, %v3427
    %v3556 = vmul.f32 %v3524, %v3429
    %v3557 = vmul.f32 %v3525, %v3432
    %v3558 = vmul.f32 %v3526, %v3434
    %v3559 = vmul.f32 %v3527, %v3437
    %v3560 = vmul.f32 %v3528, %v3439
    %v3561 = vmul.f32 %v3529, %v3442
    %v3562 = vmul.f32 %v3530, %v3444
    %v3563 = vmul.f32 %v3531, %v3447
    %v3564 = vmul.f32 %v3532, %v3449
    %v3565 = vmul.f32 %v3533, %v3452
    %v3566 = vmul.f32 %v3534, %v3454
    %v3567 = vmul.f32 %v3535, %v3457
    %v3568 = vmul.f32 %v3536, %v3459
    %v3569 = vmul.f32 %v3537, %v3462
    %v3570 = vmul.f32 %v3538, %v3464
    %v3571 = vmul.f32 %v3539, %v3467
    %v3572 = vmul.f32 %v3540, %v3469
    %v3573 = vmul.f32 %v3541, %v3472
    %v3574 = vmul.f32 %v3542, %v3474
    %v3575 = vmul.f32 %v3543, %v3477
    %v3576 = vmul.f32 %v3544, %v3479
    %v3577 = vmul.f32 %v3545, %v3402
    %v3578 = vmul.f32 %v3546, %v3404
    %v3579 = vmul.f32 %v3547, %v3407
    %v3580 = vmul.f32 %v3548, %v3409
    %v3581 = vmul.f32 %v3549, %v3412
    %v3582 = vmul.f32 %v3550, %v3414
    %v3583 = vmul.f32 %v3551, %v3417
    %v3584 = vmul.f32 %v3552, %v3419
    %v3585 = vmul.f32 %v3553, %v3422
    %v3586 = vmul.f32 %v3554, %v3424
    %v3587 = vmul.f32 %v3555, %v3427
    %v3588 = vmul.f32 %v3556, %v3429
    %v3589 = vmul.f32 %v3557, %v3432
    %v3590 = vmul.f32 %v3558, %v3434
    %v3591 = vmul.f32 %v3559, %v3437
    %v3592 = vmul.f32 %v3560, %v3439
    %v3593 = vmul.f32 %v3561, %v3442
    %v3594 = vmul.f32 %v3562, %v3444
    %v3595 = vmul.f32 %v3563, %v3447
    %v3596 = vmul.f32 %v3564, %v3449
    %v3597 = vmul.f32 %v3565, %v3452
    %v3598 = vmul.f32 %v3566, %v3454
    %v3599 = vmul.f32 %v3567, %v3457
    %v3600 = vmul.f32 %v3568, %v3459
    %v3601 = vmul.f32 %v3569, %v3462
    %v3602 = vmul.f32 %v3570, %v3464
    %v3603 = vmul.f32 %v3571, %v3467
    %v3604 = vmul.f32 %v3572, %v3469
    %v3605 = vmul.f32 %v3573, %v3472
    %v3606 = vmul.f32 %v3574, %v3474
    %v3607 = vmul.f32 %v3575, %v3477
    %v3608 = vmul.f32 %v3576, %v3479
    %v3609 = vadd.f32 %v3402, %v3577
    %v3610 = vadd.f32 %v3404, %v3578
    %v3611 = vadd.f32 %v3407, %v3579
    %v3612 = vadd.f32 %v3409, %v3580
    %v3613 = vadd.f32 %v3412, %v3581
    %v3614 = vadd.f32 %v3414, %v3582
    %v3615 = vadd.f32 %v3417, %v3583
    %v3616 = vadd.f32 %v3419, %v3584
    %v3617 = vadd.f32 %v3422, %v3585
    %v3618 = vadd.f32 %v3424, %v3586
    %v3619 = vadd.f32 %v3427, %v3587
    %v3620 = vadd.f32 %v3429, %v3588
    %v3621 = vadd.f32 %v3432, %v3589
    %v3622 = vadd.f32 %v3434, %v3590
    %v3623 = vadd.f32 %v3437, %v3591
    %v3624 = vadd.f32 %v3439, %v3592
    %v3625 = vadd.f32 %v3442, %v3593
    %v3626 = vadd.f32 %v3444, %v3594
    %v3627 = vadd.f32 %v3447, %v3595
    %v3628 = vadd.f32 %v3449, %v3596
    %v3629 = vadd.f32 %v3452, %v3597
    %v3630 = vadd.f32 %v3454, %v3598
    %v3631 = vadd.f32 %v3457, %v3599
    %v3632 = vadd.f32 %v3459, %v3600
    %v3633 = vadd.f32 %v3462, %v3601
    %v3634 = vadd.f32 %v3464, %v3602
    %v3635 = vadd.f32 %v3467, %v3603
    %v3636 = vadd.f32 %v3469, %v3604
    %v3637 = vadd.f32 %v3472, %v3605
    %v3638 = vadd.f32 %v3474, %v3606
    %v3639 = vadd.f32 %v3477, %v3607
    %v3640 = vadd.f32 %v3479, %v3608
    %v3641 = vmul.f32 %v3609, 0.7978846
    %v3642 = vmul.f32 %v3610, 0.7978846
    %v3643 = vmul.f32 %v3611, 0.7978846
    %v3644 = vmul.f32 %v3612, 0.7978846
    %v3645 = vmul.f32 %v3613, 0.7978846
    %v3646 = vmul.f32 %v3614, 0.7978846
    %v3647 = vmul.f32 %v3615, 0.7978846
    %v3648 = vmul.f32 %v3616, 0.7978846
    %v3649 = vmul.f32 %v3617, 0.7978846
    %v3650 = vmul.f32 %v3618, 0.7978846
    %v3651 = vmul.f32 %v3619, 0.7978846
    %v3652 = vmul.f32 %v3620, 0.7978846
    %v3653 = vmul.f32 %v3621, 0.7978846
    %v3654 = vmul.f32 %v3622, 0.7978846
    %v3655 = vmul.f32 %v3623, 0.7978846
    %v3656 = vmul.f32 %v3624, 0.7978846
    %v3657 = vmul.f32 %v3625, 0.7978846
    %v3658 = vmul.f32 %v3626, 0.7978846
    %v3659 = vmul.f32 %v3627, 0.7978846
    %v3660 = vmul.f32 %v3628, 0.7978846
    %v3661 = vmul.f32 %v3629, 0.7978846
    %v3662 = vmul.f32 %v3630, 0.7978846
    %v3663 = vmul.f32 %v3631, 0.7978846
    %v3664 = vmul.f32 %v3632, 0.7978846
    %v3665 = vmul.f32 %v3633, 0.7978846
    %v3666 = vmul.f32 %v3634, 0.7978846
    %v3667 = vmul.f32 %v3635, 0.7978846
    %v3668 = vmul.f32 %v3636, 0.7978846
    %v3669 = vmul.f32 %v3637, 0.7978846
    %v3670 = vmul.f32 %v3638, 0.7978846
    %v3671 = vmul.f32 %v3639, 0.7978846
    %v3672 = vmul.f32 %v3640, 0.7978846
    %v3673 = vtanh.pop %v3641
    %v3674 = vtanh.pop %v3642
    %v3675 = vtanh.pop %v3643
    %v3676 = vtanh.pop %v3644
    %v3677 = vtanh.pop %v3645
    %v3678 = vtanh.pop %v3646
    %v3679 = vtanh.pop %v3647
    %v3680 = vtanh.pop %v3648
    %v3681 = vtanh.pop %v3649
    %v3682 = vtanh.pop %v3650
    %v3683 = vtanh.pop %v3651
    %v3684 = vtanh.pop %v3652
    %v3685 = vtanh.pop %v3653
    %v3686 = vtanh.pop %v3654
    %v3687 = vtanh.pop %v3655
    %v3688 = vtanh.pop %v3656
    %v3689 = vtanh.pop %v3657
    %v3690 = vtanh.pop %v3658
    %v3691 = vtanh.pop %v3659
    %v3692 = vtanh.pop %v3660
    %v3693 = vtanh.pop %v3661
    %v3694 = vtanh.pop %v3662
    %v3695 = vtanh.pop %v3663
    %v3696 = vtanh.pop %v3664
    %v3697 = vtanh.pop %v3665
    %v3698 = vtanh.pop %v3666
    %v3699 = vtanh.pop %v3667
    %v3700 = vtanh.pop %v3668
    %v3701 = vtanh.pop %v3669
    %v3702 = vtanh.pop %v3670
    %v3703 = vtanh.pop %v3671
    %v3704 = vtanh.pop %v3672
    %v3705 = vadd.f32 %v3673, 1.0
    %v3706 = vadd.f32 %v3674, 1.0
    %v3707 = vadd.f32 %v3675, 1.0
    %v3708 = vadd.f32 %v3676, 1.0
    %v3709 = vadd.f32 %v3677, 1.0
    %v3710 = vadd.f32 %v3678, 1.0
    %v3711 = vadd.f32 %v3679, 1.0
    %v3712 = vadd.f32 %v3680, 1.0
    %v3713 = vadd.f32 %v3681, 1.0
    %v3714 = vadd.f32 %v3682, 1.0
    %v3715 = vadd.f32 %v3683, 1.0
    %v3716 = vadd.f32 %v3684, 1.0
    %v3717 = vadd.f32 %v3685, 1.0
    %v3718 = vadd.f32 %v3686, 1.0
    %v3719 = vadd.f32 %v3687, 1.0
    %v3720 = vadd.f32 %v3688, 1.0
    %v3721 = vadd.f32 %v3689, 1.0
    %v3722 = vadd.f32 %v3690, 1.0
    %v3723 = vadd.f32 %v3691, 1.0
    %v3724 = vadd.f32 %v3692, 1.0
    %v3725 = vadd.f32 %v3693, 1.0
    %v3726 = vadd.f32 %v3694, 1.0
    %v3727 = vadd.f32 %v3695, 1.0
    %v3728 = vadd.f32 %v3696, 1.0
    %v3729 = vadd.f32 %v3697, 1.0
    %v3730 = vadd.f32 %v3698, 1.0
    %v3731 = vadd.f32 %v3699, 1.0
    %v3732 = vadd.f32 %v3700, 1.0
    %v3733 = vadd.f32 %v3701, 1.0
    %v3734 = vadd.f32 %v3702, 1.0
    %v3735 = vadd.f32 %v3703, 1.0
    %v3736 = vadd.f32 %v3704, 1.0
    %v3737 = vmul.f32 %v3481, %v3705
    %v3738 = vmul.f32 %v3482, %v3706
    %v3739 = vmul.f32 %v3483, %v3707
    %v3740 = vmul.f32 %v3484, %v3708
    %v3741 = vmul.f32 %v3485, %v3709
    %v3742 = vmul.f32 %v3486, %v3710
    %v3743 = vmul.f32 %v3487, %v3711
    %v3744 = vmul.f32 %v3488, %v3712
    %v3745 = vmul.f32 %v3489, %v3713
    %v3746 = vmul.f32 %v3490, %v3714
    %v3747 = vmul.f32 %v3491, %v3715
    %v3748 = vmul.f32 %v3492, %v3716
    %v3749 = vmul.f32 %v3493, %v3717
    %v3750 = vmul.f32 %v3494, %v3718
    %v3751 = vmul.f32 %v3495, %v3719
    %v3752 = vmul.f32 %v3496, %v3720
    %v3753 = vmul.f32 %v3497, %v3721
    %v3754 = vmul.f32 %v3498, %v3722
    %v3755 = vmul.f32 %v3499, %v3723
    %v3756 = vmul.f32 %v3500, %v3724
    %v3757 = vmul.f32 %v3501, %v3725
    %v3758 = vmul.f32 %v3502, %v3726
    %v3759 = vmul.f32 %v3503, %v3727
    %v3760 = vmul.f32 %v3504, %v3728
    %v3761 = vmul.f32 %v3505, %v3729
    %v3762 = vmul.f32 %v3506, %v3730
    %v3763 = vmul.f32 %v3507, %v3731
    %v3764 = vmul.f32 %v3508, %v3732
    %v3765 = vmul.f32 %v3509, %v3733
    %v3766 = vmul.f32 %v3510, %v3734
    %v3767 = vmul.f32 %v3511, %v3735
    %v3768 = vmul.f32 %v3512, %v3736
    %v3769 = vmul.f32 %v3737, %v1301
    %v3770 = vmul.f32 %v3738, %v1306
    %v3771 = vmul.f32 %v3739, %v1311
    %v3772 = vmul.f32 %v3740, %v1316
    %v3773 = vmul.f32 %v3741, %v1321
    %v3774 = vmul.f32 %v3742, %v1326
    %v3775 = vmul.f32 %v3743, %v1331
    %v3776 = vmul.f32 %v3744, %v1336
    %v3777 = vmul.f32 %v3745, %v1341
    %v3778 = vmul.f32 %v3746, %v1346
    %v3779 = vmul.f32 %v3747, %v1351
    %v3780 = vmul.f32 %v3748, %v1356
    %v3781 = vmul.f32 %v3749, %v1361
    %v3782 = vmul.f32 %v3750, %v1366
    %v3783 = vmul.f32 %v3751, %v1371
    %v3784 = vmul.f32 %v3752, %v1376
    %v3785 = vmul.f32 %v3753, %v1381
    %v3786 = vmul.f32 %v3754, %v1386
    %v3787 = vmul.f32 %v3755, %v1391
    %v3788 = vmul.f32 %v3756, %v1396
    %v3789 = vmul.f32 %v3757, %v1401
    %v3790 = vmul.f32 %v3758, %v1406
    %v3791 = vmul.f32 %v3759, %v1411
    %v3792 = vmul.f32 %v3760, %v1416
    %v3793 = vmul.f32 %v3761, %v1421
    %v3794 = vmul.f32 %v3762, %v1426
    %v3795 = vmul.f32 %v3763, %v1431
    %v3796 = vmul.f32 %v3764, %v1436
    %v3797 = vmul.f32 %v3765, %v1441
    %v3798 = vmul.f32 %v3766, %v1446
    %v3799 = vmul.f32 %v3767, %v1451
    %v3800 = vmul.f32 %v3768, %v1456
    %v3801 = vadd.f32 %v3769, %v3770
    %v3802 = vrot.slane %v3801, 4
    %v3803 = vadd.f32 %v3801, %v3802
    %v3804 = vrot.slane %v3803, 2
    %v3805 = vadd.f32 %v3803, %v3804
    %v3806 = vrot.slane %v3805, 1
    %v3807 = vadd.f32 %v3805, %v3806
    %v3808 = vadd.f32 %v3771, %v3772
    %v3809 = vrot.slane %v3808, 4
    %v3810 = vadd.f32 %v3808, %v3809
    %v3811 = vrot.slane %v3810, 2
    %v3812 = vadd.f32 %v3810, %v3811
    %v3813 = vrot.slane %v3812, 1
    %v3814 = vadd.f32 %v3812, %v3813
    %v3815 = vadd.f32 %v3773, %v3774
    %v3816 = vrot.slane %v3815, 4
    %v3817 = vadd.f32 %v3815, %v3816
    %v3818 = vrot.slane %v3817, 2
    %v3819 = vadd.f32 %v3817, %v3818
    %v3820 = vrot.slane %v3819, 1
    %v3821 = vadd.f32 %v3819, %v3820
    %v3822 = vadd.f32 %v3775, %v3776
    %v3823 = vrot.slane %v3822, 4
    %v3824 = vadd.f32 %v3822, %v3823
    %v3825 = vrot.slane %v3824, 2
    %v3826 = vadd.f32 %v3824, %v3825
    %v3827 = vrot.slane %v3826, 1
    %v3828 = vadd.f32 %v3826, %v3827
    %v3829 = vadd.f32 %v3777, %v3778
    %v3830 = vrot.slane %v3829, 4
    %v3831 = vadd.f32 %v3829, %v3830
    %v3832 = vrot.slane %v3831, 2
    %v3833 = vadd.f32 %v3831, %v3832
    %v3834 = vrot.slane %v3833, 1
    %v3835 = vadd.f32 %v3833, %v3834
    %v3836 = vadd.f32 %v3779, %v3780
    %v3837 = vrot.slane %v3836, 4
    %v3838 = vadd.f32 %v3836, %v3837
    %v3839 = vrot.slane %v3838, 2
    %v3840 = vadd.f32 %v3838, %v3839
    %v3841 = vrot.slane %v3840, 1
    %v3842 = vadd.f32 %v3840, %v3841
    %v3843 = vadd.f32 %v3781, %v3782
    %v3844 = vrot.slane %v3843, 4
    %v3845 = vadd.f32 %v3843, %v3844
    %v3846 = vrot.slane %v3845, 2
    %v3847 = vadd.f32 %v3845, %v3846
    %v3848 = vrot.slane %v3847, 1
    %v3849 = vadd.f32 %v3847, %v3848
    %v3850 = vadd.f32 %v3783, %v3784
    %v3851 = vrot.slane %v3850, 4
    %v3852 = vadd.f32 %v3850, %v3851
    %v3853 = vrot.slane %v3852, 2
    %v3854 = vadd.f32 %v3852, %v3853
    %v3855 = vrot.slane %v3854, 1
    %v3856 = vadd.f32 %v3854, %v3855
    %v3857 = vadd.f32 %v3785, %v3786
    %v3858 = vrot.slane %v3857, 4
    %v3859 = vadd.f32 %v3857, %v3858
    %v3860 = vrot.slane %v3859, 2
    %v3861 = vadd.f32 %v3859, %v3860
    %v3862 = vrot.slane %v3861, 1
    %v3863 = vadd.f32 %v3861, %v3862
    %v3864 = vadd.f32 %v3787, %v3788
    %v3865 = vrot.slane %v3864, 4
    %v3866 = vadd.f32 %v3864, %v3865
    %v3867 = vrot.slane %v3866, 2
    %v3868 = vadd.f32 %v3866, %v3867
    %v3869 = vrot.slane %v3868, 1
    %v3870 = vadd.f32 %v3868, %v3869
    %v3871 = vadd.f32 %v3789, %v3790
    %v3872 = vrot.slane %v3871, 4
    %v3873 = vadd.f32 %v3871, %v3872
    %v3874 = vrot.slane %v3873, 2
    %v3875 = vadd.f32 %v3873, %v3874
    %v3876 = vrot.slane %v3875, 1
    %v3877 = vadd.f32 %v3875, %v3876
    %v3878 = vadd.f32 %v3791, %v3792
    %v3879 = vrot.slane %v3878, 4
    %v3880 = vadd.f32 %v3878, %v3879
    %v3881 = vrot.slane %v3880, 2
    %v3882 = vadd.f32 %v3880, %v3881
    %v3883 = vrot.slane %v3882, 1
    %v3884 = vadd.f32 %v3882, %v3883
    %v3885 = vadd.f32 %v3793, %v3794
    %v3886 = vrot.slane %v3885, 4
    %v3887 = vadd.f32 %v3885, %v3886
    %v3888 = vrot.slane %v3887, 2
    %v3889 = vadd.f32 %v3887, %v3888
    %v3890 = vrot.slane %v3889, 1
    %v3891 = vadd.f32 %v3889, %v3890
    %v3892 = vadd.f32 %v3795, %v3796
    %v3893 = vrot.slane %v3892, 4
    %v3894 = vadd.f32 %v3892, %v3893
    %v3895 = vrot.slane %v3894, 2
    %v3896 = vadd.f32 %v3894, %v3895
    %v3897 = vrot.slane %v3896, 1
    %v3898 = vadd.f32 %v3896, %v3897
    %v3899 = vadd.f32 %v3797, %v3798
    %v3900 = vrot.slane %v3899, 4
    %v3901 = vadd.f32 %v3899, %v3900
    %v3902 = vrot.slane %v3901, 2
    %v3903 = vadd.f32 %v3901, %v3902
    %v3904 = vrot.slane %v3903, 1
    %v3905 = vadd.f32 %v3903, %v3904
    %v3906 = vadd.f32 %v3799, %v3800
    %v3907 = vrot.slane %v3906, 4
    %v3908 = vadd.f32 %v3906, %v3907
    %v3909 = vrot.slane %v3908, 2
    %v3910 = vadd.f32 %v3908, %v3909
    %v3911 = vrot.slane %v3910, 1
    %v3912 = vadd.f32 %v3910, %v3911
    %v3913 = vld [vmem:[%s3] sm:$0x3]
    %v3915 = vsel %vm282, %v3913, 0
    %3917 = vmatpush.msra.mxu0 0.0
    %3918 = vmatpush.msra.mxu0 0.0
    %3919 = vmatpush.msra.mxu0 0.0
    %3920 = vmatpush.msra.mxu0 0.0
    %3921 = vmatpush.msra.mxu0 0.0
    %3922 = vmatpush.msra.mxu0 0.0
    %3923 = vmatpush.msra.mxu0 0.0
    %3924 = vmatpush.msra.mxu0 0.0
    %3925 = vmatpush.msra.mxu0 0.0
    %3926 = vmatpush.msra.mxu0 0.0
    %3927 = vmatpush.msra.mxu0 0.0
    %3928 = vmatpush.msra.mxu0 0.0
    %3929 = vmatpush.msra.mxu0 0.0
    %3930 = vmatpush.msra.mxu0 0.0
    %3931 = vmatpush.msra.mxu0 %v3323
    %3932 = vmatpush.msra.mxu0 %v3322
    %3933 = vmatmul.f32.gmra.mxu0 %v3915
    %v3934 = vpop.f32.mrf.mxu0
    %v3935 = vadd.f32 0.0, %v3934
    %3936 = vdwg.mxu0
    %vm3953 = vcmask 1041409
    %v3954 = vsel %vm3953, %v3814, %v3807
    %vm3955 = vcmask 1042434
    %v3956 = vsel %vm3955, %v3821, %v3954
    %vm3957 = vcmask 1043459
    %v3958 = vsel %vm3957, %v3828, %v3956
    %vm3959 = vcmask 1044484
    %v3960 = vsel %vm3959, %v3835, %v3958
    %vm3961 = vcmask 1045509
    %v3962 = vsel %vm3961, %v3842, %v3960
    %vm3963 = vcmask 1046534
    %v3964 = vsel %vm3963, %v3849, %v3962
    %vm3965 = vcmask 1047559
    %v3966 = vsel %vm3965, %v3856, %v3964
    %v3967 = vsel %vm3953, %v3870, %v3863
    %v3968 = vsel %vm3955, %v3877, %v3967
    %v3969 = vsel %vm3957, %v3884, %v3968
    %v3970 = vsel %vm3959, %v3891, %v3969
    %v3971 = vsel %vm3961, %v3898, %v3970
    %v3972 = vsel %vm3963, %v3905, %v3971
    %v3973 = vsel %vm3965, %v3912, %v3972
    %3976 = vmatpush.msra.mxu0 0.0
    %3977 = vmatpush.msra.mxu0 0.0
    %3978 = vmatpush.msra.mxu0 0.0
    %3979 = vmatpush.msra.mxu0 0.0
    %3980 = vmatpush.msra.mxu0 0.0
    %3981 = vmatpush.msra.mxu0 0.0
    %3982 = vmatpush.msra.mxu0 0.0
    %3983 = vmatpush.msra.mxu0 0.0
    %3984 = vmatpush.msra.mxu0 0.0
    %3985 = vmatpush.msra.mxu0 0.0
    %3986 = vmatpush.msra.mxu0 0.0
    %3987 = vmatpush.msra.mxu0 0.0
    %3988 = vmatpush.msra.mxu0 0.0
    %3989 = vmatpush.msra.mxu0 0.0
    %3990 = vmatpush.msra.mxu0 %v3973
    %3991 = vmatpush.msra.mxu0 %v3966
    %3992 = vmatmul.f32.gmra.mxu0 %v3915
    %v3993 = vpop.f32.mrf.mxu0
    %v3994 = vadd.f32 0.0, %v3993
    %3995 = vdwg.mxu0
    %v3996 = vld [vmem:[#allocation10] sm:$0xff]
    %v3997 = vld [vmem:[#allocation10 + $0x8] sm:$0xff]
    %v3998 = vld [vmem:[#allocation10 + $0x10] sm:$0xff]
    %v3999 = vld [vmem:[#allocation10 + $0x18] sm:$0xff]
    %v4000 = vld [vmem:[#allocation10 + $0x20] sm:$0xff]
    %v4001 = vld [vmem:[#allocation10 + $0x28] sm:$0xff]
    %v4002 = vld [vmem:[#allocation10 + $0x30] sm:$0xff]
    %v4003 = vld [vmem:[#allocation10 + $0x38] sm:$0xff]
    %v4004 = vld [vmem:[#allocation10 + $0x40] sm:$0xff]
    %v4005 = vld [vmem:[#allocation10 + $0x48] sm:$0xff]
    %v4006 = vld [vmem:[#allocation10 + $0x50] sm:$0xff]
    %v4007 = vld [vmem:[#allocation10 + $0x58] sm:$0xff]
    %v4008 = vld [vmem:[#allocation10 + $0x60] sm:$0xff]
    %v4009 = vld [vmem:[#allocation10 + $0x68] sm:$0xff]
    %v4010 = vld [vmem:[#allocation10 + $0x70] sm:$0xff]
    %v4011 = vld [vmem:[#allocation10 + $0x78] sm:$0xff]
    %v4012 = vld [vmem:[#allocation10 + $0x80] sm:$0xff]
    %v4013 = vld [vmem:[#allocation10 + $0x88] sm:$0xff]
    %v4014 = vld [vmem:[#allocation10 + $0x90] sm:$0xff]
    %v4015 = vld [vmem:[#allocation10 + $0x98] sm:$0xff]
    %v4016 = vld [vmem:[#allocation10 + $0xa0] sm:$0xff]
    %v4017 = vld [vmem:[#allocation10 + $0xa8] sm:$0xff]
    %v4018 = vld [vmem:[#allocation10 + $0xb0] sm:$0xff]
    %v4019 = vld [vmem:[#allocation10 + $0xb8] sm:$0xff]
    %v4020 = vld [vmem:[#allocation10 + $0xc0] sm:$0xff]
    %v4021 = vld [vmem:[#allocation10 + $0xc8] sm:$0xff]
    %v4022 = vld [vmem:[#allocation10 + $0xd0] sm:$0xff]
    %v4023 = vld [vmem:[#allocation10 + $0xd8] sm:$0xff]
    %v4024 = vld [vmem:[#allocation10 + $0xe0] sm:$0xff]
    %v4025 = vld [vmem:[#allocation10 + $0xe8] sm:$0xff]
    %v4026 = vld [vmem:[#allocation10 + $0xf0] sm:$0xff]
    %v4027 = vld [vmem:[#allocation10 + $0xf8] sm:$0xff]
    %v4028 = vld [vmem:[#allocation11] sm:$0xff]
    %v4029 = vld [vmem:[#allocation11 + $0x8] sm:$0xff]
    %v4030 = vld [vmem:[#allocation11 + $0x10] sm:$0xff]
    %v4031 = vld [vmem:[#allocation11 + $0x18] sm:$0xff]
    %v4032 = vld [vmem:[#allocation11 + $0x20] sm:$0xff]
    %v4033 = vld [vmem:[#allocation11 + $0x28] sm:$0xff]
    %v4034 = vld [vmem:[#allocation11 + $0x30] sm:$0xff]
    %v4035 = vld [vmem:[#allocation11 + $0x38] sm:$0xff]
    %v4036 = vld [vmem:[#allocation11 + $0x40] sm:$0xff]
    %v4037 = vld [vmem:[#allocation11 + $0x48] sm:$0xff]
    %v4038 = vld [vmem:[#allocation11 + $0x50] sm:$0xff]
    %v4039 = vld [vmem:[#allocation11 + $0x58] sm:$0xff]
    %v4040 = vld [vmem:[#allocation11 + $0x60] sm:$0xff]
    %v4041 = vld [vmem:[#allocation11 + $0x68] sm:$0xff]
    %v4042 = vld [vmem:[#allocation11 + $0x70] sm:$0xff]
    %v4043 = vld [vmem:[#allocation11 + $0x78] sm:$0xff]
    %v4044 = vld [vmem:[#allocation11 + $0x80] sm:$0xff]
    %v4045 = vld [vmem:[#allocation11 + $0x88] sm:$0xff]
    %v4046 = vld [vmem:[#allocation11 + $0x90] sm:$0xff]
    %v4047 = vld [vmem:[#allocation11 + $0x98] sm:$0xff]
    %v4048 = vld [vmem:[#allocation11 + $0xa0] sm:$0xff]
    %v4049 = vld [vmem:[#allocation11 + $0xa8] sm:$0xff]
    %v4050 = vld [vmem:[#allocation11 + $0xb0] sm:$0xff]
    %v4051 = vld [vmem:[#allocation11 + $0xb8] sm:$0xff]
    %v4052 = vld [vmem:[#allocation11 + $0xc0] sm:$0xff]
    %v4053 = vld [vmem:[#allocation11 + $0xc8] sm:$0xff]
    %v4054 = vld [vmem:[#allocation11 + $0xd0] sm:$0xff]
    %v4055 = vld [vmem:[#allocation11 + $0xd8] sm:$0xff]
    %v4056 = vld [vmem:[#allocation11 + $0xe0] sm:$0xff]
    %v4057 = vld [vmem:[#allocation11 + $0xe8] sm:$0xff]
    %v4058 = vld [vmem:[#allocation11 + $0xf0] sm:$0xff]
    %v4059 = vld [vmem:[#allocation11 + $0xf8] sm:$0xff]
    %4060 = vmatpush.msra.mxu0 %v4058
    %4061 = vmatpush.msra.mxu0 %v4056
    %4062 = vmatpush.msra.mxu0 %v4054
    %4063 = vmatpush.msra.mxu0 %v4052
    %4064 = vmatpush.msra.mxu0 %v4050
    %4065 = vmatpush.msra.mxu0 %v4048
    %4066 = vmatpush.msra.mxu0 %v4046
    %4067 = vmatpush.msra.mxu0 %v4044
    %4068 = vmatpush.msra.mxu0 %v4042
    %4069 = vmatpush.msra.mxu0 %v4040
    %4070 = vmatpush.msra.mxu0 %v4038
    %4071 = vmatpush.msra.mxu0 %v4036
    %4072 = vmatpush.msra.mxu0 %v4034
    %4073 = vmatpush.msra.mxu0 %v4032
    %4074 = vmatpush.msra.mxu0 %v4030
    %4075 = vmatpush.msra.mxu0 %v4028
    %4076 = vmatmul.f32.gmra.mxu0 %v3994
    %v4077 = vpop.f32.mrf.mxu0
    %v4078 = vadd.f32 0.0, %v4077
    %4079 = vdwg.mxu0
    %4080 = vmatpush.msra.mxu0 %v4059
    %4081 = vmatpush.msra.mxu0 %v4057
    %4082 = vmatpush.msra.mxu0 %v4055
    %4083 = vmatpush.msra.mxu0 %v4053
    %4084 = vmatpush.msra.mxu0 %v4051
    %4085 = vmatpush.msra.mxu0 %v4049
    %4086 = vmatpush.msra.mxu0 %v4047
    %4087 = vmatpush.msra.mxu0 %v4045
    %4088 = vmatpush.msra.mxu0 %v4043
    %4089 = vmatpush.msra.mxu0 %v4041
    %4090 = vmatpush.msra.mxu0 %v4039
    %4091 = vmatpush.msra.mxu0 %v4037
    %4092 = vmatpush.msra.mxu0 %v4035
    %4093 = vmatpush.msra.mxu0 %v4033
    %4094 = vmatpush.msra.mxu0 %v4031
    %4095 = vmatpush.msra.mxu0 %v4029
    %4096 = vmatmul.f32.gmra.mxu0 %v3994
    %v4097 = vpop.f32.mrf.mxu0
    %v4098 = vadd.f32 0.0, %v4097
    %4099 = vdwg.mxu0
    %4100 = vmatpush.msra.mxu0 %v4026
    %4101 = vmatpush.msra.mxu0 %v4024
    %4102 = vmatpush.msra.mxu0 %v4022
    %4103 = vmatpush.msra.mxu0 %v4020
    %4104 = vmatpush.msra.mxu0 %v4018
    %4105 = vmatpush.msra.mxu0 %v4016
    %4106 = vmatpush.msra.mxu0 %v4014
    %4107 = vmatpush.msra.mxu0 %v4012
    %4108 = vmatpush.msra.mxu0 %v4010
    %4109 = vmatpush.msra.mxu0 %v4008
    %4110 = vmatpush.msra.mxu0 %v4006
    %4111 = vmatpush.msra.mxu0 %v4004
    %4112 = vmatpush.msra.mxu0 %v4002
    %4113 = vmatpush.msra.mxu0 %v4000
    %4114 = vmatpush.msra.mxu0 %v3998
    %4115 = vmatpush.msra.mxu0 %v3996
    %4116 = vmatmul.f32.gmra.mxu0 %v3935
    %v4117 = vpop.f32.mrf.mxu0
    %v4118 = vadd.f32 %v4078, %v4117
    %4119 = vdwg.mxu0
    %4120 = vmatpush.msra.mxu0 %v4027
    %4121 = vmatpush.msra.mxu0 %v4025
    %4122 = vmatpush.msra.mxu0 %v4023
    %4123 = vmatpush.msra.mxu0 %v4021
    %4124 = vmatpush.msra.mxu0 %v4019
    %4125 = vmatpush.msra.mxu0 %v4017
    %4126 = vmatpush.msra.mxu0 %v4015
    %4127 = vmatpush.msra.mxu0 %v4013
    %4128 = vmatpush.msra.mxu0 %v4011
    %4129 = vmatpush.msra.mxu0 %v4009
    %4130 = vmatpush.msra.mxu0 %v4007
    %4131 = vmatpush.msra.mxu0 %v4005
    %4132 = vmatpush.msra.mxu0 %v4003
    %4133 = vmatpush.msra.mxu0 %v4001
    %4134 = vmatpush.msra.mxu0 %v3999
    %4135 = vmatpush.msra.mxu0 %v3997
    %4136 = vmatmul.f32.gmra.mxu0 %v3935
    %v4137 = vpop.f32.mrf.mxu0
    %v4138 = vadd.f32 %v4098, %v4137
    %4139 = vdwg.mxu0
    %v4140 = vld [vmem:[%s20] sm:$0x3]
    %v4142 = vperm.slane %v4140, 0
    %v4143 = vperm.slane %v4140, 1
    %v4146 = vadd.f32 %v4118, %v4142
    %v4147 = vadd.f32 %v4138, %v4143
    %v4148 = vmul.f32 %v4146, 0.5
    %v4149 = vmul.f32 %v4147, 0.5
    %v4150 = vmul.f32 %v4146, 0.044715
    %v4151 = vmul.f32 %v4147, 0.044715
    %v4152 = vmul.f32 %v4150, %v4146
    %v4153 = vmul.f32 %v4151, %v4147
    %v4154 = vmul.f32 %v4152, %v4146
    %v4155 = vmul.f32 %v4153, %v4147
    %v4156 = vadd.f32 %v4146, %v4154
    %v4157 = vadd.f32 %v4147, %v4155
    %v4158 = vmul.f32 %v4156, 0.7978846
    %v4159 = vmul.f32 %v4157, 0.7978846
    %v4160 = vtanh.pop %v4158
    %v4161 = vtanh.pop %v4159
    %v4162 = vadd.f32 %v4160, 1.0
    %v4163 = vadd.f32 %v4161, 1.0
    %v4164 = vmul.f32 %v4148, %v4162
    %v4165 = vmul.f32 %v4149, %v4163
    %v4166 = vld [vmem:[#allocation13] sm:$0xff]
    %v4167 = vld [vmem:[#allocation13 + $0x8] sm:$0xff]
    %v4168 = vld [vmem:[#allocation13 + $0x10] sm:$0xff]
    %v4169 = vld [vmem:[#allocation13 + $0x18] sm:$0xff]
    %v4170 = vld [vmem:[#allocation13 + $0x20] sm:$0xff]
    %v4171 = vld [vmem:[#allocation13 + $0x28] sm:$0xff]
    %v4172 = vld [vmem:[#allocation13 + $0x30] sm:$0xff]
    %v4173 = vld [vmem:[#allocation13 + $0x38] sm:$0xff]
    %v4174 = vld [vmem:[#allocation13 + $0x40] sm:$0xff]
    %v4175 = vld [vmem:[#allocation13 + $0x48] sm:$0xff]
    %v4176 = vld [vmem:[#allocation13 + $0x50] sm:$0xff]
    %v4177 = vld [vmem:[#allocation13 + $0x58] sm:$0xff]
    %v4178 = vld [vmem:[#allocation13 + $0x60] sm:$0xff]
    %v4179 = vld [vmem:[#allocation13 + $0x68] sm:$0xff]
    %v4180 = vld [vmem:[#allocation13 + $0x70] sm:$0xff]
    %v4181 = vld [vmem:[#allocation13 + $0x78] sm:$0xff]
    %v4182 = vld [vmem:[#allocation13 + $0x80] sm:$0xff]
    %v4183 = vld [vmem:[#allocation13 + $0x88] sm:$0xff]
    %v4184 = vld [vmem:[#allocation13 + $0x90] sm:$0xff]
    %v4185 = vld [vmem:[#allocation13 + $0x98] sm:$0xff]
    %v4186 = vld [vmem:[#allocation13 + $0xa0] sm:$0xff]
    %v4187 = vld [vmem:[#allocation13 + $0xa8] sm:$0xff]
    %v4188 = vld [vmem:[#allocation13 + $0xb0] sm:$0xff]
    %v4189 = vld [vmem:[#allocation13 + $0xb8] sm:$0xff]
    %v4190 = vld [vmem:[#allocation13 + $0xc0] sm:$0xff]
    %v4191 = vld [vmem:[#allocation13 + $0xc8] sm:$0xff]
    %v4192 = vld [vmem:[#allocation13 + $0xd0] sm:$0xff]
    %v4193 = vld [vmem:[#allocation13 + $0xd8] sm:$0xff]
    %v4194 = vld [vmem:[#allocation13 + $0xe0] sm:$0xff]
    %v4195 = vld [vmem:[#allocation13 + $0xe8] sm:$0xff]
    %v4196 = vld [vmem:[#allocation13 + $0xf0] sm:$0xff]
    %v4197 = vld [vmem:[#allocation13 + $0xf8] sm:$0xff]
    %v4198 = vld [vmem:[%s22] sm:$0x1]
    %v4200 = vperm.slane %v4198, 0
    %4202 = vmatpush.msra.mxu0 %v4181
    %4203 = vmatpush.msra.mxu0 %v4180
    %4204 = vmatpush.msra.mxu0 %v4179
    %4205 = vmatpush.msra.mxu0 %v4178
    %4206 = vmatpush.msra.mxu0 %v4177
    %4207 = vmatpush.msra.mxu0 %v4176
    %4208 = vmatpush.msra.mxu0 %v4175
    %4209 = vmatpush.msra.mxu0 %v4174
    %4210 = vmatpush.msra.mxu0 %v4173
    %4211 = vmatpush.msra.mxu0 %v4172
    %4212 = vmatpush.msra.mxu0 %v4171
    %4213 = vmatpush.msra.mxu0 %v4170
    %4214 = vmatpush.msra.mxu0 %v4169
    %4215 = vmatpush.msra.mxu0 %v4168
    %4216 = vmatpush.msra.mxu0 %v4167
    %4217 = vmatpush.msra.mxu0 %v4166
    %4218 = vmatmul.f32.gmra.mxu0 %v4164
    %v4219 = vpop.f32.mrf.mxu0
    %v4220 = vadd.f32 %v4200, %v4219
    %4221 = vdwg.mxu0
    %4222 = vmatpush.msra.mxu0 %v4197
    %4223 = vmatpush.msra.mxu0 %v4196
    %4224 = vmatpush.msra.mxu0 %v4195
    %4225 = vmatpush.msra.mxu0 %v4194
    %4226 = vmatpush.msra.mxu0 %v4193
    %4227 = vmatpush.msra.mxu0 %v4192
    %4228 = vmatpush.msra.mxu0 %v4191
    %4229 = vmatpush.msra.mxu0 %v4190
    %4230 = vmatpush.msra.mxu0 %v4189
    %4231 = vmatpush.msra.mxu0 %v4188
    %4232 = vmatpush.msra.mxu0 %v4187
    %4233 = vmatpush.msra.mxu0 %v4186
    %4234 = vmatpush.msra.mxu0 %v4185
    %4235 = vmatpush.msra.mxu0 %v4184
    %4236 = vmatpush.msra.mxu0 %v4183
    %4237 = vmatpush.msra.mxu0 %v4182
    %4238 = vmatmul.f32.gmra.mxu0 %v4165
    %v4239 = vpop.f32.mrf.mxu0
    %v4240 = vadd.f32 %v4220, %v4239
    %4241 = vdwg.mxu0
    %v4242 = vmul.f32 %v4240, 0.5
    %v4243 = vmul.f32 %v4240, 0.044715
    %v4244 = vmul.f32 %v4243, %v4240
    %v4245 = vmul.f32 %v4244, %v4240
    %v4246 = vadd.f32 %v4240, %v4245
    %v4247 = vmul.f32 %v4246, 0.7978846
    %v4248 = vtanh.pop %v4247
    %v4249 = vadd.f32 %v4248, 1.0
    %v4250 = vmul.f32 %v4242, %v4249
    %v4251 = vld [vmem:[%s23] sm:$0xff]
    %v4252 = vld [vmem:[%s23 + $0x8] sm:$0xff]
    %v4253 = vld [vmem:[%s23 + $0x10] sm:$0xff]
    %v4254 = vld [vmem:[%s23 + $0x18] sm:$0xff]
    %v4255 = vld [vmem:[%s23 + $0x20] sm:$0xff]
    %v4256 = vld [vmem:[%s23 + $0x28] sm:$0xff]
    %v4257 = vld [vmem:[%s23 + $0x30] sm:$0xff]
    %v4258 = vld [vmem:[%s23 + $0x38] sm:$0xff]
    %v4259 = vld [vmem:[%s23 + $0x40] sm:$0xff]
    %v4260 = vld [vmem:[%s23 + $0x48] sm:$0xff]
    %v4261 = vld [vmem:[%s23 + $0x50] sm:$0xff]
    %v4262 = vld [vmem:[%s23 + $0x58] sm:$0xff]
    %v4263 = vld [vmem:[%s23 + $0x60] sm:$0xff]
    %v4264 = vld [vmem:[%s23 + $0x68] sm:$0xff]
    %v4265 = vld [vmem:[%s23 + $0x70] sm:$0xff]
    %v4266 = vld [vmem:[%s23 + $0x78] sm:$0xff]
    %v4267 = vld [vmem:[#allocation2] sm:$0x1]
    %v4269 = vperm.slane %v4267, 0
    %4271 = vmatpush.msra.mxu0 %v4266
    %4272 = vmatpush.msra.mxu0 %v4265
    %4273 = vmatpush.msra.mxu0 %v4264
    %4274 = vmatpush.msra.mxu0 %v4263
    %4275 = vmatpush.msra.mxu0 %v4262
    %4276 = vmatpush.msra.mxu0 %v4261
    %4277 = vmatpush.msra.mxu0 %v4260
    %4278 = vmatpush.msra.mxu0 %v4259
    %4279 = vmatpush.msra.mxu0 %v4258
    %4280 = vmatpush.msra.mxu0 %v4257
    %4281 = vmatpush.msra.mxu0 %v4256
    %4282 = vmatpush.msra.mxu0 %v4255
    %4283 = vmatpush.msra.mxu0 %v4254
    %4284 = vmatpush.msra.mxu0 %v4253
    %4285 = vmatpush.msra.mxu0 %v4252
    %4286 = vmatpush.msra.mxu0 %v4251
    %4287 = vmatmul.f32.gmra.mxu0 %v4250
    %v4288 = vpop.f32.mrf.mxu0
    %v4289 = vadd.f32 %v4269, %v4288
    %4290 = vdwg.mxu0
    %vm4291 = vcmask 1024
    %4292 = vst.msk [vmem:[%s25] sm:$0x3] %vm4291, %v4289
    // Predicated region
    $region130: #{tpu_custom_call.1} parent=1 // pred_check
      _
    $region131: #{tpu_custom_call.1} parent=1 // pred_check_branch
      %4294 = sbr.rel (0) target = $region133
    $region132: #{tpu_custom_call.1} parent=1 // pred_region
      _
    $region133: #{tpu_custom_call.1} parent=1 // pred_fallthru
      _
    // Predicated region
    $region134: #{tpu_custom_call.1} parent=1 // pred_check
      _
    $region135: #{tpu_custom_call.1} parent=1 // pred_check_branch
      %4296 = sbr.rel (0) target = $region137
    $region136: #{tpu_custom_call.1} parent=1 // pred_region
      _
    $region137: #{tpu_custom_call.1} parent=1 // pred_fallthru
      _
    %4297 = vsyncpa [#allocation4], 1
    %4298 = vsyncpa [#allocation6], 1
    %4299 = vsyncpa [#allocation9], 1
    %4300 = vsyncpa [#allocation12], 1

</llo_original>
